<compile_context>
chip_gen: v7x
topology: tpu7x:2x2x1
jax: 0.10.0
libtpu: 0.0.40
codegen_flags: <defaults>
</compile_context>

<pallas_src>
import functools

import jax
import jax.numpy as jnp
from jax.experimental import pallas as pl
from jax.experimental.pallas import tpu as pltpu


# ----------------------------------------------------------------------------
# Fused kernel: the whole ResidualBlock forward, both batch elements at once.
# ----------------------------------------------------------------------------
def _res_block_kernel(x_ref, w_ref, b_ref, o_ref, *, C, H, W, L):
    HW = H * W

    # Boundary masks, computed ONCE and shared by all 4 convs.
    lane = jax.lax.broadcasted_iota(jnp.int32, (1, L), 1)
    pos = jnp.bitwise_and(lane, HW - 1) if (HW & (HW - 1)) == 0 else lane % HW
    col = jnp.bitwise_and(pos, W - 1) if (W & (W - 1)) == 0 else pos % W

    m_col_l = col != 0           # tap reads column w-1  -> invalid at w == 0
    m_col_r = col != (W - 1)     # tap reads column w+1  -> invalid at w == W-1
    m_row_u = pos >= W           # tap reads row h-1     -> invalid at h == 0
    m_row_d = pos < (HW - W)     # tap reads row h+1     -> invalid at h == H-1
    # pos is per-image (mod H*W), so the row masks also kill any read that
    # would cross the batch seam or wrap around the concatenated lane axis.

    def conv3x3(x, k, act):
        """3x3 same-padding conv of x:(C, L) with weight set k; optional SiLU."""
        w = w_ref[k].astype(jnp.float32)           # (C_out, 9*C_in), tap-major
        b = b_ref[k].astype(jnp.float32)           # (C_out, 1)

        # Horizontal taps: whole-block lane rolls + column masks (once each).
        x_l = jnp.where(m_col_l, pltpu.roll(x, shift=1, axis=1), 0.0)      # w-1
        x_r = jnp.where(m_col_r, pltpu.roll(x, shift=L - 1, axis=1), 0.0)  # w+1
        horiz = (x_l, x, x_r)

        # Vertical variants via +-W rolls + top/bottom-row masks.
        blocks = []
        for kh in range(3):
            for kw in range(3):
                hb = horiz[kw]
                if kh == 0:      # reads row h-1
                    blk = jnp.where(m_row_u, pltpu.roll(hb, shift=W, axis=1), 0.0)
                elif kh == 2:    # reads row h+1
                    blk = jnp.where(m_row_d, pltpu.roll(hb, shift=L - W, axis=1), 0.0)
                else:
                    blk = hb
                blocks.append(blk)

        # In-register im2col (sublane concat), rows ordered tap-major to match
        # the (C_out, 9*C_in) tap-major weight layout built in the wrapper.
        patches = jnp.concatenate(blocks, axis=0)                  # (9*C, L)

        # Tap x channel reduction on the MXU (single matmul per conv).
        acc = jnp.dot(w, patches,
                      preferred_element_type=jnp.float32,
                      precision=jax.lax.Precision.HIGHEST) + b     # (C, L)
        if act:
            acc = acc * jax.nn.sigmoid(acc)                        # SiLU (EUP)
        return acc

    x0 = x_ref[...].astype(jnp.float32)                            # (C, L)
    # convs[0] = Sequential(conv, SiLU, conv); + residual
    x1 = conv3x3(conv3x3(x0, 0, act=True), 1, act=False) + x0
    # convs[1] = SiLU(); + residual  (fused, never leaves registers)
    x2 = x1 * jax.nn.sigmoid(x1) + x1
    # convs[2] = Sequential(conv, SiLU, conv); + residual
    x3 = conv3x3(conv3x3(x2, 2, act=True), 3, act=False) + x2
    o_ref[...] = x3.astype(o_ref.dtype)


# ----------------------------------------------------------------------------
# Wrapper: layout plumbing only (tiny transposes / weight restacking in XLA).
# ----------------------------------------------------------------------------
def residual_block_forward(x_nchw, params):
    """x_nchw: (N, C, H, W).  params: OIHW weights w00,w01,w10,w11 + biases."""
    N, C, H, W = x_nchw.shape
    L = N * H * W

    # Lane-dense layout: batch concatenated on the lane axis -> (C, N*H*W).
    x_flat = jnp.transpose(x_nchw, (1, 0, 2, 3)).reshape(C, L)

    def tap_major(w):   # OIHW (C,C,3,3) -> (C_out, 9*C_in), column = tap*C + ci
        return jnp.transpose(w, (0, 2, 3, 1)).reshape(C, 9 * C)

    # All 4 conv weights / biases stacked into two tiny VMEM operands.
    w_all = jnp.stack([tap_major(params["w00"]), tap_major(params["w01"]),
                       tap_major(params["w10"]), tap_major(params["w11"])], axis=0)
    b_all = jnp.stack([params["b00"], params["b01"],
                       params["b10"], params["b11"]], axis=0).reshape(4, C, 1)

    kernel = functools.partial(_res_block_kernel, C=C, H=H, W=W, L=L)
    vmem = pl.BlockSpec(memory_space=pltpu.MemorySpace.VMEM)

    out = pl.pallas_call(
        kernel,
        out_shape=jax.ShapeDtypeStruct((C, L), x_nchw.dtype),
        in_specs=[vmem, vmem, vmem],
        out_specs=vmem,
        input_output_aliases={0: 0},      # result overwrites the input buffer
    )(x_flat, w_all, b_all)
    return jnp.transpose(out.reshape(C, N, H, W), (1, 0, 2, 3))


# ----------------------------------------------------------------------------
# Pure-JAX reference (correctness sanity check).
# ----------------------------------------------------------------------------
def _ref_conv(x, w, b):
    y = jax.lax.conv_general_dilated(
        x, w, window_strides=(1, 1), padding=((1, 1), (1, 1)),
        dimension_numbers=("NCHW", "OIHW", "NCHW"),
        precision=jax.lax.Precision.HIGHEST)
    return y + b[None, :, None, None]


def _ref_forward(x, p):
    res = x
    x = _ref_conv(jax.nn.silu(_ref_conv(x, p["w00"], p["b00"])),
                  p["w01"], p["b01"]) + res
    res = x
    x = jax.nn.silu(x) + res
    res = x
    x = _ref_conv(jax.nn.silu(_ref_conv(x, p["w10"], p["b10"])),
                  p["w11"], p["b11"]) + res
    return x


if __name__ == "__main__":
    N, C, H, W = 2, 4, 16, 16   # batch=2, dim=4, spatial=16x16, kernel=3, pad=1

    key = jax.random.PRNGKey(0)
    kx, k0, k1, k2, k3, kb0, kb1, kb2, kb3 = jax.random.split(key, 9)

    x = jax.random.normal(kx, (N, C, H, W), jnp.float32)

    scale = 0.1
    params = {
        "w00": scale * jax.random.normal(k0, (C, C, 3, 3), jnp.float32),
        "b00": scale * jax.random.normal(kb0, (C,), jnp.float32),
        "w01": scale * jax.random.normal(k1, (C, C, 3, 3), jnp.float32),
        "b01": scale * jax.random.normal(kb1, (C,), jnp.float32),
        "w10": scale * jax.random.normal(k2, (C, C, 3, 3), jnp.float32),
        "b10": scale * jax.random.normal(kb2, (C,), jnp.float32),
        "w11": scale * jax.random.normal(k3, (C, C, 3, 3), jnp.float32),
        "b11": scale * jax.random.normal(kb3, (C,), jnp.float32),
    }

    out = jax.block_until_ready(jax.jit(residual_block_forward)(x, params))
    ref = jax.block_until_ready(_ref_forward(x, params))

    assert out.shape == (N, C, H, W)
    max_err = float(jnp.max(jnp.abs(out - ref)))
    assert jnp.allclose(out, ref, atol=1e-4, rtol=1e-4), max_err

    print("KERNEL_OK")
</pallas_src>

<mosaic_0001>
module attributes {stable_mosaic.version = 11 : i64} {
  func.func @_res_block_kernel(%arg0: memref<4x512xf32, #tpu.memory_space<vmem>>, %arg1: memref<4x4x36xf32, #tpu.memory_space<vmem>>, %arg2: memref<4x4x1xf32, #tpu.memory_space<vmem>>, %arg3: memref<4x512xf32, #tpu.memory_space<vmem>>) attributes {dimension_semantics = [], scalar_prefetch = 0 : i64, scratch_operands = 0 : i64, tpu.core_type = #tpu.core_type<tc>} {
    %0 = tpu.iota {dimensions = array<i32: 1>} : vector<1x512xi32>
    %c255_i32 = arith.constant 255 : i32
    %1 = vector.broadcast %c255_i32 : i32 to vector<1x512xi32>
    %2 = arith.andi %0, %1 : vector<1x512xi32>
    %c15_i32 = arith.constant 15 : i32
    %3 = vector.broadcast %c15_i32 : i32 to vector<1x512xi32>
    %4 = arith.andi %2, %3 : vector<1x512xi32>
    %c0_i32 = arith.constant 0 : i32
    %5 = vector.broadcast %c0_i32 : i32 to vector<1x512xi32>
    %6 = arith.cmpi ne, %4, %5 : vector<1x512xi32>
    %c15_i32_0 = arith.constant 15 : i32
    %7 = vector.broadcast %c15_i32_0 : i32 to vector<1x512xi32>
    %8 = arith.cmpi ne, %4, %7 : vector<1x512xi32>
    %c16_i32 = arith.constant 16 : i32
    %9 = vector.broadcast %c16_i32 : i32 to vector<1x512xi32>
    %10 = arith.cmpi sge, %2, %9 : vector<1x512xi32>
    %c240_i32 = arith.constant 240 : i32
    %11 = vector.broadcast %c240_i32 : i32 to vector<1x512xi32>
    %12 = arith.cmpi slt, %2, %11 : vector<1x512xi32>
    %c0 = arith.constant 0 : index
    %c0_1 = arith.constant 0 : index
    %13 = vector.load %arg0[%c0, %c0_1] : memref<4x512xf32, #tpu.memory_space<vmem>>, vector<4x512xf32>
    %c0_2 = arith.constant 0 : index
    %c0_3 = arith.constant 0 : index
    %c0_4 = arith.constant 0 : index
    %14 = vector.load %arg1[%c0_2, %c0_3, %c0_4] : memref<4x4x36xf32, #tpu.memory_space<vmem>>, vector<1x4x36xf32>
    %15 = vector.shape_cast %14 : vector<1x4x36xf32> to vector<4x36xf32>
    %c0_5 = arith.constant 0 : index
    %c0_6 = arith.constant 0 : index
    %c0_7 = arith.constant 0 : index
    %16 = vector.load %arg2[%c0_5, %c0_6, %c0_7] : memref<4x4x1xf32, #tpu.memory_space<vmem>>, vector<1x4x1xf32>
    %17 = vector.shape_cast %16 : vector<1x4x1xf32> to vector<4x1xf32>
    %c1_i32 = arith.constant 1 : i32
    %18 = tpu.dynamic_rotate %13 by %c1_i32 dim 1 : vector<4x512xf32>, i32 -> vector<4x512xf32>
    %cst = arith.constant 0.000000e+00 : f32
    %19 = vector.shape_cast %6 : vector<1x512xi1> to vector<1x512xi1>
    %20 = vector.broadcast %19 : vector<1x512xi1> to vector<4x512xi1>
    %21 = vector.broadcast %cst : f32 to vector<4x512xf32>
    %22 = arith.select %20, %18, %21 : vector<4x512xi1>, vector<4x512xf32>
    %c511_i32 = arith.constant 511 : i32
    %23 = tpu.dynamic_rotate %13 by %c511_i32 dim 1 : vector<4x512xf32>, i32 -> vector<4x512xf32>
    %cst_8 = arith.constant 0.000000e+00 : f32
    %24 = vector.shape_cast %8 : vector<1x512xi1> to vector<1x512xi1>
    %25 = vector.broadcast %24 : vector<1x512xi1> to vector<4x512xi1>
    %26 = vector.broadcast %cst_8 : f32 to vector<4x512xf32>
    %27 = arith.select %25, %23, %26 : vector<4x512xi1>, vector<4x512xf32>
    %c16_i32_9 = arith.constant 16 : i32
    %28 = tpu.dynamic_rotate %22 by %c16_i32_9 dim 1 : vector<4x512xf32>, i32 -> vector<4x512xf32>
    %cst_10 = arith.constant 0.000000e+00 : f32
    %29 = vector.shape_cast %10 : vector<1x512xi1> to vector<1x512xi1>
    %30 = vector.broadcast %29 : vector<1x512xi1> to vector<4x512xi1>
    %31 = vector.broadcast %cst_10 : f32 to vector<4x512xf32>
    %32 = arith.select %30, %28, %31 : vector<4x512xi1>, vector<4x512xf32>
    %c16_i32_11 = arith.constant 16 : i32
    %33 = tpu.dynamic_rotate %13 by %c16_i32_11 dim 1 : vector<4x512xf32>, i32 -> vector<4x512xf32>
    %cst_12 = arith.constant 0.000000e+00 : f32
    %34 = vector.shape_cast %10 : vector<1x512xi1> to vector<1x512xi1>
    %35 = vector.broadcast %34 : vector<1x512xi1> to vector<4x512xi1>
    %36 = vector.broadcast %cst_12 : f32 to vector<4x512xf32>
    %37 = arith.select %35, %33, %36 : vector<4x512xi1>, vector<4x512xf32>
    %c16_i32_13 = arith.constant 16 : i32
    %38 = tpu.dynamic_rotate %27 by %c16_i32_13 dim 1 : vector<4x512xf32>, i32 -> vector<4x512xf32>
    %cst_14 = arith.constant 0.000000e+00 : f32
    %39 = vector.shape_cast %10 : vector<1x512xi1> to vector<1x512xi1>
    %40 = vector.broadcast %39 : vector<1x512xi1> to vector<4x512xi1>
    %41 = vector.broadcast %cst_14 : f32 to vector<4x512xf32>
    %42 = arith.select %40, %38, %41 : vector<4x512xi1>, vector<4x512xf32>
    %c496_i32 = arith.constant 496 : i32
    %43 = tpu.dynamic_rotate %22 by %c496_i32 dim 1 : vector<4x512xf32>, i32 -> vector<4x512xf32>
    %cst_15 = arith.constant 0.000000e+00 : f32
    %44 = vector.shape_cast %12 : vector<1x512xi1> to vector<1x512xi1>
    %45 = vector.broadcast %44 : vector<1x512xi1> to vector<4x512xi1>
    %46 = vector.broadcast %cst_15 : f32 to vector<4x512xf32>
    %47 = arith.select %45, %43, %46 : vector<4x512xi1>, vector<4x512xf32>
    %c496_i32_16 = arith.constant 496 : i32
    %48 = tpu.dynamic_rotate %13 by %c496_i32_16 dim 1 : vector<4x512xf32>, i32 -> vector<4x512xf32>
    %cst_17 = arith.constant 0.000000e+00 : f32
    %49 = vector.shape_cast %12 : vector<1x512xi1> to vector<1x512xi1>
    %50 = vector.broadcast %49 : vector<1x512xi1> to vector<4x512xi1>
    %51 = vector.broadcast %cst_17 : f32 to vector<4x512xf32>
    %52 = arith.select %50, %48, %51 : vector<4x512xi1>, vector<4x512xf32>
    %c496_i32_18 = arith.constant 496 : i32
    %53 = tpu.dynamic_rotate %27 by %c496_i32_18 dim 1 : vector<4x512xf32>, i32 -> vector<4x512xf32>
    %cst_19 = arith.constant 0.000000e+00 : f32
    %54 = vector.shape_cast %12 : vector<1x512xi1> to vector<1x512xi1>
    %55 = vector.broadcast %54 : vector<1x512xi1> to vector<4x512xi1>
    %56 = vector.broadcast %cst_19 : f32 to vector<4x512xf32>
    %57 = arith.select %55, %53, %56 : vector<4x512xi1>, vector<4x512xf32>
    %58 = tpu.concatenate %32, %37, %42, %22, %13, %27, %47, %52, %57 in 0 : vector<4x512xf32>, vector<4x512xf32>, vector<4x512xf32>, vector<4x512xf32>, vector<4x512xf32>, vector<4x512xf32>, vector<4x512xf32>, vector<4x512xf32>, vector<4x512xf32> -> vector<36x512xf32>
    %cst_20 = arith.constant dense<0.000000e+00> : vector<4x512xf32>
    %59 = tpu.matmul %15, %58, %cst_20 {dimension_numbers = #tpu.dot_dimension_numbers<[1], [0], [0], [1], [0, 0, 1, 1], [], []>, precision = #tpu.contract_precision<fp32>} : vector<4x36xf32>, vector<36x512xf32>, vector<4x512xf32> -> vector<4x512xf32>
    %60 = vector.broadcast %17 : vector<4x1xf32> to vector<4x512xf32>
    %61 = arith.addf %59, %60 : vector<4x512xf32>
    %62 = arith.negf %61 : vector<4x512xf32>
    %63 = math.exp %62 : vector<4x512xf32>
    %cst_21 = arith.constant 1.000000e+00 : f32
    %64 = vector.broadcast %cst_21 : f32 to vector<4x512xf32>
    %65 = arith.addf %64, %63 : vector<4x512xf32>
    %66 = arith.divf %64, %65 : vector<4x512xf32>
    %67 = arith.mulf %61, %66 : vector<4x512xf32>
    %c1 = arith.constant 1 : index
    %c0_22 = arith.constant 0 : index
    %c0_23 = arith.constant 0 : index
    %68 = vector.load %arg1[%c1, %c0_22, %c0_23] : memref<4x4x36xf32, #tpu.memory_space<vmem>>, vector<1x4x36xf32>
    %69 = vector.shape_cast %68 : vector<1x4x36xf32> to vector<4x36xf32>
    %c1_24 = arith.constant 1 : index
    %c0_25 = arith.constant 0 : index
    %c0_26 = arith.constant 0 : index
    %70 = vector.load %arg2[%c1_24, %c0_25, %c0_26] : memref<4x4x1xf32, #tpu.memory_space<vmem>>, vector<1x4x1xf32>
    %71 = vector.shape_cast %70 : vector<1x4x1xf32> to vector<4x1xf32>
    %c1_i32_27 = arith.constant 1 : i32
    %72 = tpu.dynamic_rotate %67 by %c1_i32_27 dim 1 : vector<4x512xf32>, i32 -> vector<4x512xf32>
    %cst_28 = arith.constant 0.000000e+00 : f32
    %73 = vector.shape_cast %6 : vector<1x512xi1> to vector<1x512xi1>
    %74 = vector.broadcast %73 : vector<1x512xi1> to vector<4x512xi1>
    %75 = vector.broadcast %cst_28 : f32 to vector<4x512xf32>
    %76 = arith.select %74, %72, %75 : vector<4x512xi1>, vector<4x512xf32>
    %c511_i32_29 = arith.constant 511 : i32
    %77 = tpu.dynamic_rotate %67 by %c511_i32_29 dim 1 : vector<4x512xf32>, i32 -> vector<4x512xf32>
    %cst_30 = arith.constant 0.000000e+00 : f32
    %78 = vector.shape_cast %8 : vector<1x512xi1> to vector<1x512xi1>
    %79 = vector.broadcast %78 : vector<1x512xi1> to vector<4x512xi1>
    %80 = vector.broadcast %cst_30 : f32 to vector<4x512xf32>
    %81 = arith.select %79, %77, %80 : vector<4x512xi1>, vector<4x512xf32>
    %c16_i32_31 = arith.constant 16 : i32
    %82 = tpu.dynamic_rotate %76 by %c16_i32_31 dim 1 : vector<4x512xf32>, i32 -> vector<4x512xf32>
    %cst_32 = arith.constant 0.000000e+00 : f32
    %83 = vector.shape_cast %10 : vector<1x512xi1> to vector<1x512xi1>
    %84 = vector.broadcast %83 : vector<1x512xi1> to vector<4x512xi1>
    %85 = vector.broadcast %cst_32 : f32 to vector<4x512xf32>
    %86 = arith.select %84, %82, %85 : vector<4x512xi1>, vector<4x512xf32>
    %c16_i32_33 = arith.constant 16 : i32
    %87 = tpu.dynamic_rotate %67 by %c16_i32_33 dim 1 : vector<4x512xf32>, i32 -> vector<4x512xf32>
    %cst_34 = arith.constant 0.000000e+00 : f32
    %88 = vector.shape_cast %10 : vector<1x512xi1> to vector<1x512xi1>
    %89 = vector.broadcast %88 : vector<1x512xi1> to vector<4x512xi1>
    %90 = vector.broadcast %cst_34 : f32 to vector<4x512xf32>
    %91 = arith.select %89, %87, %90 : vector<4x512xi1>, vector<4x512xf32>
    %c16_i32_35 = arith.constant 16 : i32
    %92 = tpu.dynamic_rotate %81 by %c16_i32_35 dim 1 : vector<4x512xf32>, i32 -> vector<4x512xf32>
    %cst_36 = arith.constant 0.000000e+00 : f32
    %93 = vector.shape_cast %10 : vector<1x512xi1> to vector<1x512xi1>
    %94 = vector.broadcast %93 : vector<1x512xi1> to vector<4x512xi1>
    %95 = vector.broadcast %cst_36 : f32 to vector<4x512xf32>
    %96 = arith.select %94, %92, %95 : vector<4x512xi1>, vector<4x512xf32>
    %c496_i32_37 = arith.constant 496 : i32
    %97 = tpu.dynamic_rotate %76 by %c496_i32_37 dim 1 : vector<4x512xf32>, i32 -> vector<4x512xf32>
    %cst_38 = arith.constant 0.000000e+00 : f32
    %98 = vector.shape_cast %12 : vector<1x512xi1> to vector<1x512xi1>
    %99 = vector.broadcast %98 : vector<1x512xi1> to vector<4x512xi1>
    %100 = vector.broadcast %cst_38 : f32 to vector<4x512xf32>
    %101 = arith.select %99, %97, %100 : vector<4x512xi1>, vector<4x512xf32>
    %c496_i32_39 = arith.constant 496 : i32
    %102 = tpu.dynamic_rotate %67 by %c496_i32_39 dim 1 : vector<4x512xf32>, i32 -> vector<4x512xf32>
    %cst_40 = arith.constant 0.000000e+00 : f32
    %103 = vector.shape_cast %12 : vector<1x512xi1> to vector<1x512xi1>
    %104 = vector.broadcast %103 : vector<1x512xi1> to vector<4x512xi1>
    %105 = vector.broadcast %cst_40 : f32 to vector<4x512xf32>
    %106 = arith.select %104, %102, %105 : vector<4x512xi1>, vector<4x512xf32>
    %c496_i32_41 = arith.constant 496 : i32
    %107 = tpu.dynamic_rotate %81 by %c496_i32_41 dim 1 : vector<4x512xf32>, i32 -> vector<4x512xf32>
    %cst_42 = arith.constant 0.000000e+00 : f32
    %108 = vector.shape_cast %12 : vector<1x512xi1> to vector<1x512xi1>
    %109 = vector.broadcast %108 : vector<1x512xi1> to vector<4x512xi1>
    %110 = vector.broadcast %cst_42 : f32 to vector<4x512xf32>
    %111 = arith.select %109, %107, %110 : vector<4x512xi1>, vector<4x512xf32>
    %112 = tpu.concatenate %86, %91, %96, %76, %67, %81, %101, %106, %111 in 0 : vector<4x512xf32>, vector<4x512xf32>, vector<4x512xf32>, vector<4x512xf32>, vector<4x512xf32>, vector<4x512xf32>, vector<4x512xf32>, vector<4x512xf32>, vector<4x512xf32> -> vector<36x512xf32>
    %cst_43 = arith.constant dense<0.000000e+00> : vector<4x512xf32>
    %113 = tpu.matmul %69, %112, %cst_43 {dimension_numbers = #tpu.dot_dimension_numbers<[1], [0], [0], [1], [0, 0, 1, 1], [], []>, precision = #tpu.contract_precision<fp32>} : vector<4x36xf32>, vector<36x512xf32>, vector<4x512xf32> -> vector<4x512xf32>
    %114 = vector.broadcast %71 : vector<4x1xf32> to vector<4x512xf32>
    %115 = arith.addf %113, %114 : vector<4x512xf32>
    %116 = arith.addf %115, %13 : vector<4x512xf32>
    %117 = arith.negf %116 : vector<4x512xf32>
    %118 = math.exp %117 : vector<4x512xf32>
    %cst_44 = arith.constant 1.000000e+00 : f32
    %119 = vector.broadcast %cst_44 : f32 to vector<4x512xf32>
    %120 = arith.addf %119, %118 : vector<4x512xf32>
    %121 = arith.divf %119, %120 : vector<4x512xf32>
    %122 = arith.mulf %116, %121 : vector<4x512xf32>
    %123 = arith.addf %122, %116 : vector<4x512xf32>
    %c2 = arith.constant 2 : index
    %c0_45 = arith.constant 0 : index
    %c0_46 = arith.constant 0 : index
    %124 = vector.load %arg1[%c2, %c0_45, %c0_46] : memref<4x4x36xf32, #tpu.memory_space<vmem>>, vector<1x4x36xf32>
    %125 = vector.shape_cast %124 : vector<1x4x36xf32> to vector<4x36xf32>
    %c2_47 = arith.constant 2 : index
    %c0_48 = arith.constant 0 : index
    %c0_49 = arith.constant 0 : index
    %126 = vector.load %arg2[%c2_47, %c0_48, %c0_49] : memref<4x4x1xf32, #tpu.memory_space<vmem>>, vector<1x4x1xf32>
    %127 = vector.shape_cast %126 : vector<1x4x1xf32> to vector<4x1xf32>
    %c1_i32_50 = arith.constant 1 : i32
    %128 = tpu.dynamic_rotate %123 by %c1_i32_50 dim 1 : vector<4x512xf32>, i32 -> vector<4x512xf32>
    %cst_51 = arith.constant 0.000000e+00 : f32
    %129 = vector.shape_cast %6 : vector<1x512xi1> to vector<1x512xi1>
    %130 = vector.broadcast %129 : vector<1x512xi1> to vector<4x512xi1>
    %131 = vector.broadcast %cst_51 : f32 to vector<4x512xf32>
    %132 = arith.select %130, %128, %131 : vector<4x512xi1>, vector<4x512xf32>
    %c511_i32_52 = arith.constant 511 : i32
    %133 = tpu.dynamic_rotate %123 by %c511_i32_52 dim 1 : vector<4x512xf32>, i32 -> vector<4x512xf32>
    %cst_53 = arith.constant 0.000000e+00 : f32
    %134 = vector.shape_cast %8 : vector<1x512xi1> to vector<1x512xi1>
    %135 = vector.broadcast %134 : vector<1x512xi1> to vector<4x512xi1>
    %136 = vector.broadcast %cst_53 : f32 to vector<4x512xf32>
    %137 = arith.select %135, %133, %136 : vector<4x512xi1>, vector<4x512xf32>
    %c16_i32_54 = arith.constant 16 : i32
    %138 = tpu.dynamic_rotate %132 by %c16_i32_54 dim 1 : vector<4x512xf32>, i32 -> vector<4x512xf32>
    %cst_55 = arith.constant 0.000000e+00 : f32
    %139 = vector.shape_cast %10 : vector<1x512xi1> to vector<1x512xi1>
    %140 = vector.broadcast %139 : vector<1x512xi1> to vector<4x512xi1>
    %141 = vector.broadcast %cst_55 : f32 to vector<4x512xf32>
    %142 = arith.select %140, %138, %141 : vector<4x512xi1>, vector<4x512xf32>
    %c16_i32_56 = arith.constant 16 : i32
    %143 = tpu.dynamic_rotate %123 by %c16_i32_56 dim 1 : vector<4x512xf32>, i32 -> vector<4x512xf32>
    %cst_57 = arith.constant 0.000000e+00 : f32
    %144 = vector.shape_cast %10 : vector<1x512xi1> to vector<1x512xi1>
    %145 = vector.broadcast %144 : vector<1x512xi1> to vector<4x512xi1>
    %146 = vector.broadcast %cst_57 : f32 to vector<4x512xf32>
    %147 = arith.select %145, %143, %146 : vector<4x512xi1>, vector<4x512xf32>
    %c16_i32_58 = arith.constant 16 : i32
    %148 = tpu.dynamic_rotate %137 by %c16_i32_58 dim 1 : vector<4x512xf32>, i32 -> vector<4x512xf32>
    %cst_59 = arith.constant 0.000000e+00 : f32
    %149 = vector.shape_cast %10 : vector<1x512xi1> to vector<1x512xi1>
    %150 = vector.broadcast %149 : vector<1x512xi1> to vector<4x512xi1>
    %151 = vector.broadcast %cst_59 : f32 to vector<4x512xf32>
    %152 = arith.select %150, %148, %151 : vector<4x512xi1>, vector<4x512xf32>
    %c496_i32_60 = arith.constant 496 : i32
    %153 = tpu.dynamic_rotate %132 by %c496_i32_60 dim 1 : vector<4x512xf32>, i32 -> vector<4x512xf32>
    %cst_61 = arith.constant 0.000000e+00 : f32
    %154 = vector.shape_cast %12 : vector<1x512xi1> to vector<1x512xi1>
    %155 = vector.broadcast %154 : vector<1x512xi1> to vector<4x512xi1>
    %156 = vector.broadcast %cst_61 : f32 to vector<4x512xf32>
    %157 = arith.select %155, %153, %156 : vector<4x512xi1>, vector<4x512xf32>
    %c496_i32_62 = arith.constant 496 : i32
    %158 = tpu.dynamic_rotate %123 by %c496_i32_62 dim 1 : vector<4x512xf32>, i32 -> vector<4x512xf32>
    %cst_63 = arith.constant 0.000000e+00 : f32
    %159 = vector.shape_cast %12 : vector<1x512xi1> to vector<1x512xi1>
    %160 = vector.broadcast %159 : vector<1x512xi1> to vector<4x512xi1>
    %161 = vector.broadcast %cst_63 : f32 to vector<4x512xf32>
    %162 = arith.select %160, %158, %161 : vector<4x512xi1>, vector<4x512xf32>
    %c496_i32_64 = arith.constant 496 : i32
    %163 = tpu.dynamic_rotate %137 by %c496_i32_64 dim 1 : vector<4x512xf32>, i32 -> vector<4x512xf32>
    %cst_65 = arith.constant 0.000000e+00 : f32
    %164 = vector.shape_cast %12 : vector<1x512xi1> to vector<1x512xi1>
    %165 = vector.broadcast %164 : vector<1x512xi1> to vector<4x512xi1>
    %166 = vector.broadcast %cst_65 : f32 to vector<4x512xf32>
    %167 = arith.select %165, %163, %166 : vector<4x512xi1>, vector<4x512xf32>
    %168 = tpu.concatenate %142, %147, %152, %132, %123, %137, %157, %162, %167 in 0 : vector<4x512xf32>, vector<4x512xf32>, vector<4x512xf32>, vector<4x512xf32>, vector<4x512xf32>, vector<4x512xf32>, vector<4x512xf32>, vector<4x512xf32>, vector<4x512xf32> -> vector<36x512xf32>
    %cst_66 = arith.constant dense<0.000000e+00> : vector<4x512xf32>
    %169 = tpu.matmul %125, %168, %cst_66 {dimension_numbers = #tpu.dot_dimension_numbers<[1], [0], [0], [1], [0, 0, 1, 1], [], []>, precision = #tpu.contract_precision<fp32>} : vector<4x36xf32>, vector<36x512xf32>, vector<4x512xf32> -> vector<4x512xf32>
    %170 = vector.broadcast %127 : vector<4x1xf32> to vector<4x512xf32>
    %171 = arith.addf %169, %170 : vector<4x512xf32>
    %172 = arith.negf %171 : vector<4x512xf32>
    %173 = math.exp %172 : vector<4x512xf32>
    %cst_67 = arith.constant 1.000000e+00 : f32
    %174 = vector.broadcast %cst_67 : f32 to vector<4x512xf32>
    %175 = arith.addf %174, %173 : vector<4x512xf32>
    %176 = arith.divf %174, %175 : vector<4x512xf32>
    %177 = arith.mulf %171, %176 : vector<4x512xf32>
    %c3 = arith.constant 3 : index
    %c0_68 = arith.constant 0 : index
    %c0_69 = arith.constant 0 : index
    %178 = vector.load %arg1[%c3, %c0_68, %c0_69] : memref<4x4x36xf32, #tpu.memory_space<vmem>>, vector<1x4x36xf32>
    %179 = vector.shape_cast %178 : vector<1x4x36xf32> to vector<4x36xf32>
    %c3_70 = arith.constant 3 : index
    %c0_71 = arith.constant 0 : index
    %c0_72 = arith.constant 0 : index
    %180 = vector.load %arg2[%c3_70, %c0_71, %c0_72] : memref<4x4x1xf32, #tpu.memory_space<vmem>>, vector<1x4x1xf32>
    %181 = vector.shape_cast %180 : vector<1x4x1xf32> to vector<4x1xf32>
    %c1_i32_73 = arith.constant 1 : i32
    %182 = tpu.dynamic_rotate %177 by %c1_i32_73 dim 1 : vector<4x512xf32>, i32 -> vector<4x512xf32>
    %cst_74 = arith.constant 0.000000e+00 : f32
    %183 = vector.shape_cast %6 : vector<1x512xi1> to vector<1x512xi1>
    %184 = vector.broadcast %183 : vector<1x512xi1> to vector<4x512xi1>
    %185 = vector.broadcast %cst_74 : f32 to vector<4x512xf32>
    %186 = arith.select %184, %182, %185 : vector<4x512xi1>, vector<4x512xf32>
    %c511_i32_75 = arith.constant 511 : i32
    %187 = tpu.dynamic_rotate %177 by %c511_i32_75 dim 1 : vector<4x512xf32>, i32 -> vector<4x512xf32>
    %cst_76 = arith.constant 0.000000e+00 : f32
    %188 = vector.shape_cast %8 : vector<1x512xi1> to vector<1x512xi1>
    %189 = vector.broadcast %188 : vector<1x512xi1> to vector<4x512xi1>
    %190 = vector.broadcast %cst_76 : f32 to vector<4x512xf32>
    %191 = arith.select %189, %187, %190 : vector<4x512xi1>, vector<4x512xf32>
    %c16_i32_77 = arith.constant 16 : i32
    %192 = tpu.dynamic_rotate %186 by %c16_i32_77 dim 1 : vector<4x512xf32>, i32 -> vector<4x512xf32>
    %cst_78 = arith.constant 0.000000e+00 : f32
    %193 = vector.shape_cast %10 : vector<1x512xi1> to vector<1x512xi1>
    %194 = vector.broadcast %193 : vector<1x512xi1> to vector<4x512xi1>
    %195 = vector.broadcast %cst_78 : f32 to vector<4x512xf32>
    %196 = arith.select %194, %192, %195 : vector<4x512xi1>, vector<4x512xf32>
    %c16_i32_79 = arith.constant 16 : i32
    %197 = tpu.dynamic_rotate %177 by %c16_i32_79 dim 1 : vector<4x512xf32>, i32 -> vector<4x512xf32>
    %cst_80 = arith.constant 0.000000e+00 : f32
    %198 = vector.shape_cast %10 : vector<1x512xi1> to vector<1x512xi1>
    %199 = vector.broadcast %198 : vector<1x512xi1> to vector<4x512xi1>
    %200 = vector.broadcast %cst_80 : f32 to vector<4x512xf32>
    %201 = arith.select %199, %197, %200 : vector<4x512xi1>, vector<4x512xf32>
    %c16_i32_81 = arith.constant 16 : i32
    %202 = tpu.dynamic_rotate %191 by %c16_i32_81 dim 1 : vector<4x512xf32>, i32 -> vector<4x512xf32>
    %cst_82 = arith.constant 0.000000e+00 : f32
    %203 = vector.shape_cast %10 : vector<1x512xi1> to vector<1x512xi1>
    %204 = vector.broadcast %203 : vector<1x512xi1> to vector<4x512xi1>
    %205 = vector.broadcast %cst_82 : f32 to vector<4x512xf32>
    %206 = arith.select %204, %202, %205 : vector<4x512xi1>, vector<4x512xf32>
    %c496_i32_83 = arith.constant 496 : i32
    %207 = tpu.dynamic_rotate %186 by %c496_i32_83 dim 1 : vector<4x512xf32>, i32 -> vector<4x512xf32>
    %cst_84 = arith.constant 0.000000e+00 : f32
    %208 = vector.shape_cast %12 : vector<1x512xi1> to vector<1x512xi1>
    %209 = vector.broadcast %208 : vector<1x512xi1> to vector<4x512xi1>
    %210 = vector.broadcast %cst_84 : f32 to vector<4x512xf32>
    %211 = arith.select %209, %207, %210 : vector<4x512xi1>, vector<4x512xf32>
    %c496_i32_85 = arith.constant 496 : i32
    %212 = tpu.dynamic_rotate %177 by %c496_i32_85 dim 1 : vector<4x512xf32>, i32 -> vector<4x512xf32>
    %cst_86 = arith.constant 0.000000e+00 : f32
    %213 = vector.shape_cast %12 : vector<1x512xi1> to vector<1x512xi1>
    %214 = vector.broadcast %213 : vector<1x512xi1> to vector<4x512xi1>
    %215 = vector.broadcast %cst_86 : f32 to vector<4x512xf32>
    %216 = arith.select %214, %212, %215 : vector<4x512xi1>, vector<4x512xf32>
    %c496_i32_87 = arith.constant 496 : i32
    %217 = tpu.dynamic_rotate %191 by %c496_i32_87 dim 1 : vector<4x512xf32>, i32 -> vector<4x512xf32>
    %cst_88 = arith.constant 0.000000e+00 : f32
    %218 = vector.shape_cast %12 : vector<1x512xi1> to vector<1x512xi1>
    %219 = vector.broadcast %218 : vector<1x512xi1> to vector<4x512xi1>
    %220 = vector.broadcast %cst_88 : f32 to vector<4x512xf32>
    %221 = arith.select %219, %217, %220 : vector<4x512xi1>, vector<4x512xf32>
    %222 = tpu.concatenate %196, %201, %206, %186, %177, %191, %211, %216, %221 in 0 : vector<4x512xf32>, vector<4x512xf32>, vector<4x512xf32>, vector<4x512xf32>, vector<4x512xf32>, vector<4x512xf32>, vector<4x512xf32>, vector<4x512xf32>, vector<4x512xf32> -> vector<36x512xf32>
    %cst_89 = arith.constant dense<0.000000e+00> : vector<4x512xf32>
    %223 = tpu.matmul %179, %222, %cst_89 {dimension_numbers = #tpu.dot_dimension_numbers<[1], [0], [0], [1], [0, 0, 1, 1], [], []>, precision = #tpu.contract_precision<fp32>} : vector<4x36xf32>, vector<36x512xf32>, vector<4x512xf32> -> vector<4x512xf32>
    %224 = vector.broadcast %181 : vector<4x1xf32> to vector<4x512xf32>
    %225 = arith.addf %223, %224 : vector<4x512xf32>
    %226 = arith.addf %225, %123 : vector<4x512xf32>
    %c0_90 = arith.constant 0 : index
    %c0_91 = arith.constant 0 : index
    %227 = vector.load %arg3[%c0_90, %c0_91] : memref<4x512xf32, #tpu.memory_space<vmem>>, vector<4x512xf32>
    tpu.vector_store %arg3[%c0_90, %c0_91], %226 {strides = array<i32>} : memref<4x512xf32, #tpu.memory_space<vmem>>, vector<4x512xf32>,
    return
  }
}

</mosaic_0001>

<llo_original>
// kernel: residual_block_forward.1
$region0: #{residual_block_forward.1}
  #allocation0 [shape = 'u32[]', space=smem, size = 0x4, offset = 0x4, fixed_abs, tag = 'smem constant byte address 0x4 - core index']
  #allocation1 [shape = 'u32[144,128]{1,0:T(1,128)}', space=vmem, size = 0x12000, scoped, tag = 'internal scratch']
  %s0 = inlined_call_operand.vmem [shape: f32[4,512], index: 0, kind: input, shape index: {}, may-alias: {0,3}]
  %s1 = inlined_call_operand.vmem [shape: f32[4,4,36], index: 1, kind: input, shape index: {}]
  %s2 = inlined_call_operand.vmem [shape: f32[4,4,1], index: 2, kind: input, shape index: {}]
  %s3 = inlined_call_operand.vmem [shape: f32[4,512], index: 3, kind: output, shape index: {}, may-alias: {0,3}]
  %s4 = sld [smem:[#allocation0]]
  $region22: #{residual_block_forward.1} parent=0
    _
  %s6 = ssub.s32 1, %s4
  %s7 = scalar_select 0, %s6, %s4
  // Predicated region
  $region2: #{residual_block_forward.1} parent=0 // pred_check
    _
  $region3: #{residual_block_forward.1} parent=0 // pred_check_branch
    %9 = sbr.rel (0) target = $region5
  $region4: #{residual_block_forward.1} parent=0 // pred_region
    _
  $region5: #{residual_block_forward.1} parent=0 // pred_fallthru
    _
  // Predicated region
  $region6: #{residual_block_forward.1} parent=0 // pred_check
    _
  $region7: #{residual_block_forward.1} parent=0 // pred_check_branch
    %11 = sbr.rel (0) target = $region9
  $region8: #{residual_block_forward.1} parent=0 // pred_region
    _
  $region9: #{residual_block_forward.1} parent=0 // pred_fallthru
    _
  // Predicated region
  $region10: #{residual_block_forward.1} parent=0 // pred_check
    _
  $region11: #{residual_block_forward.1} parent=0 // pred_check_branch
    %13 = sbr.rel (0) target = $region13
  $region12: #{residual_block_forward.1} parent=0 // pred_region
    _
  $region13: #{residual_block_forward.1} parent=0 // pred_fallthru
    _
  %v14 = vlaneseq
  %v15 = vand.u32 %v14, 127
  %v16 = vadd.s32 %v15, 128
  %v17 = vadd.s32 %v15, 256
  %v18 = vadd.s32 %v15, 384
  %v19 = vand.u32 %v15, 255
  %v20 = vand.u32 %v16, 255
  %v21 = vand.u32 %v17, 255
  %v22 = vand.u32 %v18, 255
  %v23 = vand.u32 %v19, 15
  %v24 = vand.u32 %v20, 15
  %v25 = vand.u32 %v21, 15
  %v26 = vand.u32 %v22, 15
  %vm27 = vcmp.ne.s32.totalorder %v23, 0
  %vm28 = vcmp.ne.s32.totalorder %v24, 0
  %vm29 = vcmp.ne.s32.totalorder %v25, 0
  %vm30 = vcmp.ne.s32.totalorder %v26, 0
  %vm31 = vcmp.ne.s32.totalorder %v23, 15
  %vm32 = vcmp.ne.s32.totalorder %v24, 15
  %vm33 = vcmp.ne.s32.totalorder %v25, 15
  %vm34 = vcmp.ne.s32.totalorder %v26, 15
  %vm35 = vcmp.ge.s32.totalorder %v19, 16
  %vm36 = vcmp.ge.s32.totalorder %v20, 16
  %vm37 = vcmp.ge.s32.totalorder %v21, 16
  %vm38 = vcmp.ge.s32.totalorder %v22, 16
  %vm39 = vcmp.lt.s32.totalorder %v19, 240
  %vm40 = vcmp.lt.s32.totalorder %v20, 240
  %vm41 = vcmp.lt.s32.totalorder %v21, 240
  %vm42 = vcmp.lt.s32.totalorder %v22, 240
  %v43 = vld [vmem:[%s0] sm:$0xff]
  %v44 = vld [vmem:[%s0 + $0x8] sm:$0xff]
  %v45 = vld [vmem:[%s1] sm:$0xf]
  %v46 = vld [vmem:[%s2] sm:$0xf]
  %v49 = vcombine.high %v43, %v43
  %v50 = vcombine.high %v44, %v44
  %53 = vrot.lane.b32.xlu0 %v43, 1
  %v54 = vpop.permute.xlu0 %53
  %55 = vrot.lane.b32.xlu0 %v49, 1
  %v56 = vpop.permute.xlu0 %55
  %57 = vrot.lane.b32.xlu0 %v44, 1
  %v58 = vpop.permute.xlu0 %57
  %59 = vrot.lane.b32.xlu0 %v50, 1
  %v60 = vpop.permute.xlu0 %59
  %vm61 = vcmp.lt.s32.totalorder %v15, 1
  %v62 = vsel %vm61, %v58, %v60
  %v63 = vsel %vm61, %v56, %v58
  %v64 = vsel %vm61, %v54, %v56
  %v65 = vsel %vm61, %v60, %v54
  %v66 = vsel %vm27, 1, 0
  %v67 = vsel %vm28, 1, 0
  %v68 = vsel %vm29, 1, 0
  %v69 = vsel %vm30, 1, 0
  %vm70 = vcmp.eq.s32.totalorder %v66, 1
  %vm71 = vcmp.eq.s32.totalorder %v67, 1
  %vm72 = vcmp.eq.s32.totalorder %v68, 1
  %vm73 = vcmp.eq.s32.totalorder %v69, 1
  %v74 = vsel %vm70, %v65, 0.0
  %v75 = vsel %vm71, %v64, 0.0
  %v76 = vsel %vm72, %v63, 0.0
  %v77 = vsel %vm73, %v62, 0.0
  %78 = vrot.lane.b32.xlu0 %v43, 127
  %v79 = vpop.permute.xlu0 %78
  %80 = vrot.lane.b32.xlu0 %v49, 127
  %v81 = vpop.permute.xlu0 %80
  %82 = vrot.lane.b32.xlu0 %v44, 127
  %v83 = vpop.permute.xlu0 %82
  %84 = vrot.lane.b32.xlu0 %v50, 127
  %v85 = vpop.permute.xlu0 %84
  %vm86 = vcmp.lt.s32.totalorder %v15, 127
  %v87 = vsel %vm86, %v83, %v85
  %v88 = vsel %vm86, %v81, %v83
  %v89 = vsel %vm86, %v79, %v81
  %v90 = vsel %vm86, %v85, %v79
  %v91 = vsel %vm31, 1, 0
  %v92 = vsel %vm32, 1, 0
  %v93 = vsel %vm33, 1, 0
  %v94 = vsel %vm34, 1, 0
  %vm95 = vcmp.eq.s32.totalorder %v91, 1
  %vm96 = vcmp.eq.s32.totalorder %v92, 1
  %vm97 = vcmp.eq.s32.totalorder %v93, 1
  %vm98 = vcmp.eq.s32.totalorder %v94, 1
  %v99 = vsel %vm95, %v89, 0.0
  %v100 = vsel %vm96, %v88, 0.0
  %v101 = vsel %vm97, %v87, 0.0
  %v102 = vsel %vm98, %v90, 0.0
  %103 = vrot.lane.b32.xlu0 %v74, 16
  %v104 = vpop.permute.xlu0 %103
  %105 = vrot.lane.b32.xlu0 %v75, 16
  %v106 = vpop.permute.xlu0 %105
  %107 = vrot.lane.b32.xlu0 %v76, 16
  %v108 = vpop.permute.xlu0 %107
  %109 = vrot.lane.b32.xlu0 %v77, 16
  %v110 = vpop.permute.xlu0 %109
  %vm111 = vcmp.lt.s32.totalorder %v15, 16
  %v112 = vsel %vm111, %v108, %v110
  %v113 = vsel %vm111, %v106, %v108
  %v114 = vsel %vm111, %v104, %v106
  %v115 = vsel %vm111, %v110, %v104
  %v116 = vsel %vm35, 1, 0
  %v117 = vsel %vm36, 1, 0
  %v118 = vsel %vm37, 1, 0
  %v119 = vsel %vm38, 1, 0
  %vm120 = vcmp.eq.s32.totalorder %v116, 1
  %vm121 = vcmp.eq.s32.totalorder %v117, 1
  %vm122 = vcmp.eq.s32.totalorder %v118, 1
  %vm123 = vcmp.eq.s32.totalorder %v119, 1
  %v124 = vsel %vm120, %v115, 0.0
  %v125 = vsel %vm121, %v114, 0.0
  %v126 = vsel %vm122, %v113, 0.0
  %v127 = vsel %vm123, %v112, 0.0
  %128 = vrot.lane.b32.xlu0 %v43, 16
  %v129 = vpop.permute.xlu0 %128
  %130 = vrot.lane.b32.xlu0 %v49, 16
  %v131 = vpop.permute.xlu0 %130
  %132 = vrot.lane.b32.xlu0 %v44, 16
  %v133 = vpop.permute.xlu0 %132
  %134 = vrot.lane.b32.xlu0 %v50, 16
  %v135 = vpop.permute.xlu0 %134
  %v136 = vsel %vm111, %v133, %v135
  %v137 = vsel %vm111, %v131, %v133
  %v138 = vsel %vm111, %v129, %v131
  %v139 = vsel %vm111, %v135, %v129
  %v140 = vsel %vm120, %v139, 0.0
  %v141 = vsel %vm121, %v138, 0.0
  %v142 = vsel %vm122, %v137, 0.0
  %v143 = vsel %vm123, %v136, 0.0
  %144 = vrot.lane.b32.xlu0 %v99, 16
  %v145 = vpop.permute.xlu0 %144
  %146 = vrot.lane.b32.xlu0 %v100, 16
  %v147 = vpop.permute.xlu0 %146
  %148 = vrot.lane.b32.xlu0 %v101, 16
  %v149 = vpop.permute.xlu0 %148
  %150 = vrot.lane.b32.xlu0 %v102, 16
  %v151 = vpop.permute.xlu0 %150
  %v152 = vsel %vm111, %v149, %v151
  %v153 = vsel %vm111, %v147, %v149
  %v154 = vsel %vm111, %v145, %v147
  %v155 = vsel %vm111, %v151, %v145
  %v156 = vsel %vm120, %v155, 0.0
  %v157 = vsel %vm121, %v154, 0.0
  %v158 = vsel %vm122, %v153, 0.0
  %v159 = vsel %vm123, %v152, 0.0
  %160 = vrot.lane.b32.xlu0 %v74, 112
  %v161 = vpop.permute.xlu0 %160
  %162 = vrot.lane.b32.xlu0 %v75, 112
  %v163 = vpop.permute.xlu0 %162
  %164 = vrot.lane.b32.xlu0 %v76, 112
  %v165 = vpop.permute.xlu0 %164
  %166 = vrot.lane.b32.xlu0 %v77, 112
  %v167 = vpop.permute.xlu0 %166
  %vm168 = vcmp.lt.s32.totalorder %v15, 112
  %v169 = vsel %vm168, %v165, %v167
  %v170 = vsel %vm168, %v163, %v165
  %v171 = vsel %vm168, %v161, %v163
  %v172 = vsel %vm168, %v167, %v161
  %v173 = vsel %vm39, 1, 0
  %v174 = vsel %vm40, 1, 0
  %v175 = vsel %vm41, 1, 0
  %v176 = vsel %vm42, 1, 0
  %vm177 = vcmp.eq.s32.totalorder %v173, 1
  %vm178 = vcmp.eq.s32.totalorder %v174, 1
  %vm179 = vcmp.eq.s32.totalorder %v175, 1
  %vm180 = vcmp.eq.s32.totalorder %v176, 1
  %v181 = vsel %vm177, %v171, 0.0
  %v182 = vsel %vm178, %v170, 0.0
  %v183 = vsel %vm179, %v169, 0.0
  %v184 = vsel %vm180, %v172, 0.0
  %185 = vrot.lane.b32.xlu0 %v43, 112
  %v186 = vpop.permute.xlu0 %185
  %187 = vrot.lane.b32.xlu0 %v49, 112
  %v188 = vpop.permute.xlu0 %187
  %189 = vrot.lane.b32.xlu0 %v44, 112
  %v190 = vpop.permute.xlu0 %189
  %191 = vrot.lane.b32.xlu0 %v50, 112
  %v192 = vpop.permute.xlu0 %191
  %v193 = vsel %vm168, %v190, %v192
  %v194 = vsel %vm168, %v188, %v190
  %v195 = vsel %vm168, %v186, %v188
  %v196 = vsel %vm168, %v192, %v186
  %v197 = vsel %vm177, %v195, 0.0
  %v198 = vsel %vm178, %v194, 0.0
  %v199 = vsel %vm179, %v193, 0.0
  %v200 = vsel %vm180, %v196, 0.0
  %201 = vrot.lane.b32.xlu0 %v99, 112
  %v202 = vpop.permute.xlu0 %201
  %203 = vrot.lane.b32.xlu0 %v100, 112
  %v204 = vpop.permute.xlu0 %203
  %205 = vrot.lane.b32.xlu0 %v101, 112
  %v206 = vpop.permute.xlu0 %205
  %207 = vrot.lane.b32.xlu0 %v102, 112
  %v208 = vpop.permute.xlu0 %207
  %v209 = vsel %vm168, %v206, %v208
  %v210 = vsel %vm168, %v204, %v206
  %v211 = vsel %vm168, %v202, %v204
  %v212 = vsel %vm168, %v208, %v202
  %v213 = vsel %vm177, %v211, 0.0
  %v214 = vsel %vm178, %v210, 0.0
  %v215 = vsel %vm179, %v209, 0.0
  %v216 = vsel %vm180, %v212, 0.0
  %v221 = vrot.slane %v140, 4
  %v222 = vrot.slane %v141, 4
  %v223 = vrot.slane %v142, 4
  %v224 = vrot.slane %v143, 4
  %v233 = vrot.slane %v74, 4
  %v234 = vrot.slane %v75, 4
  %v235 = vrot.slane %v76, 4
  %v236 = vrot.slane %v77, 4
  %v245 = vrot.slane %v99, 4
  %v246 = vrot.slane %v100, 4
  %v247 = vrot.slane %v101, 4
  %v248 = vrot.slane %v102, 4
  %v257 = vrot.slane %v197, 4
  %v258 = vrot.slane %v198, 4
  %v259 = vrot.slane %v199, 4
  %v260 = vrot.slane %v200, 4
  %vm265 = vcmask 1043456
  %v266 = vsel %vm265, %v124, %v221
  %v267 = vsel %vm265, %v125, %v222
  %v268 = vsel %vm265, %v126, %v223
  %v269 = vsel %vm265, %v127, %v224
  %v270 = vsel %vm265, %v156, %v233
  %v271 = vsel %vm265, %v157, %v234
  %v272 = vsel %vm265, %v158, %v235
  %v273 = vsel %vm265, %v159, %v236
  %v274 = vsel %vm265, %v43, %v245
  %v275 = vsel %vm265, %v49, %v246
  %v276 = vsel %vm265, %v44, %v247
  %v277 = vsel %vm265, %v50, %v248
  %v278 = vsel %vm265, %v181, %v257
  %v279 = vsel %vm265, %v182, %v258
  %v280 = vsel %vm265, %v183, %v259
  %v281 = vsel %vm265, %v184, %v260
  %283 = vset.pattern.permute.xlu0 0
  %284 = vperm.xlu0 %283, %v46
  %v285 = vpop.permute.xlu0 %284
  %vm287 = vcmask 293888
  %v289 = vsel %vm287, %v45, 0
  %v292 = vsel %vm265, %v213, 0
  %v295 = vsel %vm265, %v214, 0
  %v298 = vsel %vm265, %v215, 0
  %v301 = vsel %vm265, %v216, 0
  %v303 = vand.u32 %v267, 4294901760
  %304 = vmatprep.subr.mxu0 %v303
  %v305 = vand.u32 %v266, 4294901760
  %306 = vmatpush1.msra.mxu0 %v305
  %v307 = vand.u32 %v271, 4294901760
  %308 = vmatprep.subr.mxu0 %v307
  %v309 = vand.u32 %v270, 4294901760
  %310 = vmatpush1.msra.mxu0 %v309
  %v311 = vand.u32 %v275, 4294901760
  %312 = vmatprep.subr.mxu0 %v311
  %v313 = vand.u32 %v274, 4294901760
  %314 = vmatpush1.msra.mxu0 %v313
  %v315 = vand.u32 %v279, 4294901760
  %316 = vmatprep.subr.mxu0 %v315
  %v317 = vand.u32 %v278, 4294901760
  %318 = vmatpush1.msra.mxu0 %v317
  %v319 = vand.u32 %v295, 4294901760
  %320 = vmatprep.subr.mxu0 %v319
  %v321 = vand.u32 %v292, 4294901760
  %322 = vmatpush1.msra.mxu0 %v321
  %323 = vmatprep.subr.mxu0 0.0
  %324 = vmatpush1.msra.mxu0 0.0
  %325 = vmatprep.subr.mxu0 0.0
  %326 = vmatpush1.msra.mxu0 0.0
  %327 = vmatprep.subr.mxu0 0.0
  %328 = vmatpush1.msra.mxu0 0.0
  %329 = vmatprep.subr.mxu0 0.0
  %330 = vmatpush1.msra.mxu0 0.0
  %331 = vmatprep.subr.mxu0 0.0
  %332 = vmatpush1.msra.mxu0 0.0
  %333 = vmatprep.subr.mxu0 0.0
  %334 = vmatpush1.msra.mxu0 0.0
  %335 = vmatprep.subr.mxu0 0.0
  %336 = vmatpush1.msra.mxu0 0.0
  %337 = vmatprep.subr.mxu0 0.0
  %338 = vmatpush1.msra.mxu0 0.0
  %339 = vmatprep.subr.mxu0 0.0
  %340 = vmatpush1.msra.mxu0 0.0
  %341 = vmatprep.subr.mxu0 0.0
  %342 = vmatpush1.msra.mxu0 0.0
  %343 = vmatprep.subr.mxu0 0.0
  %344 = vmatpush1.msra.mxu0 0.0
  %345 = vmatprep.subr.mxu0 0.0
  %346 = vmatpush1.msra.mxu0 0.0
  %347 = vmatprep.subr.mxu0 0.0
  %348 = vmatpush1.msra.mxu0 0.0
  %349 = vmatprep.subr.mxu0 0.0
  %350 = vmatpush1.msra.mxu0 0.0
  %351 = vmatprep.subr.mxu0 0.0
  %352 = vmatpush1.msra.mxu0 0.0
  %353 = vmatprep.subr.mxu0 0.0
  %354 = vmatpush1.msra.mxu0 0.0
  %355 = vmatprep.subr.mxu0 0.0
  %356 = vmatpush1.msra.mxu0 0.0
  %357 = vmatprep.subr.mxu0 0.0
  %358 = vmatpush1.msra.mxu0 0.0
  %359 = vmatprep.subr.mxu0 0.0
  %360 = vmatpush1.msra.mxu0 0.0
  %361 = vmatprep.subr.mxu0 0.0
  %362 = vmatpush1.msra.mxu0 0.0
  %363 = vmatprep.subr.mxu0 0.0
  %364 = vmatpush1.msra.mxu0 0.0
  %365 = vmatprep.subr.mxu0 0.0
  %366 = vmatpush1.msra.mxu0 0.0
  %367 = vmatprep.subr.mxu0 0.0
  %368 = vmatpush1.msra.mxu0 0.0
  %369 = vmatprep.subr.mxu0 0.0
  %370 = vmatpush1.msra.mxu0 0.0
  %371 = vmatprep.subr.mxu0 0.0
  %372 = vmatpush1.msra.mxu0 0.0
  %373 = vmatprep.subr.mxu0 0.0
  %374 = vmatpush1.msra.mxu0 0.0
  %375 = vmatprep.subr.mxu0 0.0
  %376 = vmatpush1.msra.mxu0 0.0
  %377 = vmatprep.mubr.f32.mxu0 0.0
  %v378 = vand.u32 %v289, 4294901760
  %v379 = vsub.f32 %v289, %v378
  %v380 = vand.u32 %v379, 4294901760
  %v381 = vsub.f32 %v379, %v380
  %v382 = vand.u32 %v381, 4294901760
  %383 = vmatmul.mubr.f32.gmra.mrb[0].mxu0 %v382
  %v384 = vpop.f32.mrb[0].mxu0
  %v385 = vadd.f32 %v285, %v384
  %v386 = vpop.f32.mrb[0].mxu0
  %v387 = vadd.f32 %v285, %v386
  %388 = vdwg.mxu0
  %v389 = vand.u32 %v267, 4294901760
  %v390 = vsub.f32 %v267, %v389
  %v391 = vand.u32 %v390, 4294901760
  %v392 = vsub.f32 %v390, %v391
  %v393 = vand.u32 %v392, 4294901760
  %394 = vmatprep.subr.mxu0 %v393
  %v395 = vand.u32 %v266, 4294901760
  %v396 = vsub.f32 %v266, %v395
  %v397 = vand.u32 %v396, 4294901760
  %v398 = vsub.f32 %v396, %v397
  %v399 = vand.u32 %v398, 4294901760
  %400 = vmatpush1.msra.mxu0 %v399
  %v401 = vand.u32 %v271, 4294901760
  %v402 = vsub.f32 %v271, %v401
  %v403 = vand.u32 %v402, 4294901760
  %v404 = vsub.f32 %v402, %v403
  %v405 = vand.u32 %v404, 4294901760
  %406 = vmatprep.subr.mxu0 %v405
  %v407 = vand.u32 %v270, 4294901760
  %v408 = vsub.f32 %v270, %v407
  %v409 = vand.u32 %v408, 4294901760
  %v410 = vsub.f32 %v408, %v409
  %v411 = vand.u32 %v410, 4294901760
  %412 = vmatpush1.msra.mxu0 %v411
  %v413 = vand.u32 %v275, 4294901760
  %v414 = vsub.f32 %v275, %v413
  %v415 = vand.u32 %v414, 4294901760
  %v416 = vsub.f32 %v414, %v415
  %v417 = vand.u32 %v416, 4294901760
  %418 = vmatprep.subr.mxu0 %v417
  %v419 = vand.u32 %v274, 4294901760
  %v420 = vsub.f32 %v274, %v419
  %v421 = vand.u32 %v420, 4294901760
  %v422 = vsub.f32 %v420, %v421
  %v423 = vand.u32 %v422, 4294901760
  %424 = vmatpush1.msra.mxu0 %v423
  %v425 = vand.u32 %v279, 4294901760
  %v426 = vsub.f32 %v279, %v425
  %v427 = vand.u32 %v426, 4294901760
  %v428 = vsub.f32 %v426, %v427
  %v429 = vand.u32 %v428, 4294901760
  %430 = vmatprep.subr.mxu0 %v429
  %v431 = vand.u32 %v278, 4294901760
  %v432 = vsub.f32 %v278, %v431
  %v433 = vand.u32 %v432, 4294901760
  %v434 = vsub.f32 %v432, %v433
  %v435 = vand.u32 %v434, 4294901760
  %436 = vmatpush1.msra.mxu0 %v435
  %v437 = vand.u32 %v295, 4294901760
  %v438 = vsub.f32 %v295, %v437
  %v439 = vand.u32 %v438, 4294901760
  %v440 = vsub.f32 %v438, %v439
  %v441 = vand.u32 %v440, 4294901760
  %442 = vmatprep.subr.mxu0 %v441
  %v443 = vand.u32 %v292, 4294901760
  %v444 = vsub.f32 %v292, %v443
  %v445 = vand.u32 %v444, 4294901760
  %v446 = vsub.f32 %v444, %v445
  %v447 = vand.u32 %v446, 4294901760
  %448 = vmatpush1.msra.mxu0 %v447
  %449 = vmatprep.subr.mxu0 0.0
  %450 = vmatpush1.msra.mxu0 0.0
  %451 = vmatprep.subr.mxu0 0.0
  %452 = vmatpush1.msra.mxu0 0.0
  %453 = vmatprep.subr.mxu0 0.0
  %454 = vmatpush1.msra.mxu0 0.0
  %455 = vmatprep.subr.mxu0 0.0
  %456 = vmatpush1.msra.mxu0 0.0
  %457 = vmatprep.subr.mxu0 0.0
  %458 = vmatpush1.msra.mxu0 0.0
  %459 = vmatprep.subr.mxu0 0.0
  %460 = vmatpush1.msra.mxu0 0.0
  %461 = vmatprep.subr.mxu0 0.0
  %462 = vmatpush1.msra.mxu0 0.0
  %463 = vmatprep.subr.mxu0 0.0
  %464 = vmatpush1.msra.mxu0 0.0
  %465 = vmatprep.subr.mxu0 0.0
  %466 = vmatpush1.msra.mxu0 0.0
  %467 = vmatprep.subr.mxu0 0.0
  %468 = vmatpush1.msra.mxu0 0.0
  %469 = vmatprep.subr.mxu0 0.0
  %470 = vmatpush1.msra.mxu0 0.0
  %471 = vmatprep.subr.mxu0 0.0
  %472 = vmatpush1.msra.mxu0 0.0
  %473 = vmatprep.subr.mxu0 0.0
  %474 = vmatpush1.msra.mxu0 0.0
  %475 = vmatprep.subr.mxu0 0.0
  %476 = vmatpush1.msra.mxu0 0.0
  %477 = vmatprep.subr.mxu0 0.0
  %478 = vmatpush1.msra.mxu0 0.0
  %479 = vmatprep.subr.mxu0 0.0
  %480 = vmatpush1.msra.mxu0 0.0
  %481 = vmatprep.subr.mxu0 0.0
  %482 = vmatpush1.msra.mxu0 0.0
  %483 = vmatprep.subr.mxu0 0.0
  %484 = vmatpush1.msra.mxu0 0.0
  %485 = vmatprep.subr.mxu0 0.0
  %486 = vmatpush1.msra.mxu0 0.0
  %487 = vmatprep.subr.mxu0 0.0
  %488 = vmatpush1.msra.mxu0 0.0
  %489 = vmatprep.subr.mxu0 0.0
  %490 = vmatpush1.msra.mxu0 0.0
  %491 = vmatprep.subr.mxu0 0.0
  %492 = vmatpush1.msra.mxu0 0.0
  %493 = vmatprep.subr.mxu0 0.0
  %494 = vmatpush1.msra.mxu0 0.0
  %495 = vmatprep.subr.mxu0 0.0
  %496 = vmatpush1.msra.mxu0 0.0
  %497 = vmatprep.subr.mxu0 0.0
  %498 = vmatpush1.msra.mxu0 0.0
  %499 = vmatprep.subr.mxu0 0.0
  %500 = vmatpush1.msra.mxu0 0.0
  %501 = vmatprep.subr.mxu0 0.0
  %502 = vmatpush1.msra.mxu0 0.0
  %503 = vmatprep.mubr.f32.mxu0 0.0
  %v504 = vand.u32 %v289, 4294901760
  %505 = vmatmul.mubr.f32.gmra.mrb[0].mxu0 %v504
  %v506 = vpop.f32.mrb[0].mxu0
  %v507 = vadd.f32 %v385, %v506
  %v508 = vpop.f32.mrb[0].mxu0
  %v509 = vadd.f32 %v387, %v508
  %510 = vdwg.mxu0
  %v511 = vand.u32 %v267, 4294901760
  %v512 = vsub.f32 %v267, %v511
  %513 = vmatprep.subr.mxu0 %v512
  %v514 = vand.u32 %v266, 4294901760
  %v515 = vsub.f32 %v266, %v514
  %516 = vmatpush1.msra.mxu0 %v515
  %v517 = vand.u32 %v271, 4294901760
  %v518 = vsub.f32 %v271, %v517
  %519 = vmatprep.subr.mxu0 %v518
  %v520 = vand.u32 %v270, 4294901760
  %v521 = vsub.f32 %v270, %v520
  %522 = vmatpush1.msra.mxu0 %v521
  %v523 = vand.u32 %v275, 4294901760
  %v524 = vsub.f32 %v275, %v523
  %525 = vmatprep.subr.mxu0 %v524
  %v526 = vand.u32 %v274, 4294901760
  %v527 = vsub.f32 %v274, %v526
  %528 = vmatpush1.msra.mxu0 %v527
  %v529 = vand.u32 %v279, 4294901760
  %v530 = vsub.f32 %v279, %v529
  %531 = vmatprep.subr.mxu0 %v530
  %v532 = vand.u32 %v278, 4294901760
  %v533 = vsub.f32 %v278, %v532
  %534 = vmatpush1.msra.mxu0 %v533
  %v535 = vand.u32 %v295, 4294901760
  %v536 = vsub.f32 %v295, %v535
  %537 = vmatprep.subr.mxu0 %v536
  %v538 = vand.u32 %v292, 4294901760
  %v539 = vsub.f32 %v292, %v538
  %540 = vmatpush1.msra.mxu0 %v539
  %541 = vmatprep.subr.mxu0 0.0
  %542 = vmatpush1.msra.mxu0 0.0
  %543 = vmatprep.subr.mxu0 0.0
  %544 = vmatpush1.msra.mxu0 0.0
  %545 = vmatprep.subr.mxu0 0.0
  %546 = vmatpush1.msra.mxu0 0.0
  %547 = vmatprep.subr.mxu0 0.0
  %548 = vmatpush1.msra.mxu0 0.0
  %549 = vmatprep.subr.mxu0 0.0
  %550 = vmatpush1.msra.mxu0 0.0
  %551 = vmatprep.subr.mxu0 0.0
  %552 = vmatpush1.msra.mxu0 0.0
  %553 = vmatprep.subr.mxu0 0.0
  %554 = vmatpush1.msra.mxu0 0.0
  %555 = vmatprep.subr.mxu0 0.0
  %556 = vmatpush1.msra.mxu0 0.0
  %557 = vmatprep.subr.mxu0 0.0
  %558 = vmatpush1.msra.mxu0 0.0
  %559 = vmatprep.subr.mxu0 0.0
  %560 = vmatpush1.msra.mxu0 0.0
  %561 = vmatprep.subr.mxu0 0.0
  %562 = vmatpush1.msra.mxu0 0.0
  %563 = vmatprep.subr.mxu0 0.0
  %564 = vmatpush1.msra.mxu0 0.0
  %565 = vmatprep.subr.mxu0 0.0
  %566 = vmatpush1.msra.mxu0 0.0
  %567 = vmatprep.subr.mxu0 0.0
  %568 = vmatpush1.msra.mxu0 0.0
  %569 = vmatprep.subr.mxu0 0.0
  %570 = vmatpush1.msra.mxu0 0.0
  %571 = vmatprep.subr.mxu0 0.0
  %572 = vmatpush1.msra.mxu0 0.0
  %573 = vmatprep.subr.mxu0 0.0
  %574 = vmatpush1.msra.mxu0 0.0
  %575 = vmatprep.subr.mxu0 0.0
  %576 = vmatpush1.msra.mxu0 0.0
  %577 = vmatprep.subr.mxu0 0.0
  %578 = vmatpush1.msra.mxu0 0.0
  %579 = vmatprep.subr.mxu0 0.0
  %580 = vmatpush1.msra.mxu0 0.0
  %581 = vmatprep.subr.mxu0 0.0
  %582 = vmatpush1.msra.mxu0 0.0
  %583 = vmatprep.subr.mxu0 0.0
  %584 = vmatpush1.msra.mxu0 0.0
  %585 = vmatprep.subr.mxu0 0.0
  %586 = vmatpush1.msra.mxu0 0.0
  %587 = vmatprep.subr.mxu0 0.0
  %588 = vmatpush1.msra.mxu0 0.0
  %589 = vmatprep.subr.mxu0 0.0
  %590 = vmatpush1.msra.mxu0 0.0
  %591 = vmatprep.subr.mxu0 0.0
  %592 = vmatpush1.msra.mxu0 0.0
  %593 = vmatprep.subr.mxu0 0.0
  %594 = vmatpush1.msra.mxu0 0.0
  %595 = vmatprep.mubr.f32.mxu0 0.0
  %v596 = vand.u32 %v289, 4294901760
  %v597 = vsub.f32 %v289, %v596
  %598 = vmatmul.mubr.f32.gmra.mrb[0].mxu0 %v597
  %v599 = vpop.f32.mrb[0].mxu0
  %v600 = vadd.f32 %v507, %v599
  %v601 = vpop.f32.mrb[0].mxu0
  %v602 = vadd.f32 %v509, %v601
  %603 = vdwg.mxu0
  %v604 = vand.u32 %v267, 4294901760
  %605 = vmatprep.subr.mxu0 %v604
  %v606 = vand.u32 %v266, 4294901760
  %607 = vmatpush1.msra.mxu0 %v606
  %v608 = vand.u32 %v271, 4294901760
  %609 = vmatprep.subr.mxu0 %v608
  %v610 = vand.u32 %v270, 4294901760
  %611 = vmatpush1.msra.mxu0 %v610
  %v612 = vand.u32 %v275, 4294901760
  %613 = vmatprep.subr.mxu0 %v612
  %v614 = vand.u32 %v274, 4294901760
  %615 = vmatpush1.msra.mxu0 %v614
  %v616 = vand.u32 %v279, 4294901760
  %617 = vmatprep.subr.mxu0 %v616
  %v618 = vand.u32 %v278, 4294901760
  %619 = vmatpush1.msra.mxu0 %v618
  %v620 = vand.u32 %v295, 4294901760
  %621 = vmatprep.subr.mxu0 %v620
  %v622 = vand.u32 %v292, 4294901760
  %623 = vmatpush1.msra.mxu0 %v622
  %624 = vmatprep.subr.mxu0 0.0
  %625 = vmatpush1.msra.mxu0 0.0
  %626 = vmatprep.subr.mxu0 0.0
  %627 = vmatpush1.msra.mxu0 0.0
  %628 = vmatprep.subr.mxu0 0.0
  %629 = vmatpush1.msra.mxu0 0.0
  %630 = vmatprep.subr.mxu0 0.0
  %631 = vmatpush1.msra.mxu0 0.0
  %632 = vmatprep.subr.mxu0 0.0
  %633 = vmatpush1.msra.mxu0 0.0
  %634 = vmatprep.subr.mxu0 0.0
  %635 = vmatpush1.msra.mxu0 0.0
  %636 = vmatprep.subr.mxu0 0.0
  %637 = vmatpush1.msra.mxu0 0.0
  %638 = vmatprep.subr.mxu0 0.0
  %639 = vmatpush1.msra.mxu0 0.0
  %640 = vmatprep.subr.mxu0 0.0
  %641 = vmatpush1.msra.mxu0 0.0
  %642 = vmatprep.subr.mxu0 0.0
  %643 = vmatpush1.msra.mxu0 0.0
  %644 = vmatprep.subr.mxu0 0.0
  %645 = vmatpush1.msra.mxu0 0.0
  %646 = vmatprep.subr.mxu0 0.0
  %647 = vmatpush1.msra.mxu0 0.0
  %648 = vmatprep.subr.mxu0 0.0
  %649 = vmatpush1.msra.mxu0 0.0
  %650 = vmatprep.subr.mxu0 0.0
  %651 = vmatpush1.msra.mxu0 0.0
  %652 = vmatprep.subr.mxu0 0.0
  %653 = vmatpush1.msra.mxu0 0.0
  %654 = vmatprep.subr.mxu0 0.0
  %655 = vmatpush1.msra.mxu0 0.0
  %656 = vmatprep.subr.mxu0 0.0
  %657 = vmatpush1.msra.mxu0 0.0
  %658 = vmatprep.subr.mxu0 0.0
  %659 = vmatpush1.msra.mxu0 0.0
  %660 = vmatprep.subr.mxu0 0.0
  %661 = vmatpush1.msra.mxu0 0.0
  %662 = vmatprep.subr.mxu0 0.0
  %663 = vmatpush1.msra.mxu0 0.0
  %664 = vmatprep.subr.mxu0 0.0
  %665 = vmatpush1.msra.mxu0 0.0
  %666 = vmatprep.subr.mxu0 0.0
  %667 = vmatpush1.msra.mxu0 0.0
  %668 = vmatprep.subr.mxu0 0.0
  %669 = vmatpush1.msra.mxu0 0.0
  %670 = vmatprep.subr.mxu0 0.0
  %671 = vmatpush1.msra.mxu0 0.0
  %672 = vmatprep.subr.mxu0 0.0
  %673 = vmatpush1.msra.mxu0 0.0
  %674 = vmatprep.subr.mxu0 0.0
  %675 = vmatpush1.msra.mxu0 0.0
  %676 = vmatprep.subr.mxu0 0.0
  %677 = vmatpush1.msra.mxu0 0.0
  %678 = vmatprep.mubr.f32.mxu0 0.0
  %v679 = vand.u32 %v289, 4294901760
  %v680 = vsub.f32 %v289, %v679
  %v681 = vand.u32 %v680, 4294901760
  %682 = vmatmul.mubr.f32.gmra.mrb[0].mxu0 %v681
  %v683 = vpop.f32.mrb[0].mxu0
  %v684 = vadd.f32 %v600, %v683
  %v685 = vpop.f32.mrb[0].mxu0
  %v686 = vadd.f32 %v602, %v685
  %687 = vdwg.mxu0
  %v688 = vand.u32 %v267, 4294901760
  %v689 = vsub.f32 %v267, %v688
  %v690 = vand.u32 %v689, 4294901760
  %691 = vmatprep.subr.mxu0 %v690
  %v692 = vand.u32 %v266, 4294901760
  %v693 = vsub.f32 %v266, %v692
  %v694 = vand.u32 %v693, 4294901760
  %695 = vmatpush1.msra.mxu0 %v694
  %v696 = vand.u32 %v271, 4294901760
  %v697 = vsub.f32 %v271, %v696
  %v698 = vand.u32 %v697, 4294901760
  %699 = vmatprep.subr.mxu0 %v698
  %v700 = vand.u32 %v270, 4294901760
  %v701 = vsub.f32 %v270, %v700
  %v702 = vand.u32 %v701, 4294901760
  %703 = vmatpush1.msra.mxu0 %v702
  %v704 = vand.u32 %v275, 4294901760
  %v705 = vsub.f32 %v275, %v704
  %v706 = vand.u32 %v705, 4294901760
  %707 = vmatprep.subr.mxu0 %v706
  %v708 = vand.u32 %v274, 4294901760
  %v709 = vsub.f32 %v274, %v708
  %v710 = vand.u32 %v709, 4294901760
  %711 = vmatpush1.msra.mxu0 %v710
  %v712 = vand.u32 %v279, 4294901760
  %v713 = vsub.f32 %v279, %v712
  %v714 = vand.u32 %v713, 4294901760
  %715 = vmatprep.subr.mxu0 %v714
  %v716 = vand.u32 %v278, 4294901760
  %v717 = vsub.f32 %v278, %v716
  %v718 = vand.u32 %v717, 4294901760
  %719 = vmatpush1.msra.mxu0 %v718
  %v720 = vand.u32 %v295, 4294901760
  %v721 = vsub.f32 %v295, %v720
  %v722 = vand.u32 %v721, 4294901760
  %723 = vmatprep.subr.mxu0 %v722
  %v724 = vand.u32 %v292, 4294901760
  %v725 = vsub.f32 %v292, %v724
  %v726 = vand.u32 %v725, 4294901760
  %727 = vmatpush1.msra.mxu0 %v726
  %728 = vmatprep.subr.mxu0 0.0
  %729 = vmatpush1.msra.mxu0 0.0
  %730 = vmatprep.subr.mxu0 0.0
  %731 = vmatpush1.msra.mxu0 0.0
  %732 = vmatprep.subr.mxu0 0.0
  %733 = vmatpush1.msra.mxu0 0.0
  %734 = vmatprep.subr.mxu0 0.0
  %735 = vmatpush1.msra.mxu0 0.0
  %736 = vmatprep.subr.mxu0 0.0
  %737 = vmatpush1.msra.mxu0 0.0
  %738 = vmatprep.subr.mxu0 0.0
  %739 = vmatpush1.msra.mxu0 0.0
  %740 = vmatprep.subr.mxu0 0.0
  %741 = vmatpush1.msra.mxu0 0.0
  %742 = vmatprep.subr.mxu0 0.0
  %743 = vmatpush1.msra.mxu0 0.0
  %744 = vmatprep.subr.mxu0 0.0
  %745 = vmatpush1.msra.mxu0 0.0
  %746 = vmatprep.subr.mxu0 0.0
  %747 = vmatpush1.msra.mxu0 0.0
  %748 = vmatprep.subr.mxu0 0.0
  %749 = vmatpush1.msra.mxu0 0.0
  %750 = vmatprep.subr.mxu0 0.0
  %751 = vmatpush1.msra.mxu0 0.0
  %752 = vmatprep.subr.mxu0 0.0
  %753 = vmatpush1.msra.mxu0 0.0
  %754 = vmatprep.subr.mxu0 0.0
  %755 = vmatpush1.msra.mxu0 0.0
  %756 = vmatprep.subr.mxu0 0.0
  %757 = vmatpush1.msra.mxu0 0.0
  %758 = vmatprep.subr.mxu0 0.0
  %759 = vmatpush1.msra.mxu0 0.0
  %760 = vmatprep.subr.mxu0 0.0
  %761 = vmatpush1.msra.mxu0 0.0
  %762 = vmatprep.subr.mxu0 0.0
  %763 = vmatpush1.msra.mxu0 0.0
  %764 = vmatprep.subr.mxu0 0.0
  %765 = vmatpush1.msra.mxu0 0.0
  %766 = vmatprep.subr.mxu0 0.0
  %767 = vmatpush1.msra.mxu0 0.0
  %768 = vmatprep.subr.mxu0 0.0
  %769 = vmatpush1.msra.mxu0 0.0
  %770 = vmatprep.subr.mxu0 0.0
  %771 = vmatpush1.msra.mxu0 0.0
  %772 = vmatprep.subr.mxu0 0.0
  %773 = vmatpush1.msra.mxu0 0.0
  %774 = vmatprep.subr.mxu0 0.0
  %775 = vmatpush1.msra.mxu0 0.0
  %776 = vmatprep.subr.mxu0 0.0
  %777 = vmatpush1.msra.mxu0 0.0
  %778 = vmatprep.subr.mxu0 0.0
  %779 = vmatpush1.msra.mxu0 0.0
  %780 = vmatprep.subr.mxu0 0.0
  %781 = vmatpush1.msra.mxu0 0.0
  %782 = vmatprep.mubr.f32.mxu0 0.0
  %v783 = vand.u32 %v289, 4294901760
  %784 = vmatmul.mubr.f32.gmra.mrb[0].mxu0 %v783
  %v785 = vpop.f32.mrb[0].mxu0
  %v786 = vadd.f32 %v684, %v785
  %v787 = vpop.f32.mrb[0].mxu0
  %v788 = vadd.f32 %v686, %v787
  %789 = vdwg.mxu0
  %v790 = vand.u32 %v267, 4294901760
  %791 = vmatprep.subr.mxu0 %v790
  %v792 = vand.u32 %v266, 4294901760
  %793 = vmatpush1.msra.mxu0 %v792
  %v794 = vand.u32 %v271, 4294901760
  %795 = vmatprep.subr.mxu0 %v794
  %v796 = vand.u32 %v270, 4294901760
  %797 = vmatpush1.msra.mxu0 %v796
  %v798 = vand.u32 %v275, 4294901760
  %799 = vmatprep.subr.mxu0 %v798
  %v800 = vand.u32 %v274, 4294901760
  %801 = vmatpush1.msra.mxu0 %v800
  %v802 = vand.u32 %v279, 4294901760
  %803 = vmatprep.subr.mxu0 %v802
  %v804 = vand.u32 %v278, 4294901760
  %805 = vmatpush1.msra.mxu0 %v804
  %v806 = vand.u32 %v295, 4294901760
  %807 = vmatprep.subr.mxu0 %v806
  %v808 = vand.u32 %v292, 4294901760
  %809 = vmatpush1.msra.mxu0 %v808
  %810 = vmatprep.subr.mxu0 0.0
  %811 = vmatpush1.msra.mxu0 0.0
  %812 = vmatprep.subr.mxu0 0.0
  %813 = vmatpush1.msra.mxu0 0.0
  %814 = vmatprep.subr.mxu0 0.0
  %815 = vmatpush1.msra.mxu0 0.0
  %816 = vmatprep.subr.mxu0 0.0
  %817 = vmatpush1.msra.mxu0 0.0
  %818 = vmatprep.subr.mxu0 0.0
  %819 = vmatpush1.msra.mxu0 0.0
  %820 = vmatprep.subr.mxu0 0.0
  %821 = vmatpush1.msra.mxu0 0.0
  %822 = vmatprep.subr.mxu0 0.0
  %823 = vmatpush1.msra.mxu0 0.0
  %824 = vmatprep.subr.mxu0 0.0
  %825 = vmatpush1.msra.mxu0 0.0
  %826 = vmatprep.subr.mxu0 0.0
  %827 = vmatpush1.msra.mxu0 0.0
  %828 = vmatprep.subr.mxu0 0.0
  %829 = vmatpush1.msra.mxu0 0.0
  %830 = vmatprep.subr.mxu0 0.0
  %831 = vmatpush1.msra.mxu0 0.0
  %832 = vmatprep.subr.mxu0 0.0
  %833 = vmatpush1.msra.mxu0 0.0
  %834 = vmatprep.subr.mxu0 0.0
  %835 = vmatpush1.msra.mxu0 0.0
  %836 = vmatprep.subr.mxu0 0.0
  %837 = vmatpush1.msra.mxu0 0.0
  %838 = vmatprep.subr.mxu0 0.0
  %839 = vmatpush1.msra.mxu0 0.0
  %840 = vmatprep.subr.mxu0 0.0
  %841 = vmatpush1.msra.mxu0 0.0
  %842 = vmatprep.subr.mxu0 0.0
  %843 = vmatpush1.msra.mxu0 0.0
  %844 = vmatprep.subr.mxu0 0.0
  %845 = vmatpush1.msra.mxu0 0.0
  %846 = vmatprep.subr.mxu0 0.0
  %847 = vmatpush1.msra.mxu0 0.0
  %848 = vmatprep.subr.mxu0 0.0
  %849 = vmatpush1.msra.mxu0 0.0
  %850 = vmatprep.subr.mxu0 0.0
  %851 = vmatpush1.msra.mxu0 0.0
  %852 = vmatprep.subr.mxu0 0.0
  %853 = vmatpush1.msra.mxu0 0.0
  %854 = vmatprep.subr.mxu0 0.0
  %855 = vmatpush1.msra.mxu0 0.0
  %856 = vmatprep.subr.mxu0 0.0
  %857 = vmatpush1.msra.mxu0 0.0
  %858 = vmatprep.subr.mxu0 0.0
  %859 = vmatpush1.msra.mxu0 0.0
  %860 = vmatprep.subr.mxu0 0.0
  %861 = vmatpush1.msra.mxu0 0.0
  %862 = vmatprep.subr.mxu0 0.0
  %863 = vmatpush1.msra.mxu0 0.0
  %864 = vmatprep.mubr.f32.mxu0 0.0
  %v865 = vand.u32 %v289, 4294901760
  %866 = vmatmul.mubr.f32.gmra.mrb[0].mxu0 %v865
  %v867 = vpop.f32.mrb[0].mxu0
  %v868 = vadd.f32 %v786, %v867
  %v869 = vpop.f32.mrb[0].mxu0
  %v870 = vadd.f32 %v788, %v869
  %871 = vdwg.mxu0
  %v872 = vand.u32 %v269, 4294901760
  %873 = vmatprep.subr.mxu0 %v872
  %v874 = vand.u32 %v268, 4294901760
  %875 = vmatpush1.msra.mxu0 %v874
  %v876 = vand.u32 %v273, 4294901760
  %877 = vmatprep.subr.mxu0 %v876
  %v878 = vand.u32 %v272, 4294901760
  %879 = vmatpush1.msra.mxu0 %v878
  %v880 = vand.u32 %v277, 4294901760
  %881 = vmatprep.subr.mxu0 %v880
  %v882 = vand.u32 %v276, 4294901760
  %883 = vmatpush1.msra.mxu0 %v882
  %v884 = vand.u32 %v281, 4294901760
  %885 = vmatprep.subr.mxu0 %v884
  %v886 = vand.u32 %v280, 4294901760
  %887 = vmatpush1.msra.mxu0 %v886
  %v888 = vand.u32 %v301, 4294901760
  %889 = vmatprep.subr.mxu0 %v888
  %v890 = vand.u32 %v298, 4294901760
  %891 = vmatpush1.msra.mxu0 %v890
  %892 = vmatprep.subr.mxu0 0.0
  %893 = vmatpush1.msra.mxu0 0.0
  %894 = vmatprep.subr.mxu0 0.0
  %895 = vmatpush1.msra.mxu0 0.0
  %896 = vmatprep.subr.mxu0 0.0
  %897 = vmatpush1.msra.mxu0 0.0
  %898 = vmatprep.subr.mxu0 0.0
  %899 = vmatpush1.msra.mxu0 0.0
  %900 = vmatprep.subr.mxu0 0.0
  %901 = vmatpush1.msra.mxu0 0.0
  %902 = vmatprep.subr.mxu0 0.0
  %903 = vmatpush1.msra.mxu0 0.0
  %904 = vmatprep.subr.mxu0 0.0
  %905 = vmatpush1.msra.mxu0 0.0
  %906 = vmatprep.subr.mxu0 0.0
  %907 = vmatpush1.msra.mxu0 0.0
  %908 = vmatprep.subr.mxu0 0.0
  %909 = vmatpush1.msra.mxu0 0.0
  %910 = vmatprep.subr.mxu0 0.0
  %911 = vmatpush1.msra.mxu0 0.0
  %912 = vmatprep.subr.mxu0 0.0
  %913 = vmatpush1.msra.mxu0 0.0
  %914 = vmatprep.subr.mxu0 0.0
  %915 = vmatpush1.msra.mxu0 0.0
  %916 = vmatprep.subr.mxu0 0.0
  %917 = vmatpush1.msra.mxu0 0.0
  %918 = vmatprep.subr.mxu0 0.0
  %919 = vmatpush1.msra.mxu0 0.0
  %920 = vmatprep.subr.mxu0 0.0
  %921 = vmatpush1.msra.mxu0 0.0
  %922 = vmatprep.subr.mxu0 0.0
  %923 = vmatpush1.msra.mxu0 0.0
  %924 = vmatprep.subr.mxu0 0.0
  %925 = vmatpush1.msra.mxu0 0.0
  %926 = vmatprep.subr.mxu0 0.0
  %927 = vmatpush1.msra.mxu0 0.0
  %928 = vmatprep.subr.mxu0 0.0
  %929 = vmatpush1.msra.mxu0 0.0
  %930 = vmatprep.subr.mxu0 0.0
  %931 = vmatpush1.msra.mxu0 0.0
  %932 = vmatprep.subr.mxu0 0.0
  %933 = vmatpush1.msra.mxu0 0.0
  %934 = vmatprep.subr.mxu0 0.0
  %935 = vmatpush1.msra.mxu0 0.0
  %936 = vmatprep.subr.mxu0 0.0
  %937 = vmatpush1.msra.mxu0 0.0
  %938 = vmatprep.subr.mxu0 0.0
  %939 = vmatpush1.msra.mxu0 0.0
  %940 = vmatprep.subr.mxu0 0.0
  %941 = vmatpush1.msra.mxu0 0.0
  %942 = vmatprep.subr.mxu0 0.0
  %943 = vmatpush1.msra.mxu0 0.0
  %944 = vmatprep.subr.mxu0 0.0
  %945 = vmatpush1.msra.mxu0 0.0
  %946 = vmatprep.mubr.f32.mxu0 0.0
  %v947 = vand.u32 %v289, 4294901760
  %v948 = vsub.f32 %v289, %v947
  %v949 = vand.u32 %v948, 4294901760
  %v950 = vsub.f32 %v948, %v949
  %v951 = vand.u32 %v950, 4294901760
  %952 = vmatmul.mubr.f32.gmra.mrb[0].mxu0 %v951
  %v953 = vpop.f32.mrb[0].mxu0
  %v954 = vadd.f32 %v285, %v953
  %v955 = vpop.f32.mrb[0].mxu0
  %v956 = vadd.f32 %v285, %v955
  %957 = vdwg.mxu0
  %v958 = vand.u32 %v269, 4294901760
  %v959 = vsub.f32 %v269, %v958
  %v960 = vand.u32 %v959, 4294901760
  %v961 = vsub.f32 %v959, %v960
  %v962 = vand.u32 %v961, 4294901760
  %963 = vmatprep.subr.mxu0 %v962
  %v964 = vand.u32 %v268, 4294901760
  %v965 = vsub.f32 %v268, %v964
  %v966 = vand.u32 %v965, 4294901760
  %v967 = vsub.f32 %v965, %v966
  %v968 = vand.u32 %v967, 4294901760
  %969 = vmatpush1.msra.mxu0 %v968
  %v970 = vand.u32 %v273, 4294901760
  %v971 = vsub.f32 %v273, %v970
  %v972 = vand.u32 %v971, 4294901760
  %v973 = vsub.f32 %v971, %v972
  %v974 = vand.u32 %v973, 4294901760
  %975 = vmatprep.subr.mxu0 %v974
  %v976 = vand.u32 %v272, 4294901760
  %v977 = vsub.f32 %v272, %v976
  %v978 = vand.u32 %v977, 4294901760
  %v979 = vsub.f32 %v977, %v978
  %v980 = vand.u32 %v979, 4294901760
  %981 = vmatpush1.msra.mxu0 %v980
  %v982 = vand.u32 %v277, 4294901760
  %v983 = vsub.f32 %v277, %v982
  %v984 = vand.u32 %v983, 4294901760
  %v985 = vsub.f32 %v983, %v984
  %v986 = vand.u32 %v985, 4294901760
  %987 = vmatprep.subr.mxu0 %v986
  %v988 = vand.u32 %v276, 4294901760
  %v989 = vsub.f32 %v276, %v988
  %v990 = vand.u32 %v989, 4294901760
  %v991 = vsub.f32 %v989, %v990
  %v992 = vand.u32 %v991, 4294901760
  %993 = vmatpush1.msra.mxu0 %v992
  %v994 = vand.u32 %v281, 4294901760
  %v995 = vsub.f32 %v281, %v994
  %v996 = vand.u32 %v995, 4294901760
  %v997 = vsub.f32 %v995, %v996
  %v998 = vand.u32 %v997, 4294901760
  %999 = vmatprep.subr.mxu0 %v998
  %v1000 = vand.u32 %v280, 4294901760
  %v1001 = vsub.f32 %v280, %v1000
  %v1002 = vand.u32 %v1001, 4294901760
  %v1003 = vsub.f32 %v1001, %v1002
  %v1004 = vand.u32 %v1003, 4294901760
  %1005 = vmatpush1.msra.mxu0 %v1004
  %v1006 = vand.u32 %v301, 4294901760
  %v1007 = vsub.f32 %v301, %v1006
  %v1008 = vand.u32 %v1007, 4294901760
  %v1009 = vsub.f32 %v1007, %v1008
  %v1010 = vand.u32 %v1009, 4294901760
  %1011 = vmatprep.subr.mxu0 %v1010
  %v1012 = vand.u32 %v298, 4294901760
  %v1013 = vsub.f32 %v298, %v1012
  %v1014 = vand.u32 %v1013, 4294901760
  %v1015 = vsub.f32 %v1013, %v1014
  %v1016 = vand.u32 %v1015, 4294901760
  %1017 = vmatpush1.msra.mxu0 %v1016
  %1018 = vmatprep.subr.mxu0 0.0
  %1019 = vmatpush1.msra.mxu0 0.0
  %1020 = vmatprep.subr.mxu0 0.0
  %1021 = vmatpush1.msra.mxu0 0.0
  %1022 = vmatprep.subr.mxu0 0.0
  %1023 = vmatpush1.msra.mxu0 0.0
  %1024 = vmatprep.subr.mxu0 0.0
  %1025 = vmatpush1.msra.mxu0 0.0
  %1026 = vmatprep.subr.mxu0 0.0
  %1027 = vmatpush1.msra.mxu0 0.0
  %1028 = vmatprep.subr.mxu0 0.0
  %1029 = vmatpush1.msra.mxu0 0.0
  %1030 = vmatprep.subr.mxu0 0.0
  %1031 = vmatpush1.msra.mxu0 0.0
  %1032 = vmatprep.subr.mxu0 0.0
  %1033 = vmatpush1.msra.mxu0 0.0
  %1034 = vmatprep.subr.mxu0 0.0
  %1035 = vmatpush1.msra.mxu0 0.0
  %1036 = vmatprep.subr.mxu0 0.0
  %1037 = vmatpush1.msra.mxu0 0.0
  %1038 = vmatprep.subr.mxu0 0.0
  %1039 = vmatpush1.msra.mxu0 0.0
  %1040 = vmatprep.subr.mxu0 0.0
  %1041 = vmatpush1.msra.mxu0 0.0
  %1042 = vmatprep.subr.mxu0 0.0
  %1043 = vmatpush1.msra.mxu0 0.0
  %1044 = vmatprep.subr.mxu0 0.0
  %1045 = vmatpush1.msra.mxu0 0.0
  %1046 = vmatprep.subr.mxu0 0.0
  %1047 = vmatpush1.msra.mxu0 0.0
  %1048 = vmatprep.subr.mxu0 0.0
  %1049 = vmatpush1.msra.mxu0 0.0
  %1050 = vmatprep.subr.mxu0 0.0
  %1051 = vmatpush1.msra.mxu0 0.0
  %1052 = vmatprep.subr.mxu0 0.0
  %1053 = vmatpush1.msra.mxu0 0.0
  %1054 = vmatprep.subr.mxu0 0.0
  %1055 = vmatpush1.msra.mxu0 0.0
  %1056 = vmatprep.subr.mxu0 0.0
  %1057 = vmatpush1.msra.mxu0 0.0
  %1058 = vmatprep.subr.mxu0 0.0
  %1059 = vmatpush1.msra.mxu0 0.0
  %1060 = vmatprep.subr.mxu0 0.0
  %1061 = vmatpush1.msra.mxu0 0.0
  %1062 = vmatprep.subr.mxu0 0.0
  %1063 = vmatpush1.msra.mxu0 0.0
  %1064 = vmatprep.subr.mxu0 0.0
  %1065 = vmatpush1.msra.mxu0 0.0
  %1066 = vmatprep.subr.mxu0 0.0
  %1067 = vmatpush1.msra.mxu0 0.0
  %1068 = vmatprep.subr.mxu0 0.0
  %1069 = vmatpush1.msra.mxu0 0.0
  %1070 = vmatprep.subr.mxu0 0.0
  %1071 = vmatpush1.msra.mxu0 0.0
  %1072 = vmatprep.mubr.f32.mxu0 0.0
  %v1073 = vand.u32 %v289, 4294901760
  %1074 = vmatmul.mubr.f32.gmra.mrb[0].mxu0 %v1073
  %v1075 = vpop.f32.mrb[0].mxu0
  %v1076 = vadd.f32 %v954, %v1075
  %v1077 = vpop.f32.mrb[0].mxu0
  %v1078 = vadd.f32 %v956, %v1077
  %1079 = vdwg.mxu0
  %v1080 = vand.u32 %v269, 4294901760
  %v1081 = vsub.f32 %v269, %v1080
  %1082 = vmatprep.subr.mxu0 %v1081
  %v1083 = vand.u32 %v268, 4294901760
  %v1084 = vsub.f32 %v268, %v1083
  %1085 = vmatpush1.msra.mxu0 %v1084
  %v1086 = vand.u32 %v273, 4294901760
  %v1087 = vsub.f32 %v273, %v1086
  %1088 = vmatprep.subr.mxu0 %v1087
  %v1089 = vand.u32 %v272, 4294901760
  %v1090 = vsub.f32 %v272, %v1089
  %1091 = vmatpush1.msra.mxu0 %v1090
  %v1092 = vand.u32 %v277, 4294901760
  %v1093 = vsub.f32 %v277, %v1092
  %1094 = vmatprep.subr.mxu0 %v1093
  %v1095 = vand.u32 %v276, 4294901760
  %v1096 = vsub.f32 %v276, %v1095
  %1097 = vmatpush1.msra.mxu0 %v1096
  %v1098 = vand.u32 %v281, 4294901760
  %v1099 = vsub.f32 %v281, %v1098
  %1100 = vmatprep.subr.mxu0 %v1099
  %v1101 = vand.u32 %v280, 4294901760
  %v1102 = vsub.f32 %v280, %v1101
  %1103 = vmatpush1.msra.mxu0 %v1102
  %v1104 = vand.u32 %v301, 4294901760
  %v1105 = vsub.f32 %v301, %v1104
  %1106 = vmatprep.subr.mxu0 %v1105
  %v1107 = vand.u32 %v298, 4294901760
  %v1108 = vsub.f32 %v298, %v1107
  %1109 = vmatpush1.msra.mxu0 %v1108
  %1110 = vmatprep.subr.mxu0 0.0
  %1111 = vmatpush1.msra.mxu0 0.0
  %1112 = vmatprep.subr.mxu0 0.0
  %1113 = vmatpush1.msra.mxu0 0.0
  %1114 = vmatprep.subr.mxu0 0.0
  %1115 = vmatpush1.msra.mxu0 0.0
  %1116 = vmatprep.subr.mxu0 0.0
  %1117 = vmatpush1.msra.mxu0 0.0
  %1118 = vmatprep.subr.mxu0 0.0
  %1119 = vmatpush1.msra.mxu0 0.0
  %1120 = vmatprep.subr.mxu0 0.0
  %1121 = vmatpush1.msra.mxu0 0.0
  %1122 = vmatprep.subr.mxu0 0.0
  %1123 = vmatpush1.msra.mxu0 0.0
  %1124 = vmatprep.subr.mxu0 0.0
  %1125 = vmatpush1.msra.mxu0 0.0
  %1126 = vmatprep.subr.mxu0 0.0
  %1127 = vmatpush1.msra.mxu0 0.0
  %1128 = vmatprep.subr.mxu0 0.0
  %1129 = vmatpush1.msra.mxu0 0.0
  %1130 = vmatprep.subr.mxu0 0.0
  %1131 = vmatpush1.msra.mxu0 0.0
  %1132 = vmatprep.subr.mxu0 0.0
  %1133 = vmatpush1.msra.mxu0 0.0
  %1134 = vmatprep.subr.mxu0 0.0
  %1135 = vmatpush1.msra.mxu0 0.0
  %1136 = vmatprep.subr.mxu0 0.0
  %1137 = vmatpush1.msra.mxu0 0.0
  %1138 = vmatprep.subr.mxu0 0.0
  %1139 = vmatpush1.msra.mxu0 0.0
  %1140 = vmatprep.subr.mxu0 0.0
  %1141 = vmatpush1.msra.mxu0 0.0
  %1142 = vmatprep.subr.mxu0 0.0
  %1143 = vmatpush1.msra.mxu0 0.0
  %1144 = vmatprep.subr.mxu0 0.0
  %1145 = vmatpush1.msra.mxu0 0.0
  %1146 = vmatprep.subr.mxu0 0.0
  %1147 = vmatpush1.msra.mxu0 0.0
  %1148 = vmatprep.subr.mxu0 0.0
  %1149 = vmatpush1.msra.mxu0 0.0
  %1150 = vmatprep.subr.mxu0 0.0
  %1151 = vmatpush1.msra.mxu0 0.0
  %1152 = vmatprep.subr.mxu0 0.0
  %1153 = vmatpush1.msra.mxu0 0.0
  %1154 = vmatprep.subr.mxu0 0.0
  %1155 = vmatpush1.msra.mxu0 0.0
  %1156 = vmatprep.subr.mxu0 0.0
  %1157 = vmatpush1.msra.mxu0 0.0
  %1158 = vmatprep.subr.mxu0 0.0
  %1159 = vmatpush1.msra.mxu0 0.0
  %1160 = vmatprep.subr.mxu0 0.0
  %1161 = vmatpush1.msra.mxu0 0.0
  %1162 = vmatprep.subr.mxu0 0.0
  %1163 = vmatpush1.msra.mxu0 0.0
  %1164 = vmatprep.mubr.f32.mxu0 0.0
  %v1165 = vand.u32 %v289, 4294901760
  %v1166 = vsub.f32 %v289, %v1165
  %1167 = vmatmul.mubr.f32.gmra.mrb[0].mxu0 %v1166
  %v1168 = vpop.f32.mrb[0].mxu0
  %v1169 = vadd.f32 %v1076, %v1168
  %v1170 = vpop.f32.mrb[0].mxu0
  %v1171 = vadd.f32 %v1078, %v1170
  %1172 = vdwg.mxu0
  %v1173 = vand.u32 %v269, 4294901760
  %1174 = vmatprep.subr.mxu0 %v1173
  %v1175 = vand.u32 %v268, 4294901760
  %1176 = vmatpush1.msra.mxu0 %v1175
  %v1177 = vand.u32 %v273, 4294901760
  %1178 = vmatprep.subr.mxu0 %v1177
  %v1179 = vand.u32 %v272, 4294901760
  %1180 = vmatpush1.msra.mxu0 %v1179
  %v1181 = vand.u32 %v277, 4294901760
  %1182 = vmatprep.subr.mxu0 %v1181
  %v1183 = vand.u32 %v276, 4294901760
  %1184 = vmatpush1.msra.mxu0 %v1183
  %v1185 = vand.u32 %v281, 4294901760
  %1186 = vmatprep.subr.mxu0 %v1185
  %v1187 = vand.u32 %v280, 4294901760
  %1188 = vmatpush1.msra.mxu0 %v1187
  %v1189 = vand.u32 %v301, 4294901760
  %1190 = vmatprep.subr.mxu0 %v1189
  %v1191 = vand.u32 %v298, 4294901760
  %1192 = vmatpush1.msra.mxu0 %v1191
  %1193 = vmatprep.subr.mxu0 0.0
  %1194 = vmatpush1.msra.mxu0 0.0
  %1195 = vmatprep.subr.mxu0 0.0
  %1196 = vmatpush1.msra.mxu0 0.0
  %1197 = vmatprep.subr.mxu0 0.0
  %1198 = vmatpush1.msra.mxu0 0.0
  %1199 = vmatprep.subr.mxu0 0.0
  %1200 = vmatpush1.msra.mxu0 0.0
  %1201 = vmatprep.subr.mxu0 0.0
  %1202 = vmatpush1.msra.mxu0 0.0
  %1203 = vmatprep.subr.mxu0 0.0
  %1204 = vmatpush1.msra.mxu0 0.0
  %1205 = vmatprep.subr.mxu0 0.0
  %1206 = vmatpush1.msra.mxu0 0.0
  %1207 = vmatprep.subr.mxu0 0.0
  %1208 = vmatpush1.msra.mxu0 0.0
  %1209 = vmatprep.subr.mxu0 0.0
  %1210 = vmatpush1.msra.mxu0 0.0
  %1211 = vmatprep.subr.mxu0 0.0
  %1212 = vmatpush1.msra.mxu0 0.0
  %1213 = vmatprep.subr.mxu0 0.0
  %1214 = vmatpush1.msra.mxu0 0.0
  %1215 = vmatprep.subr.mxu0 0.0
  %1216 = vmatpush1.msra.mxu0 0.0
  %1217 = vmatprep.subr.mxu0 0.0
  %1218 = vmatpush1.msra.mxu0 0.0
  %1219 = vmatprep.subr.mxu0 0.0
  %1220 = vmatpush1.msra.mxu0 0.0
  %1221 = vmatprep.subr.mxu0 0.0
  %1222 = vmatpush1.msra.mxu0 0.0
  %1223 = vmatprep.subr.mxu0 0.0
  %1224 = vmatpush1.msra.mxu0 0.0
  %1225 = vmatprep.subr.mxu0 0.0
  %1226 = vmatpush1.msra.mxu0 0.0
  %1227 = vmatprep.subr.mxu0 0.0
  %1228 = vmatpush1.msra.mxu0 0.0
  %1229 = vmatprep.subr.mxu0 0.0
  %1230 = vmatpush1.msra.mxu0 0.0
  %1231 = vmatprep.subr.mxu0 0.0
  %1232 = vmatpush1.msra.mxu0 0.0
  %1233 = vmatprep.subr.mxu0 0.0
  %1234 = vmatpush1.msra.mxu0 0.0
  %1235 = vmatprep.subr.mxu0 0.0
  %1236 = vmatpush1.msra.mxu0 0.0
  %1237 = vmatprep.subr.mxu0 0.0
  %1238 = vmatpush1.msra.mxu0 0.0
  %1239 = vmatprep.subr.mxu0 0.0
  %1240 = vmatpush1.msra.mxu0 0.0
  %1241 = vmatprep.subr.mxu0 0.0
  %1242 = vmatpush1.msra.mxu0 0.0
  %1243 = vmatprep.subr.mxu0 0.0
  %1244 = vmatpush1.msra.mxu0 0.0
  %1245 = vmatprep.subr.mxu0 0.0
  %1246 = vmatpush1.msra.mxu0 0.0
  %1247 = vmatprep.mubr.f32.mxu0 0.0
  %v1248 = vand.u32 %v289, 4294901760
  %v1249 = vsub.f32 %v289, %v1248
  %v1250 = vand.u32 %v1249, 4294901760
  %1251 = vmatmul.mubr.f32.gmra.mrb[0].mxu0 %v1250
  %v1252 = vpop.f32.mrb[0].mxu0
  %v1253 = vadd.f32 %v1169, %v1252
  %v1254 = vpop.f32.mrb[0].mxu0
  %v1255 = vadd.f32 %v1171, %v1254
  %1256 = vdwg.mxu0
  %v1257 = vand.u32 %v269, 4294901760
  %v1258 = vsub.f32 %v269, %v1257
  %v1259 = vand.u32 %v1258, 4294901760
  %1260 = vmatprep.subr.mxu0 %v1259
  %v1261 = vand.u32 %v268, 4294901760
  %v1262 = vsub.f32 %v268, %v1261
  %v1263 = vand.u32 %v1262, 4294901760
  %1264 = vmatpush1.msra.mxu0 %v1263
  %v1265 = vand.u32 %v273, 4294901760
  %v1266 = vsub.f32 %v273, %v1265
  %v1267 = vand.u32 %v1266, 4294901760
  %1268 = vmatprep.subr.mxu0 %v1267
  %v1269 = vand.u32 %v272, 4294901760
  %v1270 = vsub.f32 %v272, %v1269
  %v1271 = vand.u32 %v1270, 4294901760
  %1272 = vmatpush1.msra.mxu0 %v1271
  %v1273 = vand.u32 %v277, 4294901760
  %v1274 = vsub.f32 %v277, %v1273
  %v1275 = vand.u32 %v1274, 4294901760
  %1276 = vmatprep.subr.mxu0 %v1275
  %v1277 = vand.u32 %v276, 4294901760
  %v1278 = vsub.f32 %v276, %v1277
  %v1279 = vand.u32 %v1278, 4294901760
  %1280 = vmatpush1.msra.mxu0 %v1279
  %v1281 = vand.u32 %v281, 4294901760
  %v1282 = vsub.f32 %v281, %v1281
  %v1283 = vand.u32 %v1282, 4294901760
  %1284 = vmatprep.subr.mxu0 %v1283
  %v1285 = vand.u32 %v280, 4294901760
  %v1286 = vsub.f32 %v280, %v1285
  %v1287 = vand.u32 %v1286, 4294901760
  %1288 = vmatpush1.msra.mxu0 %v1287
  %v1289 = vand.u32 %v301, 4294901760
  %v1290 = vsub.f32 %v301, %v1289
  %v1291 = vand.u32 %v1290, 4294901760
  %1292 = vmatprep.subr.mxu0 %v1291
  %v1293 = vand.u32 %v298, 4294901760
  %v1294 = vsub.f32 %v298, %v1293
  %v1295 = vand.u32 %v1294, 4294901760
  %1296 = vmatpush1.msra.mxu0 %v1295
  %1297 = vmatprep.subr.mxu0 0.0
  %1298 = vmatpush1.msra.mxu0 0.0
  %1299 = vmatprep.subr.mxu0 0.0
  %1300 = vmatpush1.msra.mxu0 0.0
  %1301 = vmatprep.subr.mxu0 0.0
  %1302 = vmatpush1.msra.mxu0 0.0
  %1303 = vmatprep.subr.mxu0 0.0
  %1304 = vmatpush1.msra.mxu0 0.0
  %1305 = vmatprep.subr.mxu0 0.0
  %1306 = vmatpush1.msra.mxu0 0.0
  %1307 = vmatprep.subr.mxu0 0.0
  %1308 = vmatpush1.msra.mxu0 0.0
  %1309 = vmatprep.subr.mxu0 0.0
  %1310 = vmatpush1.msra.mxu0 0.0
  %1311 = vmatprep.subr.mxu0 0.0
  %1312 = vmatpush1.msra.mxu0 0.0
  %1313 = vmatprep.subr.mxu0 0.0
  %1314 = vmatpush1.msra.mxu0 0.0
  %1315 = vmatprep.subr.mxu0 0.0
  %1316 = vmatpush1.msra.mxu0 0.0
  %1317 = vmatprep.subr.mxu0 0.0
  %1318 = vmatpush1.msra.mxu0 0.0
  %1319 = vmatprep.subr.mxu0 0.0
  %1320 = vmatpush1.msra.mxu0 0.0
  %1321 = vmatprep.subr.mxu0 0.0
  %1322 = vmatpush1.msra.mxu0 0.0
  %1323 = vmatprep.subr.mxu0 0.0
  %1324 = vmatpush1.msra.mxu0 0.0
  %1325 = vmatprep.subr.mxu0 0.0
  %1326 = vmatpush1.msra.mxu0 0.0
  %1327 = vmatprep.subr.mxu0 0.0
  %1328 = vmatpush1.msra.mxu0 0.0
  %1329 = vmatprep.subr.mxu0 0.0
  %1330 = vmatpush1.msra.mxu0 0.0
  %1331 = vmatprep.subr.mxu0 0.0
  %1332 = vmatpush1.msra.mxu0 0.0
  %1333 = vmatprep.subr.mxu0 0.0
  %1334 = vmatpush1.msra.mxu0 0.0
  %1335 = vmatprep.subr.mxu0 0.0
  %1336 = vmatpush1.msra.mxu0 0.0
  %1337 = vmatprep.subr.mxu0 0.0
  %1338 = vmatpush1.msra.mxu0 0.0
  %1339 = vmatprep.subr.mxu0 0.0
  %1340 = vmatpush1.msra.mxu0 0.0
  %1341 = vmatprep.subr.mxu0 0.0
  %1342 = vmatpush1.msra.mxu0 0.0
  %1343 = vmatprep.subr.mxu0 0.0
  %1344 = vmatpush1.msra.mxu0 0.0
  %1345 = vmatprep.subr.mxu0 0.0
  %1346 = vmatpush1.msra.mxu0 0.0
  %1347 = vmatprep.subr.mxu0 0.0
  %1348 = vmatpush1.msra.mxu0 0.0
  %1349 = vmatprep.subr.mxu0 0.0
  %1350 = vmatpush1.msra.mxu0 0.0
  %1351 = vmatprep.mubr.f32.mxu0 0.0
  %v1352 = vand.u32 %v289, 4294901760
  %1353 = vmatmul.mubr.f32.gmra.mrb[0].mxu0 %v1352
  %v1354 = vpop.f32.mrb[0].mxu0
  %v1355 = vadd.f32 %v1253, %v1354
  %v1356 = vpop.f32.mrb[0].mxu0
  %v1357 = vadd.f32 %v1255, %v1356
  %1358 = vdwg.mxu0
  %v1359 = vand.u32 %v269, 4294901760
  %1360 = vmatprep.subr.mxu0 %v1359
  %v1361 = vand.u32 %v268, 4294901760
  %1362 = vmatpush1.msra.mxu0 %v1361
  %v1363 = vand.u32 %v273, 4294901760
  %1364 = vmatprep.subr.mxu0 %v1363
  %v1365 = vand.u32 %v272, 4294901760
  %1366 = vmatpush1.msra.mxu0 %v1365
  %v1367 = vand.u32 %v277, 4294901760
  %1368 = vmatprep.subr.mxu0 %v1367
  %v1369 = vand.u32 %v276, 4294901760
  %1370 = vmatpush1.msra.mxu0 %v1369
  %v1371 = vand.u32 %v281, 4294901760
  %1372 = vmatprep.subr.mxu0 %v1371
  %v1373 = vand.u32 %v280, 4294901760
  %1374 = vmatpush1.msra.mxu0 %v1373
  %v1375 = vand.u32 %v301, 4294901760
  %1376 = vmatprep.subr.mxu0 %v1375
  %v1377 = vand.u32 %v298, 4294901760
  %1378 = vmatpush1.msra.mxu0 %v1377
  %1379 = vmatprep.subr.mxu0 0.0
  %1380 = vmatpush1.msra.mxu0 0.0
  %1381 = vmatprep.subr.mxu0 0.0
  %1382 = vmatpush1.msra.mxu0 0.0
  %1383 = vmatprep.subr.mxu0 0.0
  %1384 = vmatpush1.msra.mxu0 0.0
  %1385 = vmatprep.subr.mxu0 0.0
  %1386 = vmatpush1.msra.mxu0 0.0
  %1387 = vmatprep.subr.mxu0 0.0
  %1388 = vmatpush1.msra.mxu0 0.0
  %1389 = vmatprep.subr.mxu0 0.0
  %1390 = vmatpush1.msra.mxu0 0.0
  %1391 = vmatprep.subr.mxu0 0.0
  %1392 = vmatpush1.msra.mxu0 0.0
  %1393 = vmatprep.subr.mxu0 0.0
  %1394 = vmatpush1.msra.mxu0 0.0
  %1395 = vmatprep.subr.mxu0 0.0
  %1396 = vmatpush1.msra.mxu0 0.0
  %1397 = vmatprep.subr.mxu0 0.0
  %1398 = vmatpush1.msra.mxu0 0.0
  %1399 = vmatprep.subr.mxu0 0.0
  %1400 = vmatpush1.msra.mxu0 0.0
  %1401 = vmatprep.subr.mxu0 0.0
  %1402 = vmatpush1.msra.mxu0 0.0
  %1403 = vmatprep.subr.mxu0 0.0
  %1404 = vmatpush1.msra.mxu0 0.0
  %1405 = vmatprep.subr.mxu0 0.0
  %1406 = vmatpush1.msra.mxu0 0.0
  %1407 = vmatprep.subr.mxu0 0.0
  %1408 = vmatpush1.msra.mxu0 0.0
  %1409 = vmatprep.subr.mxu0 0.0
  %1410 = vmatpush1.msra.mxu0 0.0
  %1411 = vmatprep.subr.mxu0 0.0
  %1412 = vmatpush1.msra.mxu0 0.0
  %1413 = vmatprep.subr.mxu0 0.0
  %1414 = vmatpush1.msra.mxu0 0.0
  %1415 = vmatprep.subr.mxu0 0.0
  %1416 = vmatpush1.msra.mxu0 0.0
  %1417 = vmatprep.subr.mxu0 0.0
  %1418 = vmatpush1.msra.mxu0 0.0
  %1419 = vmatprep.subr.mxu0 0.0
  %1420 = vmatpush1.msra.mxu0 0.0
  %1421 = vmatprep.subr.mxu0 0.0
  %1422 = vmatpush1.msra.mxu0 0.0
  %1423 = vmatprep.subr.mxu0 0.0
  %1424 = vmatpush1.msra.mxu0 0.0
  %1425 = vmatprep.subr.mxu0 0.0
  %1426 = vmatpush1.msra.mxu0 0.0
  %1427 = vmatprep.subr.mxu0 0.0
  %1428 = vmatpush1.msra.mxu0 0.0
  %1429 = vmatprep.subr.mxu0 0.0
  %1430 = vmatpush1.msra.mxu0 0.0
  %1431 = vmatprep.subr.mxu0 0.0
  %1432 = vmatpush1.msra.mxu0 0.0
  %1433 = vmatprep.mubr.f32.mxu0 0.0
  %v1434 = vand.u32 %v289, 4294901760
  %1435 = vmatmul.mubr.f32.gmra.mrb[0].mxu0 %v1434
  %v1436 = vpop.f32.mrb[0].mxu0
  %v1437 = vadd.f32 %v1355, %v1436
  %v1438 = vpop.f32.mrb[0].mxu0
  %v1439 = vadd.f32 %v1357, %v1438
  %1440 = vdwg.mxu0
  %v1441 = vxor.u32 %v868, 2147483648
  %v1442 = vxor.u32 %v870, 2147483648
  %v1443 = vxor.u32 %v1437, 2147483648
  %v1444 = vxor.u32 %v1439, 2147483648
  %v1445 = vmul.f32 %v1441, 1.442695
  %v1446 = vpow.pop %v1445
  %v1447 = vmul.f32 %v1442, 1.442695
  %v1448 = vpow.pop %v1447
  %v1449 = vmul.f32 %v1443, 1.442695
  %v1450 = vpow.pop %v1449
  %v1451 = vmul.f32 %v1444, 1.442695
  %v1452 = vpow.pop %v1451
  %v1453 = vadd.f32 %v1446, 1.0
  %v1454 = vadd.f32 %v1448, 1.0
  %v1455 = vadd.f32 %v1450, 1.0
  %v1456 = vadd.f32 %v1452, 1.0
  %v1457 = vrcp.pop %v1453
  %v1458 = vmul.f32 1.0, %v1457
  %v1459 = vrcp.pop %v1454
  %v1460 = vmul.f32 1.0, %v1459
  %v1461 = vrcp.pop %v1455
  %v1462 = vmul.f32 1.0, %v1461
  %v1463 = vrcp.pop %v1456
  %v1464 = vmul.f32 1.0, %v1463
  %v1465 = vmul.f32 %v868, %v1458
  %v1466 = vmul.f32 %v870, %v1460
  %v1467 = vmul.f32 %v1437, %v1462
  %v1468 = vmul.f32 %v1439, %v1464
  %s1469 = scalar_lea.vmem %s1, 4
  %v1470 = vld [vmem:[%s1469] sm:$0xf]
  %s1471 = scalar_lea.vmem %s2, 4
  %v1472 = vld [vmem:[%s1471] sm:$0xf]
  %1473 = vrot.lane.b32.xlu0 %v1465, 1
  %v1474 = vpop.permute.xlu0 %1473
  %1475 = vrot.lane.b32.xlu0 %v1466, 1
  %v1476 = vpop.permute.xlu0 %1475
  %1477 = vrot.lane.b32.xlu0 %v1467, 1
  %v1478 = vpop.permute.xlu0 %1477
  %1479 = vrot.lane.b32.xlu0 %v1468, 1
  %v1480 = vpop.permute.xlu0 %1479
  %v1481 = vsel %vm61, %v1478, %v1480
  %v1482 = vsel %vm61, %v1476, %v1478
  %v1483 = vsel %vm61, %v1474, %v1476
  %v1484 = vsel %vm61, %v1480, %v1474
  %v1485 = vsel %vm70, %v1484, 0.0
  %v1486 = vsel %vm71, %v1483, 0.0
  %v1487 = vsel %vm72, %v1482, 0.0
  %v1488 = vsel %vm73, %v1481, 0.0
  %1489 = vrot.lane.b32.xlu0 %v1465, 127
  %v1490 = vpop.permute.xlu0 %1489
  %1491 = vrot.lane.b32.xlu0 %v1466, 127
  %v1492 = vpop.permute.xlu0 %1491
  %1493 = vrot.lane.b32.xlu0 %v1467, 127
  %v1494 = vpop.permute.xlu0 %1493
  %1495 = vrot.lane.b32.xlu0 %v1468, 127
  %v1496 = vpop.permute.xlu0 %1495
  %v1497 = vsel %vm86, %v1494, %v1496
  %v1498 = vsel %vm86, %v1492, %v1494
  %v1499 = vsel %vm86, %v1490, %v1492
  %v1500 = vsel %vm86, %v1496, %v1490
  %v1501 = vsel %vm95, %v1499, 0.0
  %v1502 = vsel %vm96, %v1498, 0.0
  %v1503 = vsel %vm97, %v1497, 0.0
  %v1504 = vsel %vm98, %v1500, 0.0
  %1505 = vrot.lane.b32.xlu0 %v1485, 16
  %v1506 = vpop.permute.xlu0 %1505
  %1507 = vrot.lane.b32.xlu0 %v1486, 16
  %v1508 = vpop.permute.xlu0 %1507
  %1509 = vrot.lane.b32.xlu0 %v1487, 16
  %v1510 = vpop.permute.xlu0 %1509
  %1511 = vrot.lane.b32.xlu0 %v1488, 16
  %v1512 = vpop.permute.xlu0 %1511
  %v1513 = vsel %vm111, %v1510, %v1512
  %v1514 = vsel %vm111, %v1508, %v1510
  %v1515 = vsel %vm111, %v1506, %v1508
  %v1516 = vsel %vm111, %v1512, %v1506
  %v1517 = vsel %vm120, %v1516, 0.0
  %v1518 = vsel %vm121, %v1515, 0.0
  %v1519 = vsel %vm122, %v1514, 0.0
  %v1520 = vsel %vm123, %v1513, 0.0
  %1521 = vrot.lane.b32.xlu0 %v1465, 16
  %v1522 = vpop.permute.xlu0 %1521
  %1523 = vrot.lane.b32.xlu0 %v1466, 16
  %v1524 = vpop.permute.xlu0 %1523
  %1525 = vrot.lane.b32.xlu0 %v1467, 16
  %v1526 = vpop.permute.xlu0 %1525
  %1527 = vrot.lane.b32.xlu0 %v1468, 16
  %v1528 = vpop.permute.xlu0 %1527
  %v1529 = vsel %vm111, %v1526, %v1528
  %v1530 = vsel %vm111, %v1524, %v1526
  %v1531 = vsel %vm111, %v1522, %v1524
  %v1532 = vsel %vm111, %v1528, %v1522
  %v1533 = vsel %vm120, %v1532, 0.0
  %v1534 = vsel %vm121, %v1531, 0.0
  %v1535 = vsel %vm122, %v1530, 0.0
  %v1536 = vsel %vm123, %v1529, 0.0
  %1537 = vrot.lane.b32.xlu0 %v1501, 16
  %v1538 = vpop.permute.xlu0 %1537
  %1539 = vrot.lane.b32.xlu0 %v1502, 16
  %v1540 = vpop.permute.xlu0 %1539
  %1541 = vrot.lane.b32.xlu0 %v1503, 16
  %v1542 = vpop.permute.xlu0 %1541
  %1543 = vrot.lane.b32.xlu0 %v1504, 16
  %v1544 = vpop.permute.xlu0 %1543
  %v1545 = vsel %vm111, %v1542, %v1544
  %v1546 = vsel %vm111, %v1540, %v1542
  %v1547 = vsel %vm111, %v1538, %v1540
  %v1548 = vsel %vm111, %v1544, %v1538
  %v1549 = vsel %vm120, %v1548, 0.0
  %v1550 = vsel %vm121, %v1547, 0.0
  %v1551 = vsel %vm122, %v1546, 0.0
  %v1552 = vsel %vm123, %v1545, 0.0
  %1553 = vrot.lane.b32.xlu0 %v1485, 112
  %v1554 = vpop.permute.xlu0 %1553
  %1555 = vrot.lane.b32.xlu0 %v1486, 112
  %v1556 = vpop.permute.xlu0 %1555
  %1557 = vrot.lane.b32.xlu0 %v1487, 112
  %v1558 = vpop.permute.xlu0 %1557
  %1559 = vrot.lane.b32.xlu0 %v1488, 112
  %v1560 = vpop.permute.xlu0 %1559
  %v1561 = vsel %vm168, %v1558, %v1560
  %v1562 = vsel %vm168, %v1556, %v1558
  %v1563 = vsel %vm168, %v1554, %v1556
  %v1564 = vsel %vm168, %v1560, %v1554
  %v1565 = vsel %vm177, %v1563, 0.0
  %v1566 = vsel %vm178, %v1562, 0.0
  %v1567 = vsel %vm179, %v1561, 0.0
  %v1568 = vsel %vm180, %v1564, 0.0
  %1569 = vrot.lane.b32.xlu0 %v1465, 112
  %v1570 = vpop.permute.xlu0 %1569
  %1571 = vrot.lane.b32.xlu0 %v1466, 112
  %v1572 = vpop.permute.xlu0 %1571
  %1573 = vrot.lane.b32.xlu0 %v1467, 112
  %v1574 = vpop.permute.xlu0 %1573
  %1575 = vrot.lane.b32.xlu0 %v1468, 112
  %v1576 = vpop.permute.xlu0 %1575
  %v1577 = vsel %vm168, %v1574, %v1576
  %v1578 = vsel %vm168, %v1572, %v1574
  %v1579 = vsel %vm168, %v1570, %v1572
  %v1580 = vsel %vm168, %v1576, %v1570
  %v1581 = vsel %vm177, %v1579, 0.0
  %v1582 = vsel %vm178, %v1578, 0.0
  %v1583 = vsel %vm179, %v1577, 0.0
  %v1584 = vsel %vm180, %v1580, 0.0
  %1585 = vrot.lane.b32.xlu0 %v1501, 112
  %v1586 = vpop.permute.xlu0 %1585
  %1587 = vrot.lane.b32.xlu0 %v1502, 112
  %v1588 = vpop.permute.xlu0 %1587
  %1589 = vrot.lane.b32.xlu0 %v1503, 112
  %v1590 = vpop.permute.xlu0 %1589
  %1591 = vrot.lane.b32.xlu0 %v1504, 112
  %v1592 = vpop.permute.xlu0 %1591
  %v1593 = vsel %vm168, %v1590, %v1592
  %v1594 = vsel %vm168, %v1588, %v1590
  %v1595 = vsel %vm168, %v1586, %v1588
  %v1596 = vsel %vm168, %v1592, %v1586
  %v1597 = vsel %vm177, %v1595, 0.0
  %v1598 = vsel %vm178, %v1594, 0.0
  %v1599 = vsel %vm179, %v1593, 0.0
  %v1600 = vsel %vm180, %v1596, 0.0
  %v1605 = vrot.slane %v1533, 4
  %v1606 = vrot.slane %v1534, 4
  %v1607 = vrot.slane %v1535, 4
  %v1608 = vrot.slane %v1536, 4
  %v1617 = vrot.slane %v1485, 4
  %v1618 = vrot.slane %v1486, 4
  %v1619 = vrot.slane %v1487, 4
  %v1620 = vrot.slane %v1488, 4
  %v1629 = vrot.slane %v1501, 4
  %v1630 = vrot.slane %v1502, 4
  %v1631 = vrot.slane %v1503, 4
  %v1632 = vrot.slane %v1504, 4
  %v1641 = vrot.slane %v1581, 4
  %v1642 = vrot.slane %v1582, 4
  %v1643 = vrot.slane %v1583, 4
  %v1644 = vrot.slane %v1584, 4
  %v1649 = vsel %vm265, %v1517, %v1605
  %v1650 = vsel %vm265, %v1518, %v1606
  %v1651 = vsel %vm265, %v1519, %v1607
  %v1652 = vsel %vm265, %v1520, %v1608
  %v1653 = vsel %vm265, %v1549, %v1617
  %v1654 = vsel %vm265, %v1550, %v1618
  %v1655 = vsel %vm265, %v1551, %v1619
  %v1656 = vsel %vm265, %v1552, %v1620
  %v1657 = vsel %vm265, %v1465, %v1629
  %v1658 = vsel %vm265, %v1466, %v1630
  %v1659 = vsel %vm265, %v1467, %v1631
  %v1660 = vsel %vm265, %v1468, %v1632
  %v1661 = vsel %vm265, %v1565, %v1641
  %v1662 = vsel %vm265, %v1566, %v1642
  %v1663 = vsel %vm265, %v1567, %v1643
  %v1664 = vsel %vm265, %v1568, %v1644
  %1666 = vset.pattern.permute.xlu0 0
  %1667 = vperm.xlu0 %1666, %v1472
  %v1668 = vpop.permute.xlu0 %1667
  %v1671 = vsel %vm287, %v1470, 0
  %v1674 = vsel %vm265, %v1597, 0
  %v1677 = vsel %vm265, %v1598, 0
  %v1680 = vsel %vm265, %v1599, 0
  %v1683 = vsel %vm265, %v1600, 0
  %v1685 = vand.u32 %v1650, 4294901760
  %1686 = vmatprep.subr.mxu0 %v1685
  %v1687 = vand.u32 %v1649, 4294901760
  %1688 = vmatpush1.msra.mxu0 %v1687
  %v1689 = vand.u32 %v1654, 4294901760
  %1690 = vmatprep.subr.mxu0 %v1689
  %v1691 = vand.u32 %v1653, 4294901760
  %1692 = vmatpush1.msra.mxu0 %v1691
  %v1693 = vand.u32 %v1658, 4294901760
  %1694 = vmatprep.subr.mxu0 %v1693
  %v1695 = vand.u32 %v1657, 4294901760
  %1696 = vmatpush1.msra.mxu0 %v1695
  %v1697 = vand.u32 %v1662, 4294901760
  %1698 = vmatprep.subr.mxu0 %v1697
  %v1699 = vand.u32 %v1661, 4294901760
  %1700 = vmatpush1.msra.mxu0 %v1699
  %v1701 = vand.u32 %v1677, 4294901760
  %1702 = vmatprep.subr.mxu0 %v1701
  %v1703 = vand.u32 %v1674, 4294901760
  %1704 = vmatpush1.msra.mxu0 %v1703
  %1705 = vmatprep.subr.mxu0 0.0
  %1706 = vmatpush1.msra.mxu0 0.0
  %1707 = vmatprep.subr.mxu0 0.0
  %1708 = vmatpush1.msra.mxu0 0.0
  %1709 = vmatprep.subr.mxu0 0.0
  %1710 = vmatpush1.msra.mxu0 0.0
  %1711 = vmatprep.subr.mxu0 0.0
  %1712 = vmatpush1.msra.mxu0 0.0
  %1713 = vmatprep.subr.mxu0 0.0
  %1714 = vmatpush1.msra.mxu0 0.0
  %1715 = vmatprep.subr.mxu0 0.0
  %1716 = vmatpush1.msra.mxu0 0.0
  %1717 = vmatprep.subr.mxu0 0.0
  %1718 = vmatpush1.msra.mxu0 0.0
  %1719 = vmatprep.subr.mxu0 0.0
  %1720 = vmatpush1.msra.mxu0 0.0
  %1721 = vmatprep.subr.mxu0 0.0
  %1722 = vmatpush1.msra.mxu0 0.0
  %1723 = vmatprep.subr.mxu0 0.0
  %1724 = vmatpush1.msra.mxu0 0.0
  %1725 = vmatprep.subr.mxu0 0.0
  %1726 = vmatpush1.msra.mxu0 0.0
  %1727 = vmatprep.subr.mxu0 0.0
  %1728 = vmatpush1.msra.mxu0 0.0
  %1729 = vmatprep.subr.mxu0 0.0
  %1730 = vmatpush1.msra.mxu0 0.0
  %1731 = vmatprep.subr.mxu0 0.0
  %1732 = vmatpush1.msra.mxu0 0.0
  %1733 = vmatprep.subr.mxu0 0.0
  %1734 = vmatpush1.msra.mxu0 0.0
  %1735 = vmatprep.subr.mxu0 0.0
  %1736 = vmatpush1.msra.mxu0 0.0
  %1737 = vmatprep.subr.mxu0 0.0
  %1738 = vmatpush1.msra.mxu0 0.0
  %1739 = vmatprep.subr.mxu0 0.0
  %1740 = vmatpush1.msra.mxu0 0.0
  %1741 = vmatprep.subr.mxu0 0.0
  %1742 = vmatpush1.msra.mxu0 0.0
  %1743 = vmatprep.subr.mxu0 0.0
  %1744 = vmatpush1.msra.mxu0 0.0
  %1745 = vmatprep.subr.mxu0 0.0
  %1746 = vmatpush1.msra.mxu0 0.0
  %1747 = vmatprep.subr.mxu0 0.0
  %1748 = vmatpush1.msra.mxu0 0.0
  %1749 = vmatprep.subr.mxu0 0.0
  %1750 = vmatpush1.msra.mxu0 0.0
  %1751 = vmatprep.subr.mxu0 0.0
  %1752 = vmatpush1.msra.mxu0 0.0
  %1753 = vmatprep.subr.mxu0 0.0
  %1754 = vmatpush1.msra.mxu0 0.0
  %1755 = vmatprep.subr.mxu0 0.0
  %1756 = vmatpush1.msra.mxu0 0.0
  %1757 = vmatprep.subr.mxu0 0.0
  %1758 = vmatpush1.msra.mxu0 0.0
  %1759 = vmatprep.mubr.f32.mxu0 0.0
  %v1760 = vand.u32 %v1671, 4294901760
  %v1761 = vsub.f32 %v1671, %v1760
  %v1762 = vand.u32 %v1761, 4294901760
  %v1763 = vsub.f32 %v1761, %v1762
  %v1764 = vand.u32 %v1763, 4294901760
  %1765 = vmatmul.mubr.f32.gmra.mrb[0].mxu0 %v1764
  %v1766 = vpop.f32.mrb[0].mxu0
  %v1767 = vadd.f32 %v1668, %v1766
  %v1768 = vpop.f32.mrb[0].mxu0
  %v1769 = vadd.f32 %v1668, %v1768
  %1770 = vdwg.mxu0
  %v1771 = vand.u32 %v1650, 4294901760
  %v1772 = vsub.f32 %v1650, %v1771
  %v1773 = vand.u32 %v1772, 4294901760
  %v1774 = vsub.f32 %v1772, %v1773
  %v1775 = vand.u32 %v1774, 4294901760
  %1776 = vmatprep.subr.mxu0 %v1775
  %v1777 = vand.u32 %v1649, 4294901760
  %v1778 = vsub.f32 %v1649, %v1777
  %v1779 = vand.u32 %v1778, 4294901760
  %v1780 = vsub.f32 %v1778, %v1779
  %v1781 = vand.u32 %v1780, 4294901760
  %1782 = vmatpush1.msra.mxu0 %v1781
  %v1783 = vand.u32 %v1654, 4294901760
  %v1784 = vsub.f32 %v1654, %v1783
  %v1785 = vand.u32 %v1784, 4294901760
  %v1786 = vsub.f32 %v1784, %v1785
  %v1787 = vand.u32 %v1786, 4294901760
  %1788 = vmatprep.subr.mxu0 %v1787
  %v1789 = vand.u32 %v1653, 4294901760
  %v1790 = vsub.f32 %v1653, %v1789
  %v1791 = vand.u32 %v1790, 4294901760
  %v1792 = vsub.f32 %v1790, %v1791
  %v1793 = vand.u32 %v1792, 4294901760
  %1794 = vmatpush1.msra.mxu0 %v1793
  %v1795 = vand.u32 %v1658, 4294901760
  %v1796 = vsub.f32 %v1658, %v1795
  %v1797 = vand.u32 %v1796, 4294901760
  %v1798 = vsub.f32 %v1796, %v1797
  %v1799 = vand.u32 %v1798, 4294901760
  %1800 = vmatprep.subr.mxu0 %v1799
  %v1801 = vand.u32 %v1657, 4294901760
  %v1802 = vsub.f32 %v1657, %v1801
  %v1803 = vand.u32 %v1802, 4294901760
  %v1804 = vsub.f32 %v1802, %v1803
  %v1805 = vand.u32 %v1804, 4294901760
  %1806 = vmatpush1.msra.mxu0 %v1805
  %v1807 = vand.u32 %v1662, 4294901760
  %v1808 = vsub.f32 %v1662, %v1807
  %v1809 = vand.u32 %v1808, 4294901760
  %v1810 = vsub.f32 %v1808, %v1809
  %v1811 = vand.u32 %v1810, 4294901760
  %1812 = vmatprep.subr.mxu0 %v1811
  %v1813 = vand.u32 %v1661, 4294901760
  %v1814 = vsub.f32 %v1661, %v1813
  %v1815 = vand.u32 %v1814, 4294901760
  %v1816 = vsub.f32 %v1814, %v1815
  %v1817 = vand.u32 %v1816, 4294901760
  %1818 = vmatpush1.msra.mxu0 %v1817
  %v1819 = vand.u32 %v1677, 4294901760
  %v1820 = vsub.f32 %v1677, %v1819
  %v1821 = vand.u32 %v1820, 4294901760
  %v1822 = vsub.f32 %v1820, %v1821
  %v1823 = vand.u32 %v1822, 4294901760
  %1824 = vmatprep.subr.mxu0 %v1823
  %v1825 = vand.u32 %v1674, 4294901760
  %v1826 = vsub.f32 %v1674, %v1825
  %v1827 = vand.u32 %v1826, 4294901760
  %v1828 = vsub.f32 %v1826, %v1827
  %v1829 = vand.u32 %v1828, 4294901760
  %1830 = vmatpush1.msra.mxu0 %v1829
  %1831 = vmatprep.subr.mxu0 0.0
  %1832 = vmatpush1.msra.mxu0 0.0
  %1833 = vmatprep.subr.mxu0 0.0
  %1834 = vmatpush1.msra.mxu0 0.0
  %1835 = vmatprep.subr.mxu0 0.0
  %1836 = vmatpush1.msra.mxu0 0.0
  %1837 = vmatprep.subr.mxu0 0.0
  %1838 = vmatpush1.msra.mxu0 0.0
  %1839 = vmatprep.subr.mxu0 0.0
  %1840 = vmatpush1.msra.mxu0 0.0
  %1841 = vmatprep.subr.mxu0 0.0
  %1842 = vmatpush1.msra.mxu0 0.0
  %1843 = vmatprep.subr.mxu0 0.0
  %1844 = vmatpush1.msra.mxu0 0.0
  %1845 = vmatprep.subr.mxu0 0.0
  %1846 = vmatpush1.msra.mxu0 0.0
  %1847 = vmatprep.subr.mxu0 0.0
  %1848 = vmatpush1.msra.mxu0 0.0
  %1849 = vmatprep.subr.mxu0 0.0
  %1850 = vmatpush1.msra.mxu0 0.0
  %1851 = vmatprep.subr.mxu0 0.0
  %1852 = vmatpush1.msra.mxu0 0.0
  %1853 = vmatprep.subr.mxu0 0.0
  %1854 = vmatpush1.msra.mxu0 0.0
  %1855 = vmatprep.subr.mxu0 0.0
  %1856 = vmatpush1.msra.mxu0 0.0
  %1857 = vmatprep.subr.mxu0 0.0
  %1858 = vmatpush1.msra.mxu0 0.0
  %1859 = vmatprep.subr.mxu0 0.0
  %1860 = vmatpush1.msra.mxu0 0.0
  %1861 = vmatprep.subr.mxu0 0.0
  %1862 = vmatpush1.msra.mxu0 0.0
  %1863 = vmatprep.subr.mxu0 0.0
  %1864 = vmatpush1.msra.mxu0 0.0
  %1865 = vmatprep.subr.mxu0 0.0
  %1866 = vmatpush1.msra.mxu0 0.0
  %1867 = vmatprep.subr.mxu0 0.0
  %1868 = vmatpush1.msra.mxu0 0.0
  %1869 = vmatprep.subr.mxu0 0.0
  %1870 = vmatpush1.msra.mxu0 0.0
  %1871 = vmatprep.subr.mxu0 0.0
  %1872 = vmatpush1.msra.mxu0 0.0
  %1873 = vmatprep.subr.mxu0 0.0
  %1874 = vmatpush1.msra.mxu0 0.0
  %1875 = vmatprep.subr.mxu0 0.0
  %1876 = vmatpush1.msra.mxu0 0.0
  %1877 = vmatprep.subr.mxu0 0.0
  %1878 = vmatpush1.msra.mxu0 0.0
  %1879 = vmatprep.subr.mxu0 0.0
  %1880 = vmatpush1.msra.mxu0 0.0
  %1881 = vmatprep.subr.mxu0 0.0
  %1882 = vmatpush1.msra.mxu0 0.0
  %1883 = vmatprep.subr.mxu0 0.0
  %1884 = vmatpush1.msra.mxu0 0.0
  %1885 = vmatprep.mubr.f32.mxu0 0.0
  %v1886 = vand.u32 %v1671, 4294901760
  %1887 = vmatmul.mubr.f32.gmra.mrb[0].mxu0 %v1886
  %v1888 = vpop.f32.mrb[0].mxu0
  %v1889 = vadd.f32 %v1767, %v1888
  %v1890 = vpop.f32.mrb[0].mxu0
  %v1891 = vadd.f32 %v1769, %v1890
  %1892 = vdwg.mxu0
  %v1893 = vand.u32 %v1650, 4294901760
  %v1894 = vsub.f32 %v1650, %v1893
  %1895 = vmatprep.subr.mxu0 %v1894
  %v1896 = vand.u32 %v1649, 4294901760
  %v1897 = vsub.f32 %v1649, %v1896
  %1898 = vmatpush1.msra.mxu0 %v1897
  %v1899 = vand.u32 %v1654, 4294901760
  %v1900 = vsub.f32 %v1654, %v1899
  %1901 = vmatprep.subr.mxu0 %v1900
  %v1902 = vand.u32 %v1653, 4294901760
  %v1903 = vsub.f32 %v1653, %v1902
  %1904 = vmatpush1.msra.mxu0 %v1903
  %v1905 = vand.u32 %v1658, 4294901760
  %v1906 = vsub.f32 %v1658, %v1905
  %1907 = vmatprep.subr.mxu0 %v1906
  %v1908 = vand.u32 %v1657, 4294901760
  %v1909 = vsub.f32 %v1657, %v1908
  %1910 = vmatpush1.msra.mxu0 %v1909
  %v1911 = vand.u32 %v1662, 4294901760
  %v1912 = vsub.f32 %v1662, %v1911
  %1913 = vmatprep.subr.mxu0 %v1912
  %v1914 = vand.u32 %v1661, 4294901760
  %v1915 = vsub.f32 %v1661, %v1914
  %1916 = vmatpush1.msra.mxu0 %v1915
  %v1917 = vand.u32 %v1677, 4294901760
  %v1918 = vsub.f32 %v1677, %v1917
  %1919 = vmatprep.subr.mxu0 %v1918
  %v1920 = vand.u32 %v1674, 4294901760
  %v1921 = vsub.f32 %v1674, %v1920
  %1922 = vmatpush1.msra.mxu0 %v1921
  %1923 = vmatprep.subr.mxu0 0.0
  %1924 = vmatpush1.msra.mxu0 0.0
  %1925 = vmatprep.subr.mxu0 0.0
  %1926 = vmatpush1.msra.mxu0 0.0
  %1927 = vmatprep.subr.mxu0 0.0
  %1928 = vmatpush1.msra.mxu0 0.0
  %1929 = vmatprep.subr.mxu0 0.0
  %1930 = vmatpush1.msra.mxu0 0.0
  %1931 = vmatprep.subr.mxu0 0.0
  %1932 = vmatpush1.msra.mxu0 0.0
  %1933 = vmatprep.subr.mxu0 0.0
  %1934 = vmatpush1.msra.mxu0 0.0
  %1935 = vmatprep.subr.mxu0 0.0
  %1936 = vmatpush1.msra.mxu0 0.0
  %1937 = vmatprep.subr.mxu0 0.0
  %1938 = vmatpush1.msra.mxu0 0.0
  %1939 = vmatprep.subr.mxu0 0.0
  %1940 = vmatpush1.msra.mxu0 0.0
  %1941 = vmatprep.subr.mxu0 0.0
  %1942 = vmatpush1.msra.mxu0 0.0
  %1943 = vmatprep.subr.mxu0 0.0
  %1944 = vmatpush1.msra.mxu0 0.0
  %1945 = vmatprep.subr.mxu0 0.0
  %1946 = vmatpush1.msra.mxu0 0.0
  %1947 = vmatprep.subr.mxu0 0.0
  %1948 = vmatpush1.msra.mxu0 0.0
  %1949 = vmatprep.subr.mxu0 0.0
  %1950 = vmatpush1.msra.mxu0 0.0
  %1951 = vmatprep.subr.mxu0 0.0
  %1952 = vmatpush1.msra.mxu0 0.0
  %1953 = vmatprep.subr.mxu0 0.0
  %1954 = vmatpush1.msra.mxu0 0.0
  %1955 = vmatprep.subr.mxu0 0.0
  %1956 = vmatpush1.msra.mxu0 0.0
  %1957 = vmatprep.subr.mxu0 0.0
  %1958 = vmatpush1.msra.mxu0 0.0
  %1959 = vmatprep.subr.mxu0 0.0
  %1960 = vmatpush1.msra.mxu0 0.0
  %1961 = vmatprep.subr.mxu0 0.0
  %1962 = vmatpush1.msra.mxu0 0.0
  %1963 = vmatprep.subr.mxu0 0.0
  %1964 = vmatpush1.msra.mxu0 0.0
  %1965 = vmatprep.subr.mxu0 0.0
  %1966 = vmatpush1.msra.mxu0 0.0
  %1967 = vmatprep.subr.mxu0 0.0
  %1968 = vmatpush1.msra.mxu0 0.0
  %1969 = vmatprep.subr.mxu0 0.0
  %1970 = vmatpush1.msra.mxu0 0.0
  %1971 = vmatprep.subr.mxu0 0.0
  %1972 = vmatpush1.msra.mxu0 0.0
  %1973 = vmatprep.subr.mxu0 0.0
  %1974 = vmatpush1.msra.mxu0 0.0
  %1975 = vmatprep.subr.mxu0 0.0
  %1976 = vmatpush1.msra.mxu0 0.0
  %1977 = vmatprep.mubr.f32.mxu0 0.0
  %v1978 = vand.u32 %v1671, 4294901760
  %v1979 = vsub.f32 %v1671, %v1978
  %1980 = vmatmul.mubr.f32.gmra.mrb[0].mxu0 %v1979
  %v1981 = vpop.f32.mrb[0].mxu0
  %v1982 = vadd.f32 %v1889, %v1981
  %v1983 = vpop.f32.mrb[0].mxu0
  %v1984 = vadd.f32 %v1891, %v1983
  %1985 = vdwg.mxu0
  %v1986 = vand.u32 %v1650, 4294901760
  %1987 = vmatprep.subr.mxu0 %v1986
  %v1988 = vand.u32 %v1649, 4294901760
  %1989 = vmatpush1.msra.mxu0 %v1988
  %v1990 = vand.u32 %v1654, 4294901760
  %1991 = vmatprep.subr.mxu0 %v1990
  %v1992 = vand.u32 %v1653, 4294901760
  %1993 = vmatpush1.msra.mxu0 %v1992
  %v1994 = vand.u32 %v1658, 4294901760
  %1995 = vmatprep.subr.mxu0 %v1994
  %v1996 = vand.u32 %v1657, 4294901760
  %1997 = vmatpush1.msra.mxu0 %v1996
  %v1998 = vand.u32 %v1662, 4294901760
  %1999 = vmatprep.subr.mxu0 %v1998
  %v2000 = vand.u32 %v1661, 4294901760
  %2001 = vmatpush1.msra.mxu0 %v2000
  %v2002 = vand.u32 %v1677, 4294901760
  %2003 = vmatprep.subr.mxu0 %v2002
  %v2004 = vand.u32 %v1674, 4294901760
  %2005 = vmatpush1.msra.mxu0 %v2004
  %2006 = vmatprep.subr.mxu0 0.0
  %2007 = vmatpush1.msra.mxu0 0.0
  %2008 = vmatprep.subr.mxu0 0.0
  %2009 = vmatpush1.msra.mxu0 0.0
  %2010 = vmatprep.subr.mxu0 0.0
  %2011 = vmatpush1.msra.mxu0 0.0
  %2012 = vmatprep.subr.mxu0 0.0
  %2013 = vmatpush1.msra.mxu0 0.0
  %2014 = vmatprep.subr.mxu0 0.0
  %2015 = vmatpush1.msra.mxu0 0.0
  %2016 = vmatprep.subr.mxu0 0.0
  %2017 = vmatpush1.msra.mxu0 0.0
  %2018 = vmatprep.subr.mxu0 0.0
  %2019 = vmatpush1.msra.mxu0 0.0
  %2020 = vmatprep.subr.mxu0 0.0
  %2021 = vmatpush1.msra.mxu0 0.0
  %2022 = vmatprep.subr.mxu0 0.0
  %2023 = vmatpush1.msra.mxu0 0.0
  %2024 = vmatprep.subr.mxu0 0.0
  %2025 = vmatpush1.msra.mxu0 0.0
  %2026 = vmatprep.subr.mxu0 0.0
  %2027 = vmatpush1.msra.mxu0 0.0
  %2028 = vmatprep.subr.mxu0 0.0
  %2029 = vmatpush1.msra.mxu0 0.0
  %2030 = vmatprep.subr.mxu0 0.0
  %2031 = vmatpush1.msra.mxu0 0.0
  %2032 = vmatprep.subr.mxu0 0.0
  %2033 = vmatpush1.msra.mxu0 0.0
  %2034 = vmatprep.subr.mxu0 0.0
  %2035 = vmatpush1.msra.mxu0 0.0
  %2036 = vmatprep.subr.mxu0 0.0
  %2037 = vmatpush1.msra.mxu0 0.0
  %2038 = vmatprep.subr.mxu0 0.0
  %2039 = vmatpush1.msra.mxu0 0.0
  %2040 = vmatprep.subr.mxu0 0.0
  %2041 = vmatpush1.msra.mxu0 0.0
  %2042 = vmatprep.subr.mxu0 0.0
  %2043 = vmatpush1.msra.mxu0 0.0
  %2044 = vmatprep.subr.mxu0 0.0
  %2045 = vmatpush1.msra.mxu0 0.0
  %2046 = vmatprep.subr.mxu0 0.0
  %2047 = vmatpush1.msra.mxu0 0.0
  %2048 = vmatprep.subr.mxu0 0.0
  %2049 = vmatpush1.msra.mxu0 0.0
  %2050 = vmatprep.subr.mxu0 0.0
  %2051 = vmatpush1.msra.mxu0 0.0
  %2052 = vmatprep.subr.mxu0 0.0
  %2053 = vmatpush1.msra.mxu0 0.0
  %2054 = vmatprep.subr.mxu0 0.0
  %2055 = vmatpush1.msra.mxu0 0.0
  %2056 = vmatprep.subr.mxu0 0.0
  %2057 = vmatpush1.msra.mxu0 0.0
  %2058 = vmatprep.subr.mxu0 0.0
  %2059 = vmatpush1.msra.mxu0 0.0
  %2060 = vmatprep.mubr.f32.mxu0 0.0
  %v2061 = vand.u32 %v1671, 4294901760
  %v2062 = vsub.f32 %v1671, %v2061
  %v2063 = vand.u32 %v2062, 4294901760
  %2064 = vmatmul.mubr.f32.gmra.mrb[0].mxu0 %v2063
  %v2065 = vpop.f32.mrb[0].mxu0
  %v2066 = vadd.f32 %v1982, %v2065
  %v2067 = vpop.f32.mrb[0].mxu0
  %v2068 = vadd.f32 %v1984, %v2067
  %2069 = vdwg.mxu0
  %v2070 = vand.u32 %v1650, 4294901760
  %v2071 = vsub.f32 %v1650, %v2070
  %v2072 = vand.u32 %v2071, 4294901760
  %2073 = vmatprep.subr.mxu0 %v2072
  %v2074 = vand.u32 %v1649, 4294901760
  %v2075 = vsub.f32 %v1649, %v2074
  %v2076 = vand.u32 %v2075, 4294901760
  %2077 = vmatpush1.msra.mxu0 %v2076
  %v2078 = vand.u32 %v1654, 4294901760
  %v2079 = vsub.f32 %v1654, %v2078
  %v2080 = vand.u32 %v2079, 4294901760
  %2081 = vmatprep.subr.mxu0 %v2080
  %v2082 = vand.u32 %v1653, 4294901760
  %v2083 = vsub.f32 %v1653, %v2082
  %v2084 = vand.u32 %v2083, 4294901760
  %2085 = vmatpush1.msra.mxu0 %v2084
  %v2086 = vand.u32 %v1658, 4294901760
  %v2087 = vsub.f32 %v1658, %v2086
  %v2088 = vand.u32 %v2087, 4294901760
  %2089 = vmatprep.subr.mxu0 %v2088
  %v2090 = vand.u32 %v1657, 4294901760
  %v2091 = vsub.f32 %v1657, %v2090
  %v2092 = vand.u32 %v2091, 4294901760
  %2093 = vmatpush1.msra.mxu0 %v2092
  %v2094 = vand.u32 %v1662, 4294901760
  %v2095 = vsub.f32 %v1662, %v2094
  %v2096 = vand.u32 %v2095, 4294901760
  %2097 = vmatprep.subr.mxu0 %v2096
  %v2098 = vand.u32 %v1661, 4294901760
  %v2099 = vsub.f32 %v1661, %v2098
  %v2100 = vand.u32 %v2099, 4294901760
  %2101 = vmatpush1.msra.mxu0 %v2100
  %v2102 = vand.u32 %v1677, 4294901760
  %v2103 = vsub.f32 %v1677, %v2102
  %v2104 = vand.u32 %v2103, 4294901760
  %2105 = vmatprep.subr.mxu0 %v2104
  %v2106 = vand.u32 %v1674, 4294901760
  %v2107 = vsub.f32 %v1674, %v2106
  %v2108 = vand.u32 %v2107, 4294901760
  %2109 = vmatpush1.msra.mxu0 %v2108
  %2110 = vmatprep.subr.mxu0 0.0
  %2111 = vmatpush1.msra.mxu0 0.0
  %2112 = vmatprep.subr.mxu0 0.0
  %2113 = vmatpush1.msra.mxu0 0.0
  %2114 = vmatprep.subr.mxu0 0.0
  %2115 = vmatpush1.msra.mxu0 0.0
  %2116 = vmatprep.subr.mxu0 0.0
  %2117 = vmatpush1.msra.mxu0 0.0
  %2118 = vmatprep.subr.mxu0 0.0
  %2119 = vmatpush1.msra.mxu0 0.0
  %2120 = vmatprep.subr.mxu0 0.0
  %2121 = vmatpush1.msra.mxu0 0.0
  %2122 = vmatprep.subr.mxu0 0.0
  %2123 = vmatpush1.msra.mxu0 0.0
  %2124 = vmatprep.subr.mxu0 0.0
  %2125 = vmatpush1.msra.mxu0 0.0
  %2126 = vmatprep.subr.mxu0 0.0
  %2127 = vmatpush1.msra.mxu0 0.0
  %2128 = vmatprep.subr.mxu0 0.0
  %2129 = vmatpush1.msra.mxu0 0.0
  %2130 = vmatprep.subr.mxu0 0.0
  %2131 = vmatpush1.msra.mxu0 0.0
  %2132 = vmatprep.subr.mxu0 0.0
  %2133 = vmatpush1.msra.mxu0 0.0
  %2134 = vmatprep.subr.mxu0 0.0
  %2135 = vmatpush1.msra.mxu0 0.0
  %2136 = vmatprep.subr.mxu0 0.0
  %2137 = vmatpush1.msra.mxu0 0.0
  %2138 = vmatprep.subr.mxu0 0.0
  %2139 = vmatpush1.msra.mxu0 0.0
  %2140 = vmatprep.subr.mxu0 0.0
  %2141 = vmatpush1.msra.mxu0 0.0
  %2142 = vmatprep.subr.mxu0 0.0
  %2143 = vmatpush1.msra.mxu0 0.0
  %2144 = vmatprep.subr.mxu0 0.0
  %2145 = vmatpush1.msra.mxu0 0.0
  %2146 = vmatprep.subr.mxu0 0.0
  %2147 = vmatpush1.msra.mxu0 0.0
  %2148 = vmatprep.subr.mxu0 0.0
  %2149 = vmatpush1.msra.mxu0 0.0
  %2150 = vmatprep.subr.mxu0 0.0
  %2151 = vmatpush1.msra.mxu0 0.0
  %2152 = vmatprep.subr.mxu0 0.0
  %2153 = vmatpush1.msra.mxu0 0.0
  %2154 = vmatprep.subr.mxu0 0.0
  %2155 = vmatpush1.msra.mxu0 0.0
  %2156 = vmatprep.subr.mxu0 0.0
  %2157 = vmatpush1.msra.mxu0 0.0
  %2158 = vmatprep.subr.mxu0 0.0
  %2159 = vmatpush1.msra.mxu0 0.0
  %2160 = vmatprep.subr.mxu0 0.0
  %2161 = vmatpush1.msra.mxu0 0.0
  %2162 = vmatprep.subr.mxu0 0.0
  %2163 = vmatpush1.msra.mxu0 0.0
  %2164 = vmatprep.mubr.f32.mxu0 0.0
  %v2165 = vand.u32 %v1671, 4294901760
  %2166 = vmatmul.mubr.f32.gmra.mrb[0].mxu0 %v2165
  %v2167 = vpop.f32.mrb[0].mxu0
  %v2168 = vadd.f32 %v2066, %v2167
  %v2169 = vpop.f32.mrb[0].mxu0
  %v2170 = vadd.f32 %v2068, %v2169
  %2171 = vdwg.mxu0
  %v2172 = vand.u32 %v1650, 4294901760
  %2173 = vmatprep.subr.mxu0 %v2172
  %v2174 = vand.u32 %v1649, 4294901760
  %2175 = vmatpush1.msra.mxu0 %v2174
  %v2176 = vand.u32 %v1654, 4294901760
  %2177 = vmatprep.subr.mxu0 %v2176
  %v2178 = vand.u32 %v1653, 4294901760
  %2179 = vmatpush1.msra.mxu0 %v2178
  %v2180 = vand.u32 %v1658, 4294901760
  %2181 = vmatprep.subr.mxu0 %v2180
  %v2182 = vand.u32 %v1657, 4294901760
  %2183 = vmatpush1.msra.mxu0 %v2182
  %v2184 = vand.u32 %v1662, 4294901760
  %2185 = vmatprep.subr.mxu0 %v2184
  %v2186 = vand.u32 %v1661, 4294901760
  %2187 = vmatpush1.msra.mxu0 %v2186
  %v2188 = vand.u32 %v1677, 4294901760
  %2189 = vmatprep.subr.mxu0 %v2188
  %v2190 = vand.u32 %v1674, 4294901760
  %2191 = vmatpush1.msra.mxu0 %v2190
  %2192 = vmatprep.subr.mxu0 0.0
  %2193 = vmatpush1.msra.mxu0 0.0
  %2194 = vmatprep.subr.mxu0 0.0
  %2195 = vmatpush1.msra.mxu0 0.0
  %2196 = vmatprep.subr.mxu0 0.0
  %2197 = vmatpush1.msra.mxu0 0.0
  %2198 = vmatprep.subr.mxu0 0.0
  %2199 = vmatpush1.msra.mxu0 0.0
  %2200 = vmatprep.subr.mxu0 0.0
  %2201 = vmatpush1.msra.mxu0 0.0
  %2202 = vmatprep.subr.mxu0 0.0
  %2203 = vmatpush1.msra.mxu0 0.0
  %2204 = vmatprep.subr.mxu0 0.0
  %2205 = vmatpush1.msra.mxu0 0.0
  %2206 = vmatprep.subr.mxu0 0.0
  %2207 = vmatpush1.msra.mxu0 0.0
  %2208 = vmatprep.subr.mxu0 0.0
  %2209 = vmatpush1.msra.mxu0 0.0
  %2210 = vmatprep.subr.mxu0 0.0
  %2211 = vmatpush1.msra.mxu0 0.0
  %2212 = vmatprep.subr.mxu0 0.0
  %2213 = vmatpush1.msra.mxu0 0.0
  %2214 = vmatprep.subr.mxu0 0.0
  %2215 = vmatpush1.msra.mxu0 0.0
  %2216 = vmatprep.subr.mxu0 0.0
  %2217 = vmatpush1.msra.mxu0 0.0
  %2218 = vmatprep.subr.mxu0 0.0
  %2219 = vmatpush1.msra.mxu0 0.0
  %2220 = vmatprep.subr.mxu0 0.0
  %2221 = vmatpush1.msra.mxu0 0.0
  %2222 = vmatprep.subr.mxu0 0.0
  %2223 = vmatpush1.msra.mxu0 0.0
  %2224 = vmatprep.subr.mxu0 0.0
  %2225 = vmatpush1.msra.mxu0 0.0
  %2226 = vmatprep.subr.mxu0 0.0
  %2227 = vmatpush1.msra.mxu0 0.0
  %2228 = vmatprep.subr.mxu0 0.0
  %2229 = vmatpush1.msra.mxu0 0.0
  %2230 = vmatprep.subr.mxu0 0.0
  %2231 = vmatpush1.msra.mxu0 0.0
  %2232 = vmatprep.subr.mxu0 0.0
  %2233 = vmatpush1.msra.mxu0 0.0
  %2234 = vmatprep.subr.mxu0 0.0
  %2235 = vmatpush1.msra.mxu0 0.0
  %2236 = vmatprep.subr.mxu0 0.0
  %2237 = vmatpush1.msra.mxu0 0.0
  %2238 = vmatprep.subr.mxu0 0.0
  %2239 = vmatpush1.msra.mxu0 0.0
  %2240 = vmatprep.subr.mxu0 0.0
  %2241 = vmatpush1.msra.mxu0 0.0
  %2242 = vmatprep.subr.mxu0 0.0
  %2243 = vmatpush1.msra.mxu0 0.0
  %2244 = vmatprep.subr.mxu0 0.0
  %2245 = vmatpush1.msra.mxu0 0.0
  %2246 = vmatprep.mubr.f32.mxu0 0.0
  %v2247 = vand.u32 %v1671, 4294901760
  %2248 = vmatmul.mubr.f32.gmra.mrb[0].mxu0 %v2247
  %v2249 = vpop.f32.mrb[0].mxu0
  %v2250 = vadd.f32 %v2168, %v2249
  %v2251 = vpop.f32.mrb[0].mxu0
  %v2252 = vadd.f32 %v2170, %v2251
  %2253 = vdwg.mxu0
  %v2254 = vand.u32 %v1652, 4294901760
  %2255 = vmatprep.subr.mxu0 %v2254
  %v2256 = vand.u32 %v1651, 4294901760
  %2257 = vmatpush1.msra.mxu0 %v2256
  %v2258 = vand.u32 %v1656, 4294901760
  %2259 = vmatprep.subr.mxu0 %v2258
  %v2260 = vand.u32 %v1655, 4294901760
  %2261 = vmatpush1.msra.mxu0 %v2260
  %v2262 = vand.u32 %v1660, 4294901760
  %2263 = vmatprep.subr.mxu0 %v2262
  %v2264 = vand.u32 %v1659, 4294901760
  %2265 = vmatpush1.msra.mxu0 %v2264
  %v2266 = vand.u32 %v1664, 4294901760
  %2267 = vmatprep.subr.mxu0 %v2266
  %v2268 = vand.u32 %v1663, 4294901760
  %2269 = vmatpush1.msra.mxu0 %v2268
  %v2270 = vand.u32 %v1683, 4294901760
  %2271 = vmatprep.subr.mxu0 %v2270
  %v2272 = vand.u32 %v1680, 4294901760
  %2273 = vmatpush1.msra.mxu0 %v2272
  %2274 = vmatprep.subr.mxu0 0.0
  %2275 = vmatpush1.msra.mxu0 0.0
  %2276 = vmatprep.subr.mxu0 0.0
  %2277 = vmatpush1.msra.mxu0 0.0
  %2278 = vmatprep.subr.mxu0 0.0
  %2279 = vmatpush1.msra.mxu0 0.0
  %2280 = vmatprep.subr.mxu0 0.0
  %2281 = vmatpush1.msra.mxu0 0.0
  %2282 = vmatprep.subr.mxu0 0.0
  %2283 = vmatpush1.msra.mxu0 0.0
  %2284 = vmatprep.subr.mxu0 0.0
  %2285 = vmatpush1.msra.mxu0 0.0
  %2286 = vmatprep.subr.mxu0 0.0
  %2287 = vmatpush1.msra.mxu0 0.0
  %2288 = vmatprep.subr.mxu0 0.0
  %2289 = vmatpush1.msra.mxu0 0.0
  %2290 = vmatprep.subr.mxu0 0.0
  %2291 = vmatpush1.msra.mxu0 0.0
  %2292 = vmatprep.subr.mxu0 0.0
  %2293 = vmatpush1.msra.mxu0 0.0
  %2294 = vmatprep.subr.mxu0 0.0
  %2295 = vmatpush1.msra.mxu0 0.0
  %2296 = vmatprep.subr.mxu0 0.0
  %2297 = vmatpush1.msra.mxu0 0.0
  %2298 = vmatprep.subr.mxu0 0.0
  %2299 = vmatpush1.msra.mxu0 0.0
  %2300 = vmatprep.subr.mxu0 0.0
  %2301 = vmatpush1.msra.mxu0 0.0
  %2302 = vmatprep.subr.mxu0 0.0
  %2303 = vmatpush1.msra.mxu0 0.0
  %2304 = vmatprep.subr.mxu0 0.0
  %2305 = vmatpush1.msra.mxu0 0.0
  %2306 = vmatprep.subr.mxu0 0.0
  %2307 = vmatpush1.msra.mxu0 0.0
  %2308 = vmatprep.subr.mxu0 0.0
  %2309 = vmatpush1.msra.mxu0 0.0
  %2310 = vmatprep.subr.mxu0 0.0
  %2311 = vmatpush1.msra.mxu0 0.0
  %2312 = vmatprep.subr.mxu0 0.0
  %2313 = vmatpush1.msra.mxu0 0.0
  %2314 = vmatprep.subr.mxu0 0.0
  %2315 = vmatpush1.msra.mxu0 0.0
  %2316 = vmatprep.subr.mxu0 0.0
  %2317 = vmatpush1.msra.mxu0 0.0
  %2318 = vmatprep.subr.mxu0 0.0
  %2319 = vmatpush1.msra.mxu0 0.0
  %2320 = vmatprep.subr.mxu0 0.0
  %2321 = vmatpush1.msra.mxu0 0.0
  %2322 = vmatprep.subr.mxu0 0.0
  %2323 = vmatpush1.msra.mxu0 0.0
  %2324 = vmatprep.subr.mxu0 0.0
  %2325 = vmatpush1.msra.mxu0 0.0
  %2326 = vmatprep.subr.mxu0 0.0
  %2327 = vmatpush1.msra.mxu0 0.0
  %2328 = vmatprep.mubr.f32.mxu0 0.0
  %v2329 = vand.u32 %v1671, 4294901760
  %v2330 = vsub.f32 %v1671, %v2329
  %v2331 = vand.u32 %v2330, 4294901760
  %v2332 = vsub.f32 %v2330, %v2331
  %v2333 = vand.u32 %v2332, 4294901760
  %2334 = vmatmul.mubr.f32.gmra.mrb[0].mxu0 %v2333
  %v2335 = vpop.f32.mrb[0].mxu0
  %v2336 = vadd.f32 %v1668, %v2335
  %v2337 = vpop.f32.mrb[0].mxu0
  %v2338 = vadd.f32 %v1668, %v2337
  %2339 = vdwg.mxu0
  %v2340 = vand.u32 %v1652, 4294901760
  %v2341 = vsub.f32 %v1652, %v2340
  %v2342 = vand.u32 %v2341, 4294901760
  %v2343 = vsub.f32 %v2341, %v2342
  %v2344 = vand.u32 %v2343, 4294901760
  %2345 = vmatprep.subr.mxu0 %v2344
  %v2346 = vand.u32 %v1651, 4294901760
  %v2347 = vsub.f32 %v1651, %v2346
  %v2348 = vand.u32 %v2347, 4294901760
  %v2349 = vsub.f32 %v2347, %v2348
  %v2350 = vand.u32 %v2349, 4294901760
  %2351 = vmatpush1.msra.mxu0 %v2350
  %v2352 = vand.u32 %v1656, 4294901760
  %v2353 = vsub.f32 %v1656, %v2352
  %v2354 = vand.u32 %v2353, 4294901760
  %v2355 = vsub.f32 %v2353, %v2354
  %v2356 = vand.u32 %v2355, 4294901760
  %2357 = vmatprep.subr.mxu0 %v2356
  %v2358 = vand.u32 %v1655, 4294901760
  %v2359 = vsub.f32 %v1655, %v2358
  %v2360 = vand.u32 %v2359, 4294901760
  %v2361 = vsub.f32 %v2359, %v2360
  %v2362 = vand.u32 %v2361, 4294901760
  %2363 = vmatpush1.msra.mxu0 %v2362
  %v2364 = vand.u32 %v1660, 4294901760
  %v2365 = vsub.f32 %v1660, %v2364
  %v2366 = vand.u32 %v2365, 4294901760
  %v2367 = vsub.f32 %v2365, %v2366
  %v2368 = vand.u32 %v2367, 4294901760
  %2369 = vmatprep.subr.mxu0 %v2368
  %v2370 = vand.u32 %v1659, 4294901760
  %v2371 = vsub.f32 %v1659, %v2370
  %v2372 = vand.u32 %v2371, 4294901760
  %v2373 = vsub.f32 %v2371, %v2372
  %v2374 = vand.u32 %v2373, 4294901760
  %2375 = vmatpush1.msra.mxu0 %v2374
  %v2376 = vand.u32 %v1664, 4294901760
  %v2377 = vsub.f32 %v1664, %v2376
  %v2378 = vand.u32 %v2377, 4294901760
  %v2379 = vsub.f32 %v2377, %v2378
  %v2380 = vand.u32 %v2379, 4294901760
  %2381 = vmatprep.subr.mxu0 %v2380
  %v2382 = vand.u32 %v1663, 4294901760
  %v2383 = vsub.f32 %v1663, %v2382
  %v2384 = vand.u32 %v2383, 4294901760
  %v2385 = vsub.f32 %v2383, %v2384
  %v2386 = vand.u32 %v2385, 4294901760
  %2387 = vmatpush1.msra.mxu0 %v2386
  %v2388 = vand.u32 %v1683, 4294901760
  %v2389 = vsub.f32 %v1683, %v2388
  %v2390 = vand.u32 %v2389, 4294901760
  %v2391 = vsub.f32 %v2389, %v2390
  %v2392 = vand.u32 %v2391, 4294901760
  %2393 = vmatprep.subr.mxu0 %v2392
  %v2394 = vand.u32 %v1680, 4294901760
  %v2395 = vsub.f32 %v1680, %v2394
  %v2396 = vand.u32 %v2395, 4294901760
  %v2397 = vsub.f32 %v2395, %v2396
  %v2398 = vand.u32 %v2397, 4294901760
  %2399 = vmatpush1.msra.mxu0 %v2398
  %2400 = vmatprep.subr.mxu0 0.0
  %2401 = vmatpush1.msra.mxu0 0.0
  %2402 = vmatprep.subr.mxu0 0.0
  %2403 = vmatpush1.msra.mxu0 0.0
  %2404 = vmatprep.subr.mxu0 0.0
  %2405 = vmatpush1.msra.mxu0 0.0
  %2406 = vmatprep.subr.mxu0 0.0
  %2407 = vmatpush1.msra.mxu0 0.0
  %2408 = vmatprep.subr.mxu0 0.0
  %2409 = vmatpush1.msra.mxu0 0.0
  %2410 = vmatprep.subr.mxu0 0.0
  %2411 = vmatpush1.msra.mxu0 0.0
  %2412 = vmatprep.subr.mxu0 0.0
  %2413 = vmatpush1.msra.mxu0 0.0
  %2414 = vmatprep.subr.mxu0 0.0
  %2415 = vmatpush1.msra.mxu0 0.0
  %2416 = vmatprep.subr.mxu0 0.0
  %2417 = vmatpush1.msra.mxu0 0.0
  %2418 = vmatprep.subr.mxu0 0.0
  %2419 = vmatpush1.msra.mxu0 0.0
  %2420 = vmatprep.subr.mxu0 0.0
  %2421 = vmatpush1.msra.mxu0 0.0
  %2422 = vmatprep.subr.mxu0 0.0
  %2423 = vmatpush1.msra.mxu0 0.0
  %2424 = vmatprep.subr.mxu0 0.0
  %2425 = vmatpush1.msra.mxu0 0.0
  %2426 = vmatprep.subr.mxu0 0.0
  %2427 = vmatpush1.msra.mxu0 0.0
  %2428 = vmatprep.subr.mxu0 0.0
  %2429 = vmatpush1.msra.mxu0 0.0
  %2430 = vmatprep.subr.mxu0 0.0
  %2431 = vmatpush1.msra.mxu0 0.0
  %2432 = vmatprep.subr.mxu0 0.0
  %2433 = vmatpush1.msra.mxu0 0.0
  %2434 = vmatprep.subr.mxu0 0.0
  %2435 = vmatpush1.msra.mxu0 0.0
  %2436 = vmatprep.subr.mxu0 0.0
  %2437 = vmatpush1.msra.mxu0 0.0
  %2438 = vmatprep.subr.mxu0 0.0
  %2439 = vmatpush1.msra.mxu0 0.0
  %2440 = vmatprep.subr.mxu0 0.0
  %2441 = vmatpush1.msra.mxu0 0.0
  %2442 = vmatprep.subr.mxu0 0.0
  %2443 = vmatpush1.msra.mxu0 0.0
  %2444 = vmatprep.subr.mxu0 0.0
  %2445 = vmatpush1.msra.mxu0 0.0
  %2446 = vmatprep.subr.mxu0 0.0
  %2447 = vmatpush1.msra.mxu0 0.0
  %2448 = vmatprep.subr.mxu0 0.0
  %2449 = vmatpush1.msra.mxu0 0.0
  %2450 = vmatprep.subr.mxu0 0.0
  %2451 = vmatpush1.msra.mxu0 0.0
  %2452 = vmatprep.subr.mxu0 0.0
  %2453 = vmatpush1.msra.mxu0 0.0
  %2454 = vmatprep.mubr.f32.mxu0 0.0
  %v2455 = vand.u32 %v1671, 4294901760
  %2456 = vmatmul.mubr.f32.gmra.mrb[0].mxu0 %v2455
  %v2457 = vpop.f32.mrb[0].mxu0
  %v2458 = vadd.f32 %v2336, %v2457
  %v2459 = vpop.f32.mrb[0].mxu0
  %v2460 = vadd.f32 %v2338, %v2459
  %2461 = vdwg.mxu0
  %v2462 = vand.u32 %v1652, 4294901760
  %v2463 = vsub.f32 %v1652, %v2462
  %2464 = vmatprep.subr.mxu0 %v2463
  %v2465 = vand.u32 %v1651, 4294901760
  %v2466 = vsub.f32 %v1651, %v2465
  %2467 = vmatpush1.msra.mxu0 %v2466
  %v2468 = vand.u32 %v1656, 4294901760
  %v2469 = vsub.f32 %v1656, %v2468
  %2470 = vmatprep.subr.mxu0 %v2469
  %v2471 = vand.u32 %v1655, 4294901760
  %v2472 = vsub.f32 %v1655, %v2471
  %2473 = vmatpush1.msra.mxu0 %v2472
  %v2474 = vand.u32 %v1660, 4294901760
  %v2475 = vsub.f32 %v1660, %v2474
  %2476 = vmatprep.subr.mxu0 %v2475
  %v2477 = vand.u32 %v1659, 4294901760
  %v2478 = vsub.f32 %v1659, %v2477
  %2479 = vmatpush1.msra.mxu0 %v2478
  %v2480 = vand.u32 %v1664, 4294901760
  %v2481 = vsub.f32 %v1664, %v2480
  %2482 = vmatprep.subr.mxu0 %v2481
  %v2483 = vand.u32 %v1663, 4294901760
  %v2484 = vsub.f32 %v1663, %v2483
  %2485 = vmatpush1.msra.mxu0 %v2484
  %v2486 = vand.u32 %v1683, 4294901760
  %v2487 = vsub.f32 %v1683, %v2486
  %2488 = vmatprep.subr.mxu0 %v2487
  %v2489 = vand.u32 %v1680, 4294901760
  %v2490 = vsub.f32 %v1680, %v2489
  %2491 = vmatpush1.msra.mxu0 %v2490
  %2492 = vmatprep.subr.mxu0 0.0
  %2493 = vmatpush1.msra.mxu0 0.0
  %2494 = vmatprep.subr.mxu0 0.0
  %2495 = vmatpush1.msra.mxu0 0.0
  %2496 = vmatprep.subr.mxu0 0.0
  %2497 = vmatpush1.msra.mxu0 0.0
  %2498 = vmatprep.subr.mxu0 0.0
  %2499 = vmatpush1.msra.mxu0 0.0
  %2500 = vmatprep.subr.mxu0 0.0
  %2501 = vmatpush1.msra.mxu0 0.0
  %2502 = vmatprep.subr.mxu0 0.0
  %2503 = vmatpush1.msra.mxu0 0.0
  %2504 = vmatprep.subr.mxu0 0.0
  %2505 = vmatpush1.msra.mxu0 0.0
  %2506 = vmatprep.subr.mxu0 0.0
  %2507 = vmatpush1.msra.mxu0 0.0
  %2508 = vmatprep.subr.mxu0 0.0
  %2509 = vmatpush1.msra.mxu0 0.0
  %2510 = vmatprep.subr.mxu0 0.0
  %2511 = vmatpush1.msra.mxu0 0.0
  %2512 = vmatprep.subr.mxu0 0.0
  %2513 = vmatpush1.msra.mxu0 0.0
  %2514 = vmatprep.subr.mxu0 0.0
  %2515 = vmatpush1.msra.mxu0 0.0
  %2516 = vmatprep.subr.mxu0 0.0
  %2517 = vmatpush1.msra.mxu0 0.0
  %2518 = vmatprep.subr.mxu0 0.0
  %2519 = vmatpush1.msra.mxu0 0.0
  %2520 = vmatprep.subr.mxu0 0.0
  %2521 = vmatpush1.msra.mxu0 0.0
  %2522 = vmatprep.subr.mxu0 0.0
  %2523 = vmatpush1.msra.mxu0 0.0
  %2524 = vmatprep.subr.mxu0 0.0
  %2525 = vmatpush1.msra.mxu0 0.0
  %2526 = vmatprep.subr.mxu0 0.0
  %2527 = vmatpush1.msra.mxu0 0.0
  %2528 = vmatprep.subr.mxu0 0.0
  %2529 = vmatpush1.msra.mxu0 0.0
  %2530 = vmatprep.subr.mxu0 0.0
  %2531 = vmatpush1.msra.mxu0 0.0
  %2532 = vmatprep.subr.mxu0 0.0
  %2533 = vmatpush1.msra.mxu0 0.0
  %2534 = vmatprep.subr.mxu0 0.0
  %2535 = vmatpush1.msra.mxu0 0.0
  %2536 = vmatprep.subr.mxu0 0.0
  %2537 = vmatpush1.msra.mxu0 0.0
  %2538 = vmatprep.subr.mxu0 0.0
  %2539 = vmatpush1.msra.mxu0 0.0
  %2540 = vmatprep.subr.mxu0 0.0
  %2541 = vmatpush1.msra.mxu0 0.0
  %2542 = vmatprep.subr.mxu0 0.0
  %2543 = vmatpush1.msra.mxu0 0.0
  %2544 = vmatprep.subr.mxu0 0.0
  %2545 = vmatpush1.msra.mxu0 0.0
  %2546 = vmatprep.mubr.f32.mxu0 0.0
  %v2547 = vand.u32 %v1671, 4294901760
  %v2548 = vsub.f32 %v1671, %v2547
  %2549 = vmatmul.mubr.f32.gmra.mrb[0].mxu0 %v2548
  %v2550 = vpop.f32.mrb[0].mxu0
  %v2551 = vadd.f32 %v2458, %v2550
  %v2552 = vpop.f32.mrb[0].mxu0
  %v2553 = vadd.f32 %v2460, %v2552
  %2554 = vdwg.mxu0
  %v2555 = vand.u32 %v1652, 4294901760
  %2556 = vmatprep.subr.mxu0 %v2555
  %v2557 = vand.u32 %v1651, 4294901760
  %2558 = vmatpush1.msra.mxu0 %v2557
  %v2559 = vand.u32 %v1656, 4294901760
  %2560 = vmatprep.subr.mxu0 %v2559
  %v2561 = vand.u32 %v1655, 4294901760
  %2562 = vmatpush1.msra.mxu0 %v2561
  %v2563 = vand.u32 %v1660, 4294901760
  %2564 = vmatprep.subr.mxu0 %v2563
  %v2565 = vand.u32 %v1659, 4294901760
  %2566 = vmatpush1.msra.mxu0 %v2565
  %v2567 = vand.u32 %v1664, 4294901760
  %2568 = vmatprep.subr.mxu0 %v2567
  %v2569 = vand.u32 %v1663, 4294901760
  %2570 = vmatpush1.msra.mxu0 %v2569
  %v2571 = vand.u32 %v1683, 4294901760
  %2572 = vmatprep.subr.mxu0 %v2571
  %v2573 = vand.u32 %v1680, 4294901760
  %2574 = vmatpush1.msra.mxu0 %v2573
  %2575 = vmatprep.subr.mxu0 0.0
  %2576 = vmatpush1.msra.mxu0 0.0
  %2577 = vmatprep.subr.mxu0 0.0
  %2578 = vmatpush1.msra.mxu0 0.0
  %2579 = vmatprep.subr.mxu0 0.0
  %2580 = vmatpush1.msra.mxu0 0.0
  %2581 = vmatprep.subr.mxu0 0.0
  %2582 = vmatpush1.msra.mxu0 0.0
  %2583 = vmatprep.subr.mxu0 0.0
  %2584 = vmatpush1.msra.mxu0 0.0
  %2585 = vmatprep.subr.mxu0 0.0
  %2586 = vmatpush1.msra.mxu0 0.0
  %2587 = vmatprep.subr.mxu0 0.0
  %2588 = vmatpush1.msra.mxu0 0.0
  %2589 = vmatprep.subr.mxu0 0.0
  %2590 = vmatpush1.msra.mxu0 0.0
  %2591 = vmatprep.subr.mxu0 0.0
  %2592 = vmatpush1.msra.mxu0 0.0
  %2593 = vmatprep.subr.mxu0 0.0
  %2594 = vmatpush1.msra.mxu0 0.0
  %2595 = vmatprep.subr.mxu0 0.0
  %2596 = vmatpush1.msra.mxu0 0.0
  %2597 = vmatprep.subr.mxu0 0.0
  %2598 = vmatpush1.msra.mxu0 0.0
  %2599 = vmatprep.subr.mxu0 0.0
  %2600 = vmatpush1.msra.mxu0 0.0
  %2601 = vmatprep.subr.mxu0 0.0
  %2602 = vmatpush1.msra.mxu0 0.0
  %2603 = vmatprep.subr.mxu0 0.0
  %2604 = vmatpush1.msra.mxu0 0.0
  %2605 = vmatprep.subr.mxu0 0.0
  %2606 = vmatpush1.msra.mxu0 0.0
  %2607 = vmatprep.subr.mxu0 0.0
  %2608 = vmatpush1.msra.mxu0 0.0
  %2609 = vmatprep.subr.mxu0 0.0
  %2610 = vmatpush1.msra.mxu0 0.0
  %2611 = vmatprep.subr.mxu0 0.0
  %2612 = vmatpush1.msra.mxu0 0.0
  %2613 = vmatprep.subr.mxu0 0.0
  %2614 = vmatpush1.msra.mxu0 0.0
  %2615 = vmatprep.subr.mxu0 0.0
  %2616 = vmatpush1.msra.mxu0 0.0
  %2617 = vmatprep.subr.mxu0 0.0
  %2618 = vmatpush1.msra.mxu0 0.0
  %2619 = vmatprep.subr.mxu0 0.0
  %2620 = vmatpush1.msra.mxu0 0.0
  %2621 = vmatprep.subr.mxu0 0.0
  %2622 = vmatpush1.msra.mxu0 0.0
  %2623 = vmatprep.subr.mxu0 0.0
  %2624 = vmatpush1.msra.mxu0 0.0
  %2625 = vmatprep.subr.mxu0 0.0
  %2626 = vmatpush1.msra.mxu0 0.0
  %2627 = vmatprep.subr.mxu0 0.0
  %2628 = vmatpush1.msra.mxu0 0.0
  %2629 = vmatprep.mubr.f32.mxu0 0.0
  %v2630 = vand.u32 %v1671, 4294901760
  %v2631 = vsub.f32 %v1671, %v2630
  %v2632 = vand.u32 %v2631, 4294901760
  %2633 = vmatmul.mubr.f32.gmra.mrb[0].mxu0 %v2632
  %v2634 = vpop.f32.mrb[0].mxu0
  %v2635 = vadd.f32 %v2551, %v2634
  %v2636 = vpop.f32.mrb[0].mxu0
  %v2637 = vadd.f32 %v2553, %v2636
  %2638 = vdwg.mxu0
  %v2639 = vand.u32 %v1652, 4294901760
  %v2640 = vsub.f32 %v1652, %v2639
  %v2641 = vand.u32 %v2640, 4294901760
  %2642 = vmatprep.subr.mxu0 %v2641
  %v2643 = vand.u32 %v1651, 4294901760
  %v2644 = vsub.f32 %v1651, %v2643
  %v2645 = vand.u32 %v2644, 4294901760
  %2646 = vmatpush1.msra.mxu0 %v2645
  %v2647 = vand.u32 %v1656, 4294901760
  %v2648 = vsub.f32 %v1656, %v2647
  %v2649 = vand.u32 %v2648, 4294901760
  %2650 = vmatprep.subr.mxu0 %v2649
  %v2651 = vand.u32 %v1655, 4294901760
  %v2652 = vsub.f32 %v1655, %v2651
  %v2653 = vand.u32 %v2652, 4294901760
  %2654 = vmatpush1.msra.mxu0 %v2653
  %v2655 = vand.u32 %v1660, 4294901760
  %v2656 = vsub.f32 %v1660, %v2655
  %v2657 = vand.u32 %v2656, 4294901760
  %2658 = vmatprep.subr.mxu0 %v2657
  %v2659 = vand.u32 %v1659, 4294901760
  %v2660 = vsub.f32 %v1659, %v2659
  %v2661 = vand.u32 %v2660, 4294901760
  %2662 = vmatpush1.msra.mxu0 %v2661
  %v2663 = vand.u32 %v1664, 4294901760
  %v2664 = vsub.f32 %v1664, %v2663
  %v2665 = vand.u32 %v2664, 4294901760
  %2666 = vmatprep.subr.mxu0 %v2665
  %v2667 = vand.u32 %v1663, 4294901760
  %v2668 = vsub.f32 %v1663, %v2667
  %v2669 = vand.u32 %v2668, 4294901760
  %2670 = vmatpush1.msra.mxu0 %v2669
  %v2671 = vand.u32 %v1683, 4294901760
  %v2672 = vsub.f32 %v1683, %v2671
  %v2673 = vand.u32 %v2672, 4294901760
  %2674 = vmatprep.subr.mxu0 %v2673
  %v2675 = vand.u32 %v1680, 4294901760
  %v2676 = vsub.f32 %v1680, %v2675
  %v2677 = vand.u32 %v2676, 4294901760
  %2678 = vmatpush1.msra.mxu0 %v2677
  %2679 = vmatprep.subr.mxu0 0.0
  %2680 = vmatpush1.msra.mxu0 0.0
  %2681 = vmatprep.subr.mxu0 0.0
  %2682 = vmatpush1.msra.mxu0 0.0
  %2683 = vmatprep.subr.mxu0 0.0
  %2684 = vmatpush1.msra.mxu0 0.0
  %2685 = vmatprep.subr.mxu0 0.0
  %2686 = vmatpush1.msra.mxu0 0.0
  %2687 = vmatprep.subr.mxu0 0.0
  %2688 = vmatpush1.msra.mxu0 0.0
  %2689 = vmatprep.subr.mxu0 0.0
  %2690 = vmatpush1.msra.mxu0 0.0
  %2691 = vmatprep.subr.mxu0 0.0
  %2692 = vmatpush1.msra.mxu0 0.0
  %2693 = vmatprep.subr.mxu0 0.0
  %2694 = vmatpush1.msra.mxu0 0.0
  %2695 = vmatprep.subr.mxu0 0.0
  %2696 = vmatpush1.msra.mxu0 0.0
  %2697 = vmatprep.subr.mxu0 0.0
  %2698 = vmatpush1.msra.mxu0 0.0
  %2699 = vmatprep.subr.mxu0 0.0
  %2700 = vmatpush1.msra.mxu0 0.0
  %2701 = vmatprep.subr.mxu0 0.0
  %2702 = vmatpush1.msra.mxu0 0.0
  %2703 = vmatprep.subr.mxu0 0.0
  %2704 = vmatpush1.msra.mxu0 0.0
  %2705 = vmatprep.subr.mxu0 0.0
  %2706 = vmatpush1.msra.mxu0 0.0
  %2707 = vmatprep.subr.mxu0 0.0
  %2708 = vmatpush1.msra.mxu0 0.0
  %2709 = vmatprep.subr.mxu0 0.0
  %2710 = vmatpush1.msra.mxu0 0.0
  %2711 = vmatprep.subr.mxu0 0.0
  %2712 = vmatpush1.msra.mxu0 0.0
  %2713 = vmatprep.subr.mxu0 0.0
  %2714 = vmatpush1.msra.mxu0 0.0
  %2715 = vmatprep.subr.mxu0 0.0
  %2716 = vmatpush1.msra.mxu0 0.0
  %2717 = vmatprep.subr.mxu0 0.0
  %2718 = vmatpush1.msra.mxu0 0.0
  %2719 = vmatprep.subr.mxu0 0.0
  %2720 = vmatpush1.msra.mxu0 0.0
  %2721 = vmatprep.subr.mxu0 0.0
  %2722 = vmatpush1.msra.mxu0 0.0
  %2723 = vmatprep.subr.mxu0 0.0
  %2724 = vmatpush1.msra.mxu0 0.0
  %2725 = vmatprep.subr.mxu0 0.0
  %2726 = vmatpush1.msra.mxu0 0.0
  %2727 = vmatprep.subr.mxu0 0.0
  %2728 = vmatpush1.msra.mxu0 0.0
  %2729 = vmatprep.subr.mxu0 0.0
  %2730 = vmatpush1.msra.mxu0 0.0
  %2731 = vmatprep.subr.mxu0 0.0
  %2732 = vmatpush1.msra.mxu0 0.0
  %2733 = vmatprep.mubr.f32.mxu0 0.0
  %v2734 = vand.u32 %v1671, 4294901760
  %2735 = vmatmul.mubr.f32.gmra.mrb[0].mxu0 %v2734
  %v2736 = vpop.f32.mrb[0].mxu0
  %v2737 = vadd.f32 %v2635, %v2736
  %v2738 = vpop.f32.mrb[0].mxu0
  %v2739 = vadd.f32 %v2637, %v2738
  %2740 = vdwg.mxu0
  %v2741 = vand.u32 %v1652, 4294901760
  %2742 = vmatprep.subr.mxu0 %v2741
  %v2743 = vand.u32 %v1651, 4294901760
  %2744 = vmatpush1.msra.mxu0 %v2743
  %v2745 = vand.u32 %v1656, 4294901760
  %2746 = vmatprep.subr.mxu0 %v2745
  %v2747 = vand.u32 %v1655, 4294901760
  %2748 = vmatpush1.msra.mxu0 %v2747
  %v2749 = vand.u32 %v1660, 4294901760
  %2750 = vmatprep.subr.mxu0 %v2749
  %v2751 = vand.u32 %v1659, 4294901760
  %2752 = vmatpush1.msra.mxu0 %v2751
  %v2753 = vand.u32 %v1664, 4294901760
  %2754 = vmatprep.subr.mxu0 %v2753
  %v2755 = vand.u32 %v1663, 4294901760
  %2756 = vmatpush1.msra.mxu0 %v2755
  %v2757 = vand.u32 %v1683, 4294901760
  %2758 = vmatprep.subr.mxu0 %v2757
  %v2759 = vand.u32 %v1680, 4294901760
  %2760 = vmatpush1.msra.mxu0 %v2759
  %2761 = vmatprep.subr.mxu0 0.0
  %2762 = vmatpush1.msra.mxu0 0.0
  %2763 = vmatprep.subr.mxu0 0.0
  %2764 = vmatpush1.msra.mxu0 0.0
  %2765 = vmatprep.subr.mxu0 0.0
  %2766 = vmatpush1.msra.mxu0 0.0
  %2767 = vmatprep.subr.mxu0 0.0
  %2768 = vmatpush1.msra.mxu0 0.0
  %2769 = vmatprep.subr.mxu0 0.0
  %2770 = vmatpush1.msra.mxu0 0.0
  %2771 = vmatprep.subr.mxu0 0.0
  %2772 = vmatpush1.msra.mxu0 0.0
  %2773 = vmatprep.subr.mxu0 0.0
  %2774 = vmatpush1.msra.mxu0 0.0
  %2775 = vmatprep.subr.mxu0 0.0
  %2776 = vmatpush1.msra.mxu0 0.0
  %2777 = vmatprep.subr.mxu0 0.0
  %2778 = vmatpush1.msra.mxu0 0.0
  %2779 = vmatprep.subr.mxu0 0.0
  %2780 = vmatpush1.msra.mxu0 0.0
  %2781 = vmatprep.subr.mxu0 0.0
  %2782 = vmatpush1.msra.mxu0 0.0
  %2783 = vmatprep.subr.mxu0 0.0
  %2784 = vmatpush1.msra.mxu0 0.0
  %2785 = vmatprep.subr.mxu0 0.0
  %2786 = vmatpush1.msra.mxu0 0.0
  %2787 = vmatprep.subr.mxu0 0.0
  %2788 = vmatpush1.msra.mxu0 0.0
  %2789 = vmatprep.subr.mxu0 0.0
  %2790 = vmatpush1.msra.mxu0 0.0
  %2791 = vmatprep.subr.mxu0 0.0
  %2792 = vmatpush1.msra.mxu0 0.0
  %2793 = vmatprep.subr.mxu0 0.0
  %2794 = vmatpush1.msra.mxu0 0.0
  %2795 = vmatprep.subr.mxu0 0.0
  %2796 = vmatpush1.msra.mxu0 0.0
  %2797 = vmatprep.subr.mxu0 0.0
  %2798 = vmatpush1.msra.mxu0 0.0
  %2799 = vmatprep.subr.mxu0 0.0
  %2800 = vmatpush1.msra.mxu0 0.0
  %2801 = vmatprep.subr.mxu0 0.0
  %2802 = vmatpush1.msra.mxu0 0.0
  %2803 = vmatprep.subr.mxu0 0.0
  %2804 = vmatpush1.msra.mxu0 0.0
  %2805 = vmatprep.subr.mxu0 0.0
  %2806 = vmatpush1.msra.mxu0 0.0
  %2807 = vmatprep.subr.mxu0 0.0
  %2808 = vmatpush1.msra.mxu0 0.0
  %2809 = vmatprep.subr.mxu0 0.0
  %2810 = vmatpush1.msra.mxu0 0.0
  %2811 = vmatprep.subr.mxu0 0.0
  %2812 = vmatpush1.msra.mxu0 0.0
  %2813 = vmatprep.subr.mxu0 0.0
  %2814 = vmatpush1.msra.mxu0 0.0
  %2815 = vmatprep.mubr.f32.mxu0 0.0
  %v2816 = vand.u32 %v1671, 4294901760
  %2817 = vmatmul.mubr.f32.gmra.mrb[0].mxu0 %v2816
  %v2818 = vpop.f32.mrb[0].mxu0
  %v2819 = vadd.f32 %v2737, %v2818
  %v2820 = vpop.f32.mrb[0].mxu0
  %v2821 = vadd.f32 %v2739, %v2820
  %2822 = vdwg.mxu0
  %v2823 = vadd.f32 %v2250, %v43
  %v2824 = vadd.f32 %v2252, %v49
  %v2825 = vadd.f32 %v2819, %v44
  %v2826 = vadd.f32 %v2821, %v50
  %v2827 = vxor.u32 %v2823, 2147483648
  %v2828 = vxor.u32 %v2824, 2147483648
  %v2829 = vxor.u32 %v2825, 2147483648
  %v2830 = vxor.u32 %v2826, 2147483648
  %v2831 = vmul.f32 %v2827, 1.442695
  %v2832 = vpow.pop %v2831
  %v2833 = vmul.f32 %v2828, 1.442695
  %v2834 = vpow.pop %v2833
  %v2835 = vmul.f32 %v2829, 1.442695
  %v2836 = vpow.pop %v2835
  %v2837 = vmul.f32 %v2830, 1.442695
  %v2838 = vpow.pop %v2837
  %v2839 = vadd.f32 %v2832, 1.0
  %v2840 = vadd.f32 %v2834, 1.0
  %v2841 = vadd.f32 %v2836, 1.0
  %v2842 = vadd.f32 %v2838, 1.0
  %v2843 = vrcp.pop %v2839
  %v2844 = vmul.f32 1.0, %v2843
  %v2845 = vrcp.pop %v2840
  %v2846 = vmul.f32 1.0, %v2845
  %v2847 = vrcp.pop %v2841
  %v2848 = vmul.f32 1.0, %v2847
  %v2849 = vrcp.pop %v2842
  %v2850 = vmul.f32 1.0, %v2849
  %v2851 = vmul.f32 %v2823, %v2844
  %v2852 = vmul.f32 %v2824, %v2846
  %v2853 = vmul.f32 %v2825, %v2848
  %v2854 = vmul.f32 %v2826, %v2850
  %v2855 = vadd.f32 %v2851, %v2823
  %v2856 = vadd.f32 %v2852, %v2824
  %v2857 = vadd.f32 %v2853, %v2825
  %v2858 = vadd.f32 %v2854, %v2826
  %s2859 = scalar_lea.vmem %s1, 8
  %v2860 = vld [vmem:[%s2859] sm:$0xf]
  %s2861 = scalar_lea.vmem %s2, 8
  %v2862 = vld [vmem:[%s2861] sm:$0xf]
  %2863 = vrot.lane.b32.xlu0 %v2855, 1
  %v2864 = vpop.permute.xlu0 %2863
  %2865 = vrot.lane.b32.xlu0 %v2856, 1
  %v2866 = vpop.permute.xlu0 %2865
  %2867 = vrot.lane.b32.xlu0 %v2857, 1
  %v2868 = vpop.permute.xlu0 %2867
  %2869 = vrot.lane.b32.xlu0 %v2858, 1
  %v2870 = vpop.permute.xlu0 %2869
  %v2871 = vsel %vm61, %v2868, %v2870
  %v2872 = vsel %vm61, %v2866, %v2868
  %v2873 = vsel %vm61, %v2864, %v2866
  %v2874 = vsel %vm61, %v2870, %v2864
  %v2875 = vsel %vm70, %v2874, 0.0
  %v2876 = vsel %vm71, %v2873, 0.0
  %v2877 = vsel %vm72, %v2872, 0.0
  %v2878 = vsel %vm73, %v2871, 0.0
  %2879 = vrot.lane.b32.xlu0 %v2855, 127
  %v2880 = vpop.permute.xlu0 %2879
  %2881 = vrot.lane.b32.xlu0 %v2856, 127
  %v2882 = vpop.permute.xlu0 %2881
  %2883 = vrot.lane.b32.xlu0 %v2857, 127
  %v2884 = vpop.permute.xlu0 %2883
  %2885 = vrot.lane.b32.xlu0 %v2858, 127
  %v2886 = vpop.permute.xlu0 %2885
  %v2887 = vsel %vm86, %v2884, %v2886
  %v2888 = vsel %vm86, %v2882, %v2884
  %v2889 = vsel %vm86, %v2880, %v2882
  %v2890 = vsel %vm86, %v2886, %v2880
  %v2891 = vsel %vm95, %v2889, 0.0
  %v2892 = vsel %vm96, %v2888, 0.0
  %v2893 = vsel %vm97, %v2887, 0.0
  %v2894 = vsel %vm98, %v2890, 0.0
  %2895 = vrot.lane.b32.xlu0 %v2875, 16
  %v2896 = vpop.permute.xlu0 %2895
  %2897 = vrot.lane.b32.xlu0 %v2876, 16
  %v2898 = vpop.permute.xlu0 %2897
  %2899 = vrot.lane.b32.xlu0 %v2877, 16
  %v2900 = vpop.permute.xlu0 %2899
  %2901 = vrot.lane.b32.xlu0 %v2878, 16
  %v2902 = vpop.permute.xlu0 %2901
  %v2903 = vsel %vm111, %v2900, %v2902
  %v2904 = vsel %vm111, %v2898, %v2900
  %v2905 = vsel %vm111, %v2896, %v2898
  %v2906 = vsel %vm111, %v2902, %v2896
  %v2907 = vsel %vm120, %v2906, 0.0
  %v2908 = vsel %vm121, %v2905, 0.0
  %v2909 = vsel %vm122, %v2904, 0.0
  %v2910 = vsel %vm123, %v2903, 0.0
  %2911 = vrot.lane.b32.xlu0 %v2855, 16
  %v2912 = vpop.permute.xlu0 %2911
  %2913 = vrot.lane.b32.xlu0 %v2856, 16
  %v2914 = vpop.permute.xlu0 %2913
  %2915 = vrot.lane.b32.xlu0 %v2857, 16
  %v2916 = vpop.permute.xlu0 %2915
  %2917 = vrot.lane.b32.xlu0 %v2858, 16
  %v2918 = vpop.permute.xlu0 %2917
  %v2919 = vsel %vm111, %v2916, %v2918
  %v2920 = vsel %vm111, %v2914, %v2916
  %v2921 = vsel %vm111, %v2912, %v2914
  %v2922 = vsel %vm111, %v2918, %v2912
  %v2923 = vsel %vm120, %v2922, 0.0
  %v2924 = vsel %vm121, %v2921, 0.0
  %v2925 = vsel %vm122, %v2920, 0.0
  %v2926 = vsel %vm123, %v2919, 0.0
  %2927 = vrot.lane.b32.xlu0 %v2891, 16
  %v2928 = vpop.permute.xlu0 %2927
  %2929 = vrot.lane.b32.xlu0 %v2892, 16
  %v2930 = vpop.permute.xlu0 %2929
  %2931 = vrot.lane.b32.xlu0 %v2893, 16
  %v2932 = vpop.permute.xlu0 %2931
  %2933 = vrot.lane.b32.xlu0 %v2894, 16
  %v2934 = vpop.permute.xlu0 %2933
  %v2935 = vsel %vm111, %v2932, %v2934
  %v2936 = vsel %vm111, %v2930, %v2932
  %v2937 = vsel %vm111, %v2928, %v2930
  %v2938 = vsel %vm111, %v2934, %v2928
  %v2939 = vsel %vm120, %v2938, 0.0
  %v2940 = vsel %vm121, %v2937, 0.0
  %v2941 = vsel %vm122, %v2936, 0.0
  %v2942 = vsel %vm123, %v2935, 0.0
  %2943 = vrot.lane.b32.xlu0 %v2875, 112
  %v2944 = vpop.permute.xlu0 %2943
  %2945 = vrot.lane.b32.xlu0 %v2876, 112
  %v2946 = vpop.permute.xlu0 %2945
  %2947 = vrot.lane.b32.xlu0 %v2877, 112
  %v2948 = vpop.permute.xlu0 %2947
  %2949 = vrot.lane.b32.xlu0 %v2878, 112
  %v2950 = vpop.permute.xlu0 %2949
  %v2951 = vsel %vm168, %v2948, %v2950
  %v2952 = vsel %vm168, %v2946, %v2948
  %v2953 = vsel %vm168, %v2944, %v2946
  %v2954 = vsel %vm168, %v2950, %v2944
  %v2955 = vsel %vm177, %v2953, 0.0
  %v2956 = vsel %vm178, %v2952, 0.0
  %v2957 = vsel %vm179, %v2951, 0.0
  %v2958 = vsel %vm180, %v2954, 0.0
  %2959 = vrot.lane.b32.xlu0 %v2855, 112
  %v2960 = vpop.permute.xlu0 %2959
  %2961 = vrot.lane.b32.xlu0 %v2856, 112
  %v2962 = vpop.permute.xlu0 %2961
  %2963 = vrot.lane.b32.xlu0 %v2857, 112
  %v2964 = vpop.permute.xlu0 %2963
  %2965 = vrot.lane.b32.xlu0 %v2858, 112
  %v2966 = vpop.permute.xlu0 %2965
  %v2967 = vsel %vm168, %v2964, %v2966
  %v2968 = vsel %vm168, %v2962, %v2964
  %v2969 = vsel %vm168, %v2960, %v2962
  %v2970 = vsel %vm168, %v2966, %v2960
  %v2971 = vsel %vm177, %v2969, 0.0
  %v2972 = vsel %vm178, %v2968, 0.0
  %v2973 = vsel %vm179, %v2967, 0.0
  %v2974 = vsel %vm180, %v2970, 0.0
  %2975 = vrot.lane.b32.xlu0 %v2891, 112
  %v2976 = vpop.permute.xlu0 %2975
  %2977 = vrot.lane.b32.xlu0 %v2892, 112
  %v2978 = vpop.permute.xlu0 %2977
  %2979 = vrot.lane.b32.xlu0 %v2893, 112
  %v2980 = vpop.permute.xlu0 %2979
  %2981 = vrot.lane.b32.xlu0 %v2894, 112
  %v2982 = vpop.permute.xlu0 %2981
  %v2983 = vsel %vm168, %v2980, %v2982
  %v2984 = vsel %vm168, %v2978, %v2980
  %v2985 = vsel %vm168, %v2976, %v2978
  %v2986 = vsel %vm168, %v2982, %v2976
  %v2987 = vsel %vm177, %v2985, 0.0
  %v2988 = vsel %vm178, %v2984, 0.0
  %v2989 = vsel %vm179, %v2983, 0.0
  %v2990 = vsel %vm180, %v2986, 0.0
  %v2995 = vrot.slane %v2923, 4
  %v2996 = vrot.slane %v2924, 4
  %v2997 = vrot.slane %v2925, 4
  %v2998 = vrot.slane %v2926, 4
  %v3007 = vrot.slane %v2875, 4
  %v3008 = vrot.slane %v2876, 4
  %v3009 = vrot.slane %v2877, 4
  %v3010 = vrot.slane %v2878, 4
  %v3019 = vrot.slane %v2891, 4
  %v3020 = vrot.slane %v2892, 4
  %v3021 = vrot.slane %v2893, 4
  %v3022 = vrot.slane %v2894, 4
  %v3031 = vrot.slane %v2971, 4
  %v3032 = vrot.slane %v2972, 4
  %v3033 = vrot.slane %v2973, 4
  %v3034 = vrot.slane %v2974, 4
  %v3039 = vsel %vm265, %v2907, %v2995
  %v3040 = vsel %vm265, %v2908, %v2996
  %v3041 = vsel %vm265, %v2909, %v2997
  %v3042 = vsel %vm265, %v2910, %v2998
  %v3043 = vsel %vm265, %v2939, %v3007
  %v3044 = vsel %vm265, %v2940, %v3008
  %v3045 = vsel %vm265, %v2941, %v3009
  %v3046 = vsel %vm265, %v2942, %v3010
  %v3047 = vsel %vm265, %v2855, %v3019
  %v3048 = vsel %vm265, %v2856, %v3020
  %v3049 = vsel %vm265, %v2857, %v3021
  %v3050 = vsel %vm265, %v2858, %v3022
  %v3051 = vsel %vm265, %v2955, %v3031
  %v3052 = vsel %vm265, %v2956, %v3032
  %v3053 = vsel %vm265, %v2957, %v3033
  %v3054 = vsel %vm265, %v2958, %v3034
  %3056 = vset.pattern.permute.xlu0 0
  %3057 = vperm.xlu0 %3056, %v2862
  %v3058 = vpop.permute.xlu0 %3057
  %v3061 = vsel %vm287, %v2860, 0
  %v3064 = vsel %vm265, %v2987, 0
  %v3067 = vsel %vm265, %v2988, 0
  %v3070 = vsel %vm265, %v2989, 0
  %v3073 = vsel %vm265, %v2990, 0
  %v3075 = vand.u32 %v3040, 4294901760
  %3076 = vmatprep.subr.mxu0 %v3075
  %v3077 = vand.u32 %v3039, 4294901760
  %3078 = vmatpush1.msra.mxu0 %v3077
  %v3079 = vand.u32 %v3044, 4294901760
  %3080 = vmatprep.subr.mxu0 %v3079
  %v3081 = vand.u32 %v3043, 4294901760
  %3082 = vmatpush1.msra.mxu0 %v3081
  %v3083 = vand.u32 %v3048, 4294901760
  %3084 = vmatprep.subr.mxu0 %v3083
  %v3085 = vand.u32 %v3047, 4294901760
  %3086 = vmatpush1.msra.mxu0 %v3085
  %v3087 = vand.u32 %v3052, 4294901760
  %3088 = vmatprep.subr.mxu0 %v3087
  %v3089 = vand.u32 %v3051, 4294901760
  %3090 = vmatpush1.msra.mxu0 %v3089
  %v3091 = vand.u32 %v3067, 4294901760
  %3092 = vmatprep.subr.mxu0 %v3091
  %v3093 = vand.u32 %v3064, 4294901760
  %3094 = vmatpush1.msra.mxu0 %v3093
  %3095 = vmatprep.subr.mxu0 0.0
  %3096 = vmatpush1.msra.mxu0 0.0
  %3097 = vmatprep.subr.mxu0 0.0
  %3098 = vmatpush1.msra.mxu0 0.0
  %3099 = vmatprep.subr.mxu0 0.0
  %3100 = vmatpush1.msra.mxu0 0.0
  %3101 = vmatprep.subr.mxu0 0.0
  %3102 = vmatpush1.msra.mxu0 0.0
  %3103 = vmatprep.subr.mxu0 0.0
  %3104 = vmatpush1.msra.mxu0 0.0
  %3105 = vmatprep.subr.mxu0 0.0
  %3106 = vmatpush1.msra.mxu0 0.0
  %3107 = vmatprep.subr.mxu0 0.0
  %3108 = vmatpush1.msra.mxu0 0.0
  %3109 = vmatprep.subr.mxu0 0.0
  %3110 = vmatpush1.msra.mxu0 0.0
  %3111 = vmatprep.subr.mxu0 0.0
  %3112 = vmatpush1.msra.mxu0 0.0
  %3113 = vmatprep.subr.mxu0 0.0
  %3114 = vmatpush1.msra.mxu0 0.0
  %3115 = vmatprep.subr.mxu0 0.0
  %3116 = vmatpush1.msra.mxu0 0.0
  %3117 = vmatprep.subr.mxu0 0.0
  %3118 = vmatpush1.msra.mxu0 0.0
  %3119 = vmatprep.subr.mxu0 0.0
  %3120 = vmatpush1.msra.mxu0 0.0
  %3121 = vmatprep.subr.mxu0 0.0
  %3122 = vmatpush1.msra.mxu0 0.0
  %3123 = vmatprep.subr.mxu0 0.0
  %3124 = vmatpush1.msra.mxu0 0.0
  %3125 = vmatprep.subr.mxu0 0.0
  %3126 = vmatpush1.msra.mxu0 0.0
  %3127 = vmatprep.subr.mxu0 0.0
  %3128 = vmatpush1.msra.mxu0 0.0
  %3129 = vmatprep.subr.mxu0 0.0
  %3130 = vmatpush1.msra.mxu0 0.0
  %3131 = vmatprep.subr.mxu0 0.0
  %3132 = vmatpush1.msra.mxu0 0.0
  %3133 = vmatprep.subr.mxu0 0.0
  %3134 = vmatpush1.msra.mxu0 0.0
  %3135 = vmatprep.subr.mxu0 0.0
  %3136 = vmatpush1.msra.mxu0 0.0
  %3137 = vmatprep.subr.mxu0 0.0
  %3138 = vmatpush1.msra.mxu0 0.0
  %3139 = vmatprep.subr.mxu0 0.0
  %3140 = vmatpush1.msra.mxu0 0.0
  %3141 = vmatprep.subr.mxu0 0.0
  %3142 = vmatpush1.msra.mxu0 0.0
  %3143 = vmatprep.subr.mxu0 0.0
  %3144 = vmatpush1.msra.mxu0 0.0
  %3145 = vmatprep.subr.mxu0 0.0
  %3146 = vmatpush1.msra.mxu0 0.0
  %3147 = vmatprep.subr.mxu0 0.0
  %3148 = vmatpush1.msra.mxu0 0.0
  %3149 = vmatprep.mubr.f32.mxu0 0.0
  %v3150 = vand.u32 %v3061, 4294901760
  %v3151 = vsub.f32 %v3061, %v3150
  %v3152 = vand.u32 %v3151, 4294901760
  %v3153 = vsub.f32 %v3151, %v3152
  %v3154 = vand.u32 %v3153, 4294901760
  %3155 = vmatmul.mubr.f32.gmra.mrb[0].mxu0 %v3154
  %v3156 = vpop.f32.mrb[0].mxu0
  %v3157 = vadd.f32 %v3058, %v3156
  %v3158 = vpop.f32.mrb[0].mxu0
  %v3159 = vadd.f32 %v3058, %v3158
  %3160 = vdwg.mxu0
  %v3161 = vand.u32 %v3040, 4294901760
  %v3162 = vsub.f32 %v3040, %v3161
  %v3163 = vand.u32 %v3162, 4294901760
  %v3164 = vsub.f32 %v3162, %v3163
  %v3165 = vand.u32 %v3164, 4294901760
  %3166 = vmatprep.subr.mxu0 %v3165
  %v3167 = vand.u32 %v3039, 4294901760
  %v3168 = vsub.f32 %v3039, %v3167
  %v3169 = vand.u32 %v3168, 4294901760
  %v3170 = vsub.f32 %v3168, %v3169
  %v3171 = vand.u32 %v3170, 4294901760
  %3172 = vmatpush1.msra.mxu0 %v3171
  %v3173 = vand.u32 %v3044, 4294901760
  %v3174 = vsub.f32 %v3044, %v3173
  %v3175 = vand.u32 %v3174, 4294901760
  %v3176 = vsub.f32 %v3174, %v3175
  %v3177 = vand.u32 %v3176, 4294901760
  %3178 = vmatprep.subr.mxu0 %v3177
  %v3179 = vand.u32 %v3043, 4294901760
  %v3180 = vsub.f32 %v3043, %v3179
  %v3181 = vand.u32 %v3180, 4294901760
  %v3182 = vsub.f32 %v3180, %v3181
  %v3183 = vand.u32 %v3182, 4294901760
  %3184 = vmatpush1.msra.mxu0 %v3183
  %v3185 = vand.u32 %v3048, 4294901760
  %v3186 = vsub.f32 %v3048, %v3185
  %v3187 = vand.u32 %v3186, 4294901760
  %v3188 = vsub.f32 %v3186, %v3187
  %v3189 = vand.u32 %v3188, 4294901760
  %3190 = vmatprep.subr.mxu0 %v3189
  %v3191 = vand.u32 %v3047, 4294901760
  %v3192 = vsub.f32 %v3047, %v3191
  %v3193 = vand.u32 %v3192, 4294901760
  %v3194 = vsub.f32 %v3192, %v3193
  %v3195 = vand.u32 %v3194, 4294901760
  %3196 = vmatpush1.msra.mxu0 %v3195
  %v3197 = vand.u32 %v3052, 4294901760
  %v3198 = vsub.f32 %v3052, %v3197
  %v3199 = vand.u32 %v3198, 4294901760
  %v3200 = vsub.f32 %v3198, %v3199
  %v3201 = vand.u32 %v3200, 4294901760
  %3202 = vmatprep.subr.mxu0 %v3201
  %v3203 = vand.u32 %v3051, 4294901760
  %v3204 = vsub.f32 %v3051, %v3203
  %v3205 = vand.u32 %v3204, 4294901760
  %v3206 = vsub.f32 %v3204, %v3205
  %v3207 = vand.u32 %v3206, 4294901760
  %3208 = vmatpush1.msra.mxu0 %v3207
  %v3209 = vand.u32 %v3067, 4294901760
  %v3210 = vsub.f32 %v3067, %v3209
  %v3211 = vand.u32 %v3210, 4294901760
  %v3212 = vsub.f32 %v3210, %v3211
  %v3213 = vand.u32 %v3212, 4294901760
  %3214 = vmatprep.subr.mxu0 %v3213
  %v3215 = vand.u32 %v3064, 4294901760
  %v3216 = vsub.f32 %v3064, %v3215
  %v3217 = vand.u32 %v3216, 4294901760
  %v3218 = vsub.f32 %v3216, %v3217
  %v3219 = vand.u32 %v3218, 4294901760
  %3220 = vmatpush1.msra.mxu0 %v3219
  %3221 = vmatprep.subr.mxu0 0.0
  %3222 = vmatpush1.msra.mxu0 0.0
  %3223 = vmatprep.subr.mxu0 0.0
  %3224 = vmatpush1.msra.mxu0 0.0
  %3225 = vmatprep.subr.mxu0 0.0
  %3226 = vmatpush1.msra.mxu0 0.0
  %3227 = vmatprep.subr.mxu0 0.0
  %3228 = vmatpush1.msra.mxu0 0.0
  %3229 = vmatprep.subr.mxu0 0.0
  %3230 = vmatpush1.msra.mxu0 0.0
  %3231 = vmatprep.subr.mxu0 0.0
  %3232 = vmatpush1.msra.mxu0 0.0
  %3233 = vmatprep.subr.mxu0 0.0
  %3234 = vmatpush1.msra.mxu0 0.0
  %3235 = vmatprep.subr.mxu0 0.0
  %3236 = vmatpush1.msra.mxu0 0.0
  %3237 = vmatprep.subr.mxu0 0.0
  %3238 = vmatpush1.msra.mxu0 0.0
  %3239 = vmatprep.subr.mxu0 0.0
  %3240 = vmatpush1.msra.mxu0 0.0
  %3241 = vmatprep.subr.mxu0 0.0
  %3242 = vmatpush1.msra.mxu0 0.0
  %3243 = vmatprep.subr.mxu0 0.0
  %3244 = vmatpush1.msra.mxu0 0.0
  %3245 = vmatprep.subr.mxu0 0.0
  %3246 = vmatpush1.msra.mxu0 0.0
  %3247 = vmatprep.subr.mxu0 0.0
  %3248 = vmatpush1.msra.mxu0 0.0
  %3249 = vmatprep.subr.mxu0 0.0
  %3250 = vmatpush1.msra.mxu0 0.0
  %3251 = vmatprep.subr.mxu0 0.0
  %3252 = vmatpush1.msra.mxu0 0.0
  %3253 = vmatprep.subr.mxu0 0.0
  %3254 = vmatpush1.msra.mxu0 0.0
  %3255 = vmatprep.subr.mxu0 0.0
  %3256 = vmatpush1.msra.mxu0 0.0
  %3257 = vmatprep.subr.mxu0 0.0
  %3258 = vmatpush1.msra.mxu0 0.0
  %3259 = vmatprep.subr.mxu0 0.0
  %3260 = vmatpush1.msra.mxu0 0.0
  %3261 = vmatprep.subr.mxu0 0.0
  %3262 = vmatpush1.msra.mxu0 0.0
  %3263 = vmatprep.subr.mxu0 0.0
  %3264 = vmatpush1.msra.mxu0 0.0
  %3265 = vmatprep.subr.mxu0 0.0
  %3266 = vmatpush1.msra.mxu0 0.0
  %3267 = vmatprep.subr.mxu0 0.0
  %3268 = vmatpush1.msra.mxu0 0.0
  %3269 = vmatprep.subr.mxu0 0.0
  %3270 = vmatpush1.msra.mxu0 0.0
  %3271 = vmatprep.subr.mxu0 0.0
  %3272 = vmatpush1.msra.mxu0 0.0
  %3273 = vmatprep.subr.mxu0 0.0
  %3274 = vmatpush1.msra.mxu0 0.0
  %3275 = vmatprep.mubr.f32.mxu0 0.0
  %v3276 = vand.u32 %v3061, 4294901760
  %3277 = vmatmul.mubr.f32.gmra.mrb[0].mxu0 %v3276
  %v3278 = vpop.f32.mrb[0].mxu0
  %v3279 = vadd.f32 %v3157, %v3278
  %v3280 = vpop.f32.mrb[0].mxu0
  %v3281 = vadd.f32 %v3159, %v3280
  %3282 = vdwg.mxu0
  %v3283 = vand.u32 %v3040, 4294901760
  %v3284 = vsub.f32 %v3040, %v3283
  %3285 = vmatprep.subr.mxu0 %v3284
  %v3286 = vand.u32 %v3039, 4294901760
  %v3287 = vsub.f32 %v3039, %v3286
  %3288 = vmatpush1.msra.mxu0 %v3287
  %v3289 = vand.u32 %v3044, 4294901760
  %v3290 = vsub.f32 %v3044, %v3289
  %3291 = vmatprep.subr.mxu0 %v3290
  %v3292 = vand.u32 %v3043, 4294901760
  %v3293 = vsub.f32 %v3043, %v3292
  %3294 = vmatpush1.msra.mxu0 %v3293
  %v3295 = vand.u32 %v3048, 4294901760
  %v3296 = vsub.f32 %v3048, %v3295
  %3297 = vmatprep.subr.mxu0 %v3296
  %v3298 = vand.u32 %v3047, 4294901760
  %v3299 = vsub.f32 %v3047, %v3298
  %3300 = vmatpush1.msra.mxu0 %v3299
  %v3301 = vand.u32 %v3052, 4294901760
  %v3302 = vsub.f32 %v3052, %v3301
  %3303 = vmatprep.subr.mxu0 %v3302
  %v3304 = vand.u32 %v3051, 4294901760
  %v3305 = vsub.f32 %v3051, %v3304
  %3306 = vmatpush1.msra.mxu0 %v3305
  %v3307 = vand.u32 %v3067, 4294901760
  %v3308 = vsub.f32 %v3067, %v3307
  %3309 = vmatprep.subr.mxu0 %v3308
  %v3310 = vand.u32 %v3064, 4294901760
  %v3311 = vsub.f32 %v3064, %v3310
  %3312 = vmatpush1.msra.mxu0 %v3311
  %3313 = vmatprep.subr.mxu0 0.0
  %3314 = vmatpush1.msra.mxu0 0.0
  %3315 = vmatprep.subr.mxu0 0.0
  %3316 = vmatpush1.msra.mxu0 0.0
  %3317 = vmatprep.subr.mxu0 0.0
  %3318 = vmatpush1.msra.mxu0 0.0
  %3319 = vmatprep.subr.mxu0 0.0
  %3320 = vmatpush1.msra.mxu0 0.0
  %3321 = vmatprep.subr.mxu0 0.0
  %3322 = vmatpush1.msra.mxu0 0.0
  %3323 = vmatprep.subr.mxu0 0.0
  %3324 = vmatpush1.msra.mxu0 0.0
  %3325 = vmatprep.subr.mxu0 0.0
  %3326 = vmatpush1.msra.mxu0 0.0
  %3327 = vmatprep.subr.mxu0 0.0
  %3328 = vmatpush1.msra.mxu0 0.0
  %3329 = vmatprep.subr.mxu0 0.0
  %3330 = vmatpush1.msra.mxu0 0.0
  %3331 = vmatprep.subr.mxu0 0.0
  %3332 = vmatpush1.msra.mxu0 0.0
  %3333 = vmatprep.subr.mxu0 0.0
  %3334 = vmatpush1.msra.mxu0 0.0
  %3335 = vmatprep.subr.mxu0 0.0
  %3336 = vmatpush1.msra.mxu0 0.0
  %3337 = vmatprep.subr.mxu0 0.0
  %3338 = vmatpush1.msra.mxu0 0.0
  %3339 = vmatprep.subr.mxu0 0.0
  %3340 = vmatpush1.msra.mxu0 0.0
  %3341 = vmatprep.subr.mxu0 0.0
  %3342 = vmatpush1.msra.mxu0 0.0
  %3343 = vmatprep.subr.mxu0 0.0
  %3344 = vmatpush1.msra.mxu0 0.0
  %3345 = vmatprep.subr.mxu0 0.0
  %3346 = vmatpush1.msra.mxu0 0.0
  %3347 = vmatprep.subr.mxu0 0.0
  %3348 = vmatpush1.msra.mxu0 0.0
  %3349 = vmatprep.subr.mxu0 0.0
  %3350 = vmatpush1.msra.mxu0 0.0
  %3351 = vmatprep.subr.mxu0 0.0
  %3352 = vmatpush1.msra.mxu0 0.0
  %3353 = vmatprep.subr.mxu0 0.0
  %3354 = vmatpush1.msra.mxu0 0.0
  %3355 = vmatprep.subr.mxu0 0.0
  %3356 = vmatpush1.msra.mxu0 0.0
  %3357 = vmatprep.subr.mxu0 0.0
  %3358 = vmatpush1.msra.mxu0 0.0
  %3359 = vmatprep.subr.mxu0 0.0
  %3360 = vmatpush1.msra.mxu0 0.0
  %3361 = vmatprep.subr.mxu0 0.0
  %3362 = vmatpush1.msra.mxu0 0.0
  %3363 = vmatprep.subr.mxu0 0.0
  %3364 = vmatpush1.msra.mxu0 0.0
  %3365 = vmatprep.subr.mxu0 0.0
  %3366 = vmatpush1.msra.mxu0 0.0
  %3367 = vmatprep.mubr.f32.mxu0 0.0
  %v3368 = vand.u32 %v3061, 4294901760
  %v3369 = vsub.f32 %v3061, %v3368
  %3370 = vmatmul.mubr.f32.gmra.mrb[0].mxu0 %v3369
  %v3371 = vpop.f32.mrb[0].mxu0
  %v3372 = vadd.f32 %v3279, %v3371
  %v3373 = vpop.f32.mrb[0].mxu0
  %v3374 = vadd.f32 %v3281, %v3373
  %3375 = vdwg.mxu0
  %v3376 = vand.u32 %v3040, 4294901760
  %3377 = vmatprep.subr.mxu0 %v3376
  %v3378 = vand.u32 %v3039, 4294901760
  %3379 = vmatpush1.msra.mxu0 %v3378
  %v3380 = vand.u32 %v3044, 4294901760
  %3381 = vmatprep.subr.mxu0 %v3380
  %v3382 = vand.u32 %v3043, 4294901760
  %3383 = vmatpush1.msra.mxu0 %v3382
  %v3384 = vand.u32 %v3048, 4294901760
  %3385 = vmatprep.subr.mxu0 %v3384
  %v3386 = vand.u32 %v3047, 4294901760
  %3387 = vmatpush1.msra.mxu0 %v3386
  %v3388 = vand.u32 %v3052, 4294901760
  %3389 = vmatprep.subr.mxu0 %v3388
  %v3390 = vand.u32 %v3051, 4294901760
  %3391 = vmatpush1.msra.mxu0 %v3390
  %v3392 = vand.u32 %v3067, 4294901760
  %3393 = vmatprep.subr.mxu0 %v3392
  %v3394 = vand.u32 %v3064, 4294901760
  %3395 = vmatpush1.msra.mxu0 %v3394
  %3396 = vmatprep.subr.mxu0 0.0
  %3397 = vmatpush1.msra.mxu0 0.0
  %3398 = vmatprep.subr.mxu0 0.0
  %3399 = vmatpush1.msra.mxu0 0.0
  %3400 = vmatprep.subr.mxu0 0.0
  %3401 = vmatpush1.msra.mxu0 0.0
  %3402 = vmatprep.subr.mxu0 0.0
  %3403 = vmatpush1.msra.mxu0 0.0
  %3404 = vmatprep.subr.mxu0 0.0
  %3405 = vmatpush1.msra.mxu0 0.0
  %3406 = vmatprep.subr.mxu0 0.0
  %3407 = vmatpush1.msra.mxu0 0.0
  %3408 = vmatprep.subr.mxu0 0.0
  %3409 = vmatpush1.msra.mxu0 0.0
  %3410 = vmatprep.subr.mxu0 0.0
  %3411 = vmatpush1.msra.mxu0 0.0
  %3412 = vmatprep.subr.mxu0 0.0
  %3413 = vmatpush1.msra.mxu0 0.0
  %3414 = vmatprep.subr.mxu0 0.0
  %3415 = vmatpush1.msra.mxu0 0.0
  %3416 = vmatprep.subr.mxu0 0.0
  %3417 = vmatpush1.msra.mxu0 0.0
  %3418 = vmatprep.subr.mxu0 0.0
  %3419 = vmatpush1.msra.mxu0 0.0
  %3420 = vmatprep.subr.mxu0 0.0
  %3421 = vmatpush1.msra.mxu0 0.0
  %3422 = vmatprep.subr.mxu0 0.0
  %3423 = vmatpush1.msra.mxu0 0.0
  %3424 = vmatprep.subr.mxu0 0.0
  %3425 = vmatpush1.msra.mxu0 0.0
  %3426 = vmatprep.subr.mxu0 0.0
  %3427 = vmatpush1.msra.mxu0 0.0
  %3428 = vmatprep.subr.mxu0 0.0
  %3429 = vmatpush1.msra.mxu0 0.0
  %3430 = vmatprep.subr.mxu0 0.0
  %3431 = vmatpush1.msra.mxu0 0.0
  %3432 = vmatprep.subr.mxu0 0.0
  %3433 = vmatpush1.msra.mxu0 0.0
  %3434 = vmatprep.subr.mxu0 0.0
  %3435 = vmatpush1.msra.mxu0 0.0
  %3436 = vmatprep.subr.mxu0 0.0
  %3437 = vmatpush1.msra.mxu0 0.0
  %3438 = vmatprep.subr.mxu0 0.0
  %3439 = vmatpush1.msra.mxu0 0.0
  %3440 = vmatprep.subr.mxu0 0.0
  %3441 = vmatpush1.msra.mxu0 0.0
  %3442 = vmatprep.subr.mxu0 0.0
  %3443 = vmatpush1.msra.mxu0 0.0
  %3444 = vmatprep.subr.mxu0 0.0
  %3445 = vmatpush1.msra.mxu0 0.0
  %3446 = vmatprep.subr.mxu0 0.0
  %3447 = vmatpush1.msra.mxu0 0.0
  %3448 = vmatprep.subr.mxu0 0.0
  %3449 = vmatpush1.msra.mxu0 0.0
  %3450 = vmatprep.mubr.f32.mxu0 0.0
  %v3451 = vand.u32 %v3061, 4294901760
  %v3452 = vsub.f32 %v3061, %v3451
  %v3453 = vand.u32 %v3452, 4294901760
  %3454 = vmatmul.mubr.f32.gmra.mrb[0].mxu0 %v3453
  %v3455 = vpop.f32.mrb[0].mxu0
  %v3456 = vadd.f32 %v3372, %v3455
  %v3457 = vpop.f32.mrb[0].mxu0
  %v3458 = vadd.f32 %v3374, %v3457
  %3459 = vdwg.mxu0
  %v3460 = vand.u32 %v3040, 4294901760
  %v3461 = vsub.f32 %v3040, %v3460
  %v3462 = vand.u32 %v3461, 4294901760
  %3463 = vmatprep.subr.mxu0 %v3462
  %v3464 = vand.u32 %v3039, 4294901760
  %v3465 = vsub.f32 %v3039, %v3464
  %v3466 = vand.u32 %v3465, 4294901760
  %3467 = vmatpush1.msra.mxu0 %v3466
  %v3468 = vand.u32 %v3044, 4294901760
  %v3469 = vsub.f32 %v3044, %v3468
  %v3470 = vand.u32 %v3469, 4294901760
  %3471 = vmatprep.subr.mxu0 %v3470
  %v3472 = vand.u32 %v3043, 4294901760
  %v3473 = vsub.f32 %v3043, %v3472
  %v3474 = vand.u32 %v3473, 4294901760
  %3475 = vmatpush1.msra.mxu0 %v3474
  %v3476 = vand.u32 %v3048, 4294901760
  %v3477 = vsub.f32 %v3048, %v3476
  %v3478 = vand.u32 %v3477, 4294901760
  %3479 = vmatprep.subr.mxu0 %v3478
  %v3480 = vand.u32 %v3047, 4294901760
  %v3481 = vsub.f32 %v3047, %v3480
  %v3482 = vand.u32 %v3481, 4294901760
  %3483 = vmatpush1.msra.mxu0 %v3482
  %v3484 = vand.u32 %v3052, 4294901760
  %v3485 = vsub.f32 %v3052, %v3484
  %v3486 = vand.u32 %v3485, 4294901760
  %3487 = vmatprep.subr.mxu0 %v3486
  %v3488 = vand.u32 %v3051, 4294901760
  %v3489 = vsub.f32 %v3051, %v3488
  %v3490 = vand.u32 %v3489, 4294901760
  %3491 = vmatpush1.msra.mxu0 %v3490
  %v3492 = vand.u32 %v3067, 4294901760
  %v3493 = vsub.f32 %v3067, %v3492
  %v3494 = vand.u32 %v3493, 4294901760
  %3495 = vmatprep.subr.mxu0 %v3494
  %v3496 = vand.u32 %v3064, 4294901760
  %v3497 = vsub.f32 %v3064, %v3496
  %v3498 = vand.u32 %v3497, 4294901760
  %3499 = vmatpush1.msra.mxu0 %v3498
  %3500 = vmatprep.subr.mxu0 0.0
  %3501 = vmatpush1.msra.mxu0 0.0
  %3502 = vmatprep.subr.mxu0 0.0
  %3503 = vmatpush1.msra.mxu0 0.0
  %3504 = vmatprep.subr.mxu0 0.0
  %3505 = vmatpush1.msra.mxu0 0.0
  %3506 = vmatprep.subr.mxu0 0.0
  %3507 = vmatpush1.msra.mxu0 0.0
  %3508 = vmatprep.subr.mxu0 0.0
  %3509 = vmatpush1.msra.mxu0 0.0
  %3510 = vmatprep.subr.mxu0 0.0
  %3511 = vmatpush1.msra.mxu0 0.0
  %3512 = vmatprep.subr.mxu0 0.0
  %3513 = vmatpush1.msra.mxu0 0.0
  %3514 = vmatprep.subr.mxu0 0.0
  %3515 = vmatpush1.msra.mxu0 0.0
  %3516 = vmatprep.subr.mxu0 0.0
  %3517 = vmatpush1.msra.mxu0 0.0
  %3518 = vmatprep.subr.mxu0 0.0
  %3519 = vmatpush1.msra.mxu0 0.0
  %3520 = vmatprep.subr.mxu0 0.0
  %3521 = vmatpush1.msra.mxu0 0.0
  %3522 = vmatprep.subr.mxu0 0.0
  %3523 = vmatpush1.msra.mxu0 0.0
  %3524 = vmatprep.subr.mxu0 0.0
  %3525 = vmatpush1.msra.mxu0 0.0
  %3526 = vmatprep.subr.mxu0 0.0
  %3527 = vmatpush1.msra.mxu0 0.0
  %3528 = vmatprep.subr.mxu0 0.0
  %3529 = vmatpush1.msra.mxu0 0.0
  %3530 = vmatprep.subr.mxu0 0.0
  %3531 = vmatpush1.msra.mxu0 0.0
  %3532 = vmatprep.subr.mxu0 0.0
  %3533 = vmatpush1.msra.mxu0 0.0
  %3534 = vmatprep.subr.mxu0 0.0
  %3535 = vmatpush1.msra.mxu0 0.0
  %3536 = vmatprep.subr.mxu0 0.0
  %3537 = vmatpush1.msra.mxu0 0.0
  %3538 = vmatprep.subr.mxu0 0.0
  %3539 = vmatpush1.msra.mxu0 0.0
  %3540 = vmatprep.subr.mxu0 0.0
  %3541 = vmatpush1.msra.mxu0 0.0
  %3542 = vmatprep.subr.mxu0 0.0
  %3543 = vmatpush1.msra.mxu0 0.0
  %3544 = vmatprep.subr.mxu0 0.0
  %3545 = vmatpush1.msra.mxu0 0.0
  %3546 = vmatprep.subr.mxu0 0.0
  %3547 = vmatpush1.msra.mxu0 0.0
  %3548 = vmatprep.subr.mxu0 0.0
  %3549 = vmatpush1.msra.mxu0 0.0
  %3550 = vmatprep.subr.mxu0 0.0
  %3551 = vmatpush1.msra.mxu0 0.0
  %3552 = vmatprep.subr.mxu0 0.0
  %3553 = vmatpush1.msra.mxu0 0.0
  %3554 = vmatprep.mubr.f32.mxu0 0.0
  %v3555 = vand.u32 %v3061, 4294901760
  %3556 = vmatmul.mubr.f32.gmra.mrb[0].mxu0 %v3555
  %v3557 = vpop.f32.mrb[0].mxu0
  %v3558 = vadd.f32 %v3456, %v3557
  %v3559 = vpop.f32.mrb[0].mxu0
  %v3560 = vadd.f32 %v3458, %v3559
  %3561 = vdwg.mxu0
  %v3562 = vand.u32 %v3040, 4294901760
  %3563 = vmatprep.subr.mxu0 %v3562
  %v3564 = vand.u32 %v3039, 4294901760
  %3565 = vmatpush1.msra.mxu0 %v3564
  %v3566 = vand.u32 %v3044, 4294901760
  %3567 = vmatprep.subr.mxu0 %v3566
  %v3568 = vand.u32 %v3043, 4294901760
  %3569 = vmatpush1.msra.mxu0 %v3568
  %v3570 = vand.u32 %v3048, 4294901760
  %3571 = vmatprep.subr.mxu0 %v3570
  %v3572 = vand.u32 %v3047, 4294901760
  %3573 = vmatpush1.msra.mxu0 %v3572
  %v3574 = vand.u32 %v3052, 4294901760
  %3575 = vmatprep.subr.mxu0 %v3574
  %v3576 = vand.u32 %v3051, 4294901760
  %3577 = vmatpush1.msra.mxu0 %v3576
  %v3578 = vand.u32 %v3067, 4294901760
  %3579 = vmatprep.subr.mxu0 %v3578
  %v3580 = vand.u32 %v3064, 4294901760
  %3581 = vmatpush1.msra.mxu0 %v3580
  %3582 = vmatprep.subr.mxu0 0.0
  %3583 = vmatpush1.msra.mxu0 0.0
  %3584 = vmatprep.subr.mxu0 0.0
  %3585 = vmatpush1.msra.mxu0 0.0
  %3586 = vmatprep.subr.mxu0 0.0
  %3587 = vmatpush1.msra.mxu0 0.0
  %3588 = vmatprep.subr.mxu0 0.0
  %3589 = vmatpush1.msra.mxu0 0.0
  %3590 = vmatprep.subr.mxu0 0.0
  %3591 = vmatpush1.msra.mxu0 0.0
  %3592 = vmatprep.subr.mxu0 0.0
  %3593 = vmatpush1.msra.mxu0 0.0
  %3594 = vmatprep.subr.mxu0 0.0
  %3595 = vmatpush1.msra.mxu0 0.0
  %3596 = vmatprep.subr.mxu0 0.0
  %3597 = vmatpush1.msra.mxu0 0.0
  %3598 = vmatprep.subr.mxu0 0.0
  %3599 = vmatpush1.msra.mxu0 0.0
  %3600 = vmatprep.subr.mxu0 0.0
  %3601 = vmatpush1.msra.mxu0 0.0
  %3602 = vmatprep.subr.mxu0 0.0
  %3603 = vmatpush1.msra.mxu0 0.0
  %3604 = vmatprep.subr.mxu0 0.0
  %3605 = vmatpush1.msra.mxu0 0.0
  %3606 = vmatprep.subr.mxu0 0.0
  %3607 = vmatpush1.msra.mxu0 0.0
  %3608 = vmatprep.subr.mxu0 0.0
  %3609 = vmatpush1.msra.mxu0 0.0
  %3610 = vmatprep.subr.mxu0 0.0
  %3611 = vmatpush1.msra.mxu0 0.0
  %3612 = vmatprep.subr.mxu0 0.0
  %3613 = vmatpush1.msra.mxu0 0.0
  %3614 = vmatprep.subr.mxu0 0.0
  %3615 = vmatpush1.msra.mxu0 0.0
  %3616 = vmatprep.subr.mxu0 0.0
  %3617 = vmatpush1.msra.mxu0 0.0
  %3618 = vmatprep.subr.mxu0 0.0
  %3619 = vmatpush1.msra.mxu0 0.0
  %3620 = vmatprep.subr.mxu0 0.0
  %3621 = vmatpush1.msra.mxu0 0.0
  %3622 = vmatprep.subr.mxu0 0.0
  %3623 = vmatpush1.msra.mxu0 0.0
  %3624 = vmatprep.subr.mxu0 0.0
  %3625 = vmatpush1.msra.mxu0 0.0
  %3626 = vmatprep.subr.mxu0 0.0
  %3627 = vmatpush1.msra.mxu0 0.0
  %3628 = vmatprep.subr.mxu0 0.0
  %3629 = vmatpush1.msra.mxu0 0.0
  %3630 = vmatprep.subr.mxu0 0.0
  %3631 = vmatpush1.msra.mxu0 0.0
  %3632 = vmatprep.subr.mxu0 0.0
  %3633 = vmatpush1.msra.mxu0 0.0
  %3634 = vmatprep.subr.mxu0 0.0
  %3635 = vmatpush1.msra.mxu0 0.0
  %3636 = vmatprep.mubr.f32.mxu0 0.0
  %v3637 = vand.u32 %v3061, 4294901760
  %3638 = vmatmul.mubr.f32.gmra.mrb[0].mxu0 %v3637
  %v3639 = vpop.f32.mrb[0].mxu0
  %v3640 = vadd.f32 %v3558, %v3639
  %v3641 = vpop.f32.mrb[0].mxu0
  %v3642 = vadd.f32 %v3560, %v3641
  %3643 = vdwg.mxu0
  %v3644 = vand.u32 %v3042, 4294901760
  %3645 = vmatprep.subr.mxu0 %v3644
  %v3646 = vand.u32 %v3041, 4294901760
  %3647 = vmatpush1.msra.mxu0 %v3646
  %v3648 = vand.u32 %v3046, 4294901760
  %3649 = vmatprep.subr.mxu0 %v3648
  %v3650 = vand.u32 %v3045, 4294901760
  %3651 = vmatpush1.msra.mxu0 %v3650
  %v3652 = vand.u32 %v3050, 4294901760
  %3653 = vmatprep.subr.mxu0 %v3652
  %v3654 = vand.u32 %v3049, 4294901760
  %3655 = vmatpush1.msra.mxu0 %v3654
  %v3656 = vand.u32 %v3054, 4294901760
  %3657 = vmatprep.subr.mxu0 %v3656
  %v3658 = vand.u32 %v3053, 4294901760
  %3659 = vmatpush1.msra.mxu0 %v3658
  %v3660 = vand.u32 %v3073, 4294901760
  %3661 = vmatprep.subr.mxu0 %v3660
  %v3662 = vand.u32 %v3070, 4294901760
  %3663 = vmatpush1.msra.mxu0 %v3662
  %3664 = vmatprep.subr.mxu0 0.0
  %3665 = vmatpush1.msra.mxu0 0.0
  %3666 = vmatprep.subr.mxu0 0.0
  %3667 = vmatpush1.msra.mxu0 0.0
  %3668 = vmatprep.subr.mxu0 0.0
  %3669 = vmatpush1.msra.mxu0 0.0
  %3670 = vmatprep.subr.mxu0 0.0
  %3671 = vmatpush1.msra.mxu0 0.0
  %3672 = vmatprep.subr.mxu0 0.0
  %3673 = vmatpush1.msra.mxu0 0.0
  %3674 = vmatprep.subr.mxu0 0.0
  %3675 = vmatpush1.msra.mxu0 0.0
  %3676 = vmatprep.subr.mxu0 0.0
  %3677 = vmatpush1.msra.mxu0 0.0
  %3678 = vmatprep.subr.mxu0 0.0
  %3679 = vmatpush1.msra.mxu0 0.0
  %3680 = vmatprep.subr.mxu0 0.0
  %3681 = vmatpush1.msra.mxu0 0.0
  %3682 = vmatprep.subr.mxu0 0.0
  %3683 = vmatpush1.msra.mxu0 0.0
  %3684 = vmatprep.subr.mxu0 0.0
  %3685 = vmatpush1.msra.mxu0 0.0
  %3686 = vmatprep.subr.mxu0 0.0
  %3687 = vmatpush1.msra.mxu0 0.0
  %3688 = vmatprep.subr.mxu0 0.0
  %3689 = vmatpush1.msra.mxu0 0.0
  %3690 = vmatprep.subr.mxu0 0.0
  %3691 = vmatpush1.msra.mxu0 0.0
  %3692 = vmatprep.subr.mxu0 0.0
  %3693 = vmatpush1.msra.mxu0 0.0
  %3694 = vmatprep.subr.mxu0 0.0
  %3695 = vmatpush1.msra.mxu0 0.0
  %3696 = vmatprep.subr.mxu0 0.0
  %3697 = vmatpush1.msra.mxu0 0.0
  %3698 = vmatprep.subr.mxu0 0.0
  %3699 = vmatpush1.msra.mxu0 0.0
  %3700 = vmatprep.subr.mxu0 0.0
  %3701 = vmatpush1.msra.mxu0 0.0
  %3702 = vmatprep.subr.mxu0 0.0
  %3703 = vmatpush1.msra.mxu0 0.0
  %3704 = vmatprep.subr.mxu0 0.0
  %3705 = vmatpush1.msra.mxu0 0.0
  %3706 = vmatprep.subr.mxu0 0.0
  %3707 = vmatpush1.msra.mxu0 0.0
  %3708 = vmatprep.subr.mxu0 0.0
  %3709 = vmatpush1.msra.mxu0 0.0
  %3710 = vmatprep.subr.mxu0 0.0
  %3711 = vmatpush1.msra.mxu0 0.0
  %3712 = vmatprep.subr.mxu0 0.0
  %3713 = vmatpush1.msra.mxu0 0.0
  %3714 = vmatprep.subr.mxu0 0.0
  %3715 = vmatpush1.msra.mxu0 0.0
  %3716 = vmatprep.subr.mxu0 0.0
  %3717 = vmatpush1.msra.mxu0 0.0
  %3718 = vmatprep.mubr.f32.mxu0 0.0
  %v3719 = vand.u32 %v3061, 4294901760
  %v3720 = vsub.f32 %v3061, %v3719
  %v3721 = vand.u32 %v3720, 4294901760
  %v3722 = vsub.f32 %v3720, %v3721
  %v3723 = vand.u32 %v3722, 4294901760
  %3724 = vmatmul.mubr.f32.gmra.mrb[0].mxu0 %v3723
  %v3725 = vpop.f32.mrb[0].mxu0
  %v3726 = vadd.f32 %v3058, %v3725
  %v3727 = vpop.f32.mrb[0].mxu0
  %v3728 = vadd.f32 %v3058, %v3727
  %3729 = vdwg.mxu0
  %v3730 = vand.u32 %v3042, 4294901760
  %v3731 = vsub.f32 %v3042, %v3730
  %v3732 = vand.u32 %v3731, 4294901760
  %v3733 = vsub.f32 %v3731, %v3732
  %v3734 = vand.u32 %v3733, 4294901760
  %3735 = vmatprep.subr.mxu0 %v3734
  %v3736 = vand.u32 %v3041, 4294901760
  %v3737 = vsub.f32 %v3041, %v3736
  %v3738 = vand.u32 %v3737, 4294901760
  %v3739 = vsub.f32 %v3737, %v3738
  %v3740 = vand.u32 %v3739, 4294901760
  %3741 = vmatpush1.msra.mxu0 %v3740
  %v3742 = vand.u32 %v3046, 4294901760
  %v3743 = vsub.f32 %v3046, %v3742
  %v3744 = vand.u32 %v3743, 4294901760
  %v3745 = vsub.f32 %v3743, %v3744
  %v3746 = vand.u32 %v3745, 4294901760
  %3747 = vmatprep.subr.mxu0 %v3746
  %v3748 = vand.u32 %v3045, 4294901760
  %v3749 = vsub.f32 %v3045, %v3748
  %v3750 = vand.u32 %v3749, 4294901760
  %v3751 = vsub.f32 %v3749, %v3750
  %v3752 = vand.u32 %v3751, 4294901760
  %3753 = vmatpush1.msra.mxu0 %v3752
  %v3754 = vand.u32 %v3050, 4294901760
  %v3755 = vsub.f32 %v3050, %v3754
  %v3756 = vand.u32 %v3755, 4294901760
  %v3757 = vsub.f32 %v3755, %v3756
  %v3758 = vand.u32 %v3757, 4294901760
  %3759 = vmatprep.subr.mxu0 %v3758
  %v3760 = vand.u32 %v3049, 4294901760
  %v3761 = vsub.f32 %v3049, %v3760
  %v3762 = vand.u32 %v3761, 4294901760
  %v3763 = vsub.f32 %v3761, %v3762
  %v3764 = vand.u32 %v3763, 4294901760
  %3765 = vmatpush1.msra.mxu0 %v3764
  %v3766 = vand.u32 %v3054, 4294901760
  %v3767 = vsub.f32 %v3054, %v3766
  %v3768 = vand.u32 %v3767, 4294901760
  %v3769 = vsub.f32 %v3767, %v3768
  %v3770 = vand.u32 %v3769, 4294901760
  %3771 = vmatprep.subr.mxu0 %v3770
  %v3772 = vand.u32 %v3053, 4294901760
  %v3773 = vsub.f32 %v3053, %v3772
  %v3774 = vand.u32 %v3773, 4294901760
  %v3775 = vsub.f32 %v3773, %v3774
  %v3776 = vand.u32 %v3775, 4294901760
  %3777 = vmatpush1.msra.mxu0 %v3776
  %v3778 = vand.u32 %v3073, 4294901760
  %v3779 = vsub.f32 %v3073, %v3778
  %v3780 = vand.u32 %v3779, 4294901760
  %v3781 = vsub.f32 %v3779, %v3780
  %v3782 = vand.u32 %v3781, 4294901760
  %3783 = vmatprep.subr.mxu0 %v3782
  %v3784 = vand.u32 %v3070, 4294901760
  %v3785 = vsub.f32 %v3070, %v3784
  %v3786 = vand.u32 %v3785, 4294901760
  %v3787 = vsub.f32 %v3785, %v3786
  %v3788 = vand.u32 %v3787, 4294901760
  %3789 = vmatpush1.msra.mxu0 %v3788
  %3790 = vmatprep.subr.mxu0 0.0
  %3791 = vmatpush1.msra.mxu0 0.0
  %3792 = vmatprep.subr.mxu0 0.0
  %3793 = vmatpush1.msra.mxu0 0.0
  %3794 = vmatprep.subr.mxu0 0.0
  %3795 = vmatpush1.msra.mxu0 0.0
  %3796 = vmatprep.subr.mxu0 0.0
  %3797 = vmatpush1.msra.mxu0 0.0
  %3798 = vmatprep.subr.mxu0 0.0
  %3799 = vmatpush1.msra.mxu0 0.0
  %3800 = vmatprep.subr.mxu0 0.0
  %3801 = vmatpush1.msra.mxu0 0.0
  %3802 = vmatprep.subr.mxu0 0.0
  %3803 = vmatpush1.msra.mxu0 0.0
  %3804 = vmatprep.subr.mxu0 0.0
  %3805 = vmatpush1.msra.mxu0 0.0
  %3806 = vmatprep.subr.mxu0 0.0
  %3807 = vmatpush1.msra.mxu0 0.0
  %3808 = vmatprep.subr.mxu0 0.0
  %3809 = vmatpush1.msra.mxu0 0.0
  %3810 = vmatprep.subr.mxu0 0.0
  %3811 = vmatpush1.msra.mxu0 0.0
  %3812 = vmatprep.subr.mxu0 0.0
  %3813 = vmatpush1.msra.mxu0 0.0
  %3814 = vmatprep.subr.mxu0 0.0
  %3815 = vmatpush1.msra.mxu0 0.0
  %3816 = vmatprep.subr.mxu0 0.0
  %3817 = vmatpush1.msra.mxu0 0.0
  %3818 = vmatprep.subr.mxu0 0.0
  %3819 = vmatpush1.msra.mxu0 0.0
  %3820 = vmatprep.subr.mxu0 0.0
  %3821 = vmatpush1.msra.mxu0 0.0
  %3822 = vmatprep.subr.mxu0 0.0
  %3823 = vmatpush1.msra.mxu0 0.0
  %3824 = vmatprep.subr.mxu0 0.0
  %3825 = vmatpush1.msra.mxu0 0.0
  %3826 = vmatprep.subr.mxu0 0.0
  %3827 = vmatpush1.msra.mxu0 0.0
  %3828 = vmatprep.subr.mxu0 0.0
  %3829 = vmatpush1.msra.mxu0 0.0
  %3830 = vmatprep.subr.mxu0 0.0
  %3831 = vmatpush1.msra.mxu0 0.0
  %3832 = vmatprep.subr.mxu0 0.0
  %3833 = vmatpush1.msra.mxu0 0.0
  %3834 = vmatprep.subr.mxu0 0.0
  %3835 = vmatpush1.msra.mxu0 0.0
  %3836 = vmatprep.subr.mxu0 0.0
  %3837 = vmatpush1.msra.mxu0 0.0
  %3838 = vmatprep.subr.mxu0 0.0
  %3839 = vmatpush1.msra.mxu0 0.0
  %3840 = vmatprep.subr.mxu0 0.0
  %3841 = vmatpush1.msra.mxu0 0.0
  %3842 = vmatprep.subr.mxu0 0.0
  %3843 = vmatpush1.msra.mxu0 0.0
  %3844 = vmatprep.mubr.f32.mxu0 0.0
  %v3845 = vand.u32 %v3061, 4294901760
  %3846 = vmatmul.mubr.f32.gmra.mrb[0].mxu0 %v3845
  %v3847 = vpop.f32.mrb[0].mxu0
  %v3848 = vadd.f32 %v3726, %v3847
  %v3849 = vpop.f32.mrb[0].mxu0
  %v3850 = vadd.f32 %v3728, %v3849
  %3851 = vdwg.mxu0
  %v3852 = vand.u32 %v3042, 4294901760
  %v3853 = vsub.f32 %v3042, %v3852
  %3854 = vmatprep.subr.mxu0 %v3853
  %v3855 = vand.u32 %v3041, 4294901760
  %v3856 = vsub.f32 %v3041, %v3855
  %3857 = vmatpush1.msra.mxu0 %v3856
  %v3858 = vand.u32 %v3046, 4294901760
  %v3859 = vsub.f32 %v3046, %v3858
  %3860 = vmatprep.subr.mxu0 %v3859
  %v3861 = vand.u32 %v3045, 4294901760
  %v3862 = vsub.f32 %v3045, %v3861
  %3863 = vmatpush1.msra.mxu0 %v3862
  %v3864 = vand.u32 %v3050, 4294901760
  %v3865 = vsub.f32 %v3050, %v3864
  %3866 = vmatprep.subr.mxu0 %v3865
  %v3867 = vand.u32 %v3049, 4294901760
  %v3868 = vsub.f32 %v3049, %v3867
  %3869 = vmatpush1.msra.mxu0 %v3868
  %v3870 = vand.u32 %v3054, 4294901760
  %v3871 = vsub.f32 %v3054, %v3870
  %3872 = vmatprep.subr.mxu0 %v3871
  %v3873 = vand.u32 %v3053, 4294901760
  %v3874 = vsub.f32 %v3053, %v3873
  %3875 = vmatpush1.msra.mxu0 %v3874
  %v3876 = vand.u32 %v3073, 4294901760
  %v3877 = vsub.f32 %v3073, %v3876
  %3878 = vmatprep.subr.mxu0 %v3877
  %v3879 = vand.u32 %v3070, 4294901760
  %v3880 = vsub.f32 %v3070, %v3879
  %3881 = vmatpush1.msra.mxu0 %v3880
  %3882 = vmatprep.subr.mxu0 0.0
  %3883 = vmatpush1.msra.mxu0 0.0
  %3884 = vmatprep.subr.mxu0 0.0
  %3885 = vmatpush1.msra.mxu0 0.0
  %3886 = vmatprep.subr.mxu0 0.0
  %3887 = vmatpush1.msra.mxu0 0.0
  %3888 = vmatprep.subr.mxu0 0.0
  %3889 = vmatpush1.msra.mxu0 0.0
  %3890 = vmatprep.subr.mxu0 0.0
  %3891 = vmatpush1.msra.mxu0 0.0
  %3892 = vmatprep.subr.mxu0 0.0
  %3893 = vmatpush1.msra.mxu0 0.0
  %3894 = vmatprep.subr.mxu0 0.0
  %3895 = vmatpush1.msra.mxu0 0.0
  %3896 = vmatprep.subr.mxu0 0.0
  %3897 = vmatpush1.msra.mxu0 0.0
  %3898 = vmatprep.subr.mxu0 0.0
  %3899 = vmatpush1.msra.mxu0 0.0
  %3900 = vmatprep.subr.mxu0 0.0
  %3901 = vmatpush1.msra.mxu0 0.0
  %3902 = vmatprep.subr.mxu0 0.0
  %3903 = vmatpush1.msra.mxu0 0.0
  %3904 = vmatprep.subr.mxu0 0.0
  %3905 = vmatpush1.msra.mxu0 0.0
  %3906 = vmatprep.subr.mxu0 0.0
  %3907 = vmatpush1.msra.mxu0 0.0
  %3908 = vmatprep.subr.mxu0 0.0
  %3909 = vmatpush1.msra.mxu0 0.0
  %3910 = vmatprep.subr.mxu0 0.0
  %3911 = vmatpush1.msra.mxu0 0.0
  %3912 = vmatprep.subr.mxu0 0.0
  %3913 = vmatpush1.msra.mxu0 0.0
  %3914 = vmatprep.subr.mxu0 0.0
  %3915 = vmatpush1.msra.mxu0 0.0
  %3916 = vmatprep.subr.mxu0 0.0
  %3917 = vmatpush1.msra.mxu0 0.0
  %3918 = vmatprep.subr.mxu0 0.0
  %3919 = vmatpush1.msra.mxu0 0.0
  %3920 = vmatprep.subr.mxu0 0.0
  %3921 = vmatpush1.msra.mxu0 0.0
  %3922 = vmatprep.subr.mxu0 0.0
  %3923 = vmatpush1.msra.mxu0 0.0
  %3924 = vmatprep.subr.mxu0 0.0
  %3925 = vmatpush1.msra.mxu0 0.0
  %3926 = vmatprep.subr.mxu0 0.0
  %3927 = vmatpush1.msra.mxu0 0.0
  %3928 = vmatprep.subr.mxu0 0.0
  %3929 = vmatpush1.msra.mxu0 0.0
  %3930 = vmatprep.subr.mxu0 0.0
  %3931 = vmatpush1.msra.mxu0 0.0
  %3932 = vmatprep.subr.mxu0 0.0
  %3933 = vmatpush1.msra.mxu0 0.0
  %3934 = vmatprep.subr.mxu0 0.0
  %3935 = vmatpush1.msra.mxu0 0.0
  %3936 = vmatprep.mubr.f32.mxu0 0.0
  %v3937 = vand.u32 %v3061, 4294901760
  %v3938 = vsub.f32 %v3061, %v3937
  %3939 = vmatmul.mubr.f32.gmra.mrb[0].mxu0 %v3938
  %v3940 = vpop.f32.mrb[0].mxu0
  %v3941 = vadd.f32 %v3848, %v3940
  %v3942 = vpop.f32.mrb[0].mxu0
  %v3943 = vadd.f32 %v3850, %v3942
  %3944 = vdwg.mxu0
  %v3945 = vand.u32 %v3042, 4294901760
  %3946 = vmatprep.subr.mxu0 %v3945
  %v3947 = vand.u32 %v3041, 4294901760
  %3948 = vmatpush1.msra.mxu0 %v3947
  %v3949 = vand.u32 %v3046, 4294901760
  %3950 = vmatprep.subr.mxu0 %v3949
  %v3951 = vand.u32 %v3045, 4294901760
  %3952 = vmatpush1.msra.mxu0 %v3951
  %v3953 = vand.u32 %v3050, 4294901760
  %3954 = vmatprep.subr.mxu0 %v3953
  %v3955 = vand.u32 %v3049, 4294901760
  %3956 = vmatpush1.msra.mxu0 %v3955
  %v3957 = vand.u32 %v3054, 4294901760
  %3958 = vmatprep.subr.mxu0 %v3957
  %v3959 = vand.u32 %v3053, 4294901760
  %3960 = vmatpush1.msra.mxu0 %v3959
  %v3961 = vand.u32 %v3073, 4294901760
  %3962 = vmatprep.subr.mxu0 %v3961
  %v3963 = vand.u32 %v3070, 4294901760
  %3964 = vmatpush1.msra.mxu0 %v3963
  %3965 = vmatprep.subr.mxu0 0.0
  %3966 = vmatpush1.msra.mxu0 0.0
  %3967 = vmatprep.subr.mxu0 0.0
  %3968 = vmatpush1.msra.mxu0 0.0
  %3969 = vmatprep.subr.mxu0 0.0
  %3970 = vmatpush1.msra.mxu0 0.0
  %3971 = vmatprep.subr.mxu0 0.0
  %3972 = vmatpush1.msra.mxu0 0.0
  %3973 = vmatprep.subr.mxu0 0.0
  %3974 = vmatpush1.msra.mxu0 0.0
  %3975 = vmatprep.subr.mxu0 0.0
  %3976 = vmatpush1.msra.mxu0 0.0
  %3977 = vmatprep.subr.mxu0 0.0
  %3978 = vmatpush1.msra.mxu0 0.0
  %3979 = vmatprep.subr.mxu0 0.0
  %3980 = vmatpush1.msra.mxu0 0.0
  %3981 = vmatprep.subr.mxu0 0.0
  %3982 = vmatpush1.msra.mxu0 0.0
  %3983 = vmatprep.subr.mxu0 0.0
  %3984 = vmatpush1.msra.mxu0 0.0
  %3985 = vmatprep.subr.mxu0 0.0
  %3986 = vmatpush1.msra.mxu0 0.0
  %3987 = vmatprep.subr.mxu0 0.0
  %3988 = vmatpush1.msra.mxu0 0.0
  %3989 = vmatprep.subr.mxu0 0.0
  %3990 = vmatpush1.msra.mxu0 0.0
  %3991 = vmatprep.subr.mxu0 0.0
  %3992 = vmatpush1.msra.mxu0 0.0
  %3993 = vmatprep.subr.mxu0 0.0
  %3994 = vmatpush1.msra.mxu0 0.0
  %3995 = vmatprep.subr.mxu0 0.0
  %3996 = vmatpush1.msra.mxu0 0.0
  %3997 = vmatprep.subr.mxu0 0.0
  %3998 = vmatpush1.msra.mxu0 0.0
  %3999 = vmatprep.subr.mxu0 0.0
  %4000 = vmatpush1.msra.mxu0 0.0
  %4001 = vmatprep.subr.mxu0 0.0
  %4002 = vmatpush1.msra.mxu0 0.0
  %4003 = vmatprep.subr.mxu0 0.0
  %4004 = vmatpush1.msra.mxu0 0.0
  %4005 = vmatprep.subr.mxu0 0.0
  %4006 = vmatpush1.msra.mxu0 0.0
  %4007 = vmatprep.subr.mxu0 0.0
  %4008 = vmatpush1.msra.mxu0 0.0
  %4009 = vmatprep.subr.mxu0 0.0
  %4010 = vmatpush1.msra.mxu0 0.0
  %4011 = vmatprep.subr.mxu0 0.0
  %4012 = vmatpush1.msra.mxu0 0.0
  %4013 = vmatprep.subr.mxu0 0.0
  %4014 = vmatpush1.msra.mxu0 0.0
  %4015 = vmatprep.subr.mxu0 0.0
  %4016 = vmatpush1.msra.mxu0 0.0
  %4017 = vmatprep.subr.mxu0 0.0
  %4018 = vmatpush1.msra.mxu0 0.0
  %4019 = vmatprep.mubr.f32.mxu0 0.0
  %v4020 = vand.u32 %v3061, 4294901760
  %v4021 = vsub.f32 %v3061, %v4020
  %v4022 = vand.u32 %v4021, 4294901760
  %4023 = vmatmul.mubr.f32.gmra.mrb[0].mxu0 %v4022
  %v4024 = vpop.f32.mrb[0].mxu0
  %v4025 = vadd.f32 %v3941, %v4024
  %v4026 = vpop.f32.mrb[0].mxu0
  %v4027 = vadd.f32 %v3943, %v4026
  %4028 = vdwg.mxu0
  %v4029 = vand.u32 %v3042, 4294901760
  %v4030 = vsub.f32 %v3042, %v4029
  %v4031 = vand.u32 %v4030, 4294901760
  %4032 = vmatprep.subr.mxu0 %v4031
  %v4033 = vand.u32 %v3041, 4294901760
  %v4034 = vsub.f32 %v3041, %v4033
  %v4035 = vand.u32 %v4034, 4294901760
  %4036 = vmatpush1.msra.mxu0 %v4035
  %v4037 = vand.u32 %v3046, 4294901760
  %v4038 = vsub.f32 %v3046, %v4037
  %v4039 = vand.u32 %v4038, 4294901760
  %4040 = vmatprep.subr.mxu0 %v4039
  %v4041 = vand.u32 %v3045, 4294901760
  %v4042 = vsub.f32 %v3045, %v4041
  %v4043 = vand.u32 %v4042, 4294901760
  %4044 = vmatpush1.msra.mxu0 %v4043
  %v4045 = vand.u32 %v3050, 4294901760
  %v4046 = vsub.f32 %v3050, %v4045
  %v4047 = vand.u32 %v4046, 4294901760
  %4048 = vmatprep.subr.mxu0 %v4047
  %v4049 = vand.u32 %v3049, 4294901760
  %v4050 = vsub.f32 %v3049, %v4049
  %v4051 = vand.u32 %v4050, 4294901760
  %4052 = vmatpush1.msra.mxu0 %v4051
  %v4053 = vand.u32 %v3054, 4294901760
  %v4054 = vsub.f32 %v3054, %v4053
  %v4055 = vand.u32 %v4054, 4294901760
  %4056 = vmatprep.subr.mxu0 %v4055
  %v4057 = vand.u32 %v3053, 4294901760
  %v4058 = vsub.f32 %v3053, %v4057
  %v4059 = vand.u32 %v4058, 4294901760
  %4060 = vmatpush1.msra.mxu0 %v4059
  %v4061 = vand.u32 %v3073, 4294901760
  %v4062 = vsub.f32 %v3073, %v4061
  %v4063 = vand.u32 %v4062, 4294901760
  %4064 = vmatprep.subr.mxu0 %v4063
  %v4065 = vand.u32 %v3070, 4294901760
  %v4066 = vsub.f32 %v3070, %v4065
  %v4067 = vand.u32 %v4066, 4294901760
  %4068 = vmatpush1.msra.mxu0 %v4067
  %4069 = vmatprep.subr.mxu0 0.0
  %4070 = vmatpush1.msra.mxu0 0.0
  %4071 = vmatprep.subr.mxu0 0.0
  %4072 = vmatpush1.msra.mxu0 0.0
  %4073 = vmatprep.subr.mxu0 0.0
  %4074 = vmatpush1.msra.mxu0 0.0
  %4075 = vmatprep.subr.mxu0 0.0
  %4076 = vmatpush1.msra.mxu0 0.0
  %4077 = vmatprep.subr.mxu0 0.0
  %4078 = vmatpush1.msra.mxu0 0.0
  %4079 = vmatprep.subr.mxu0 0.0
  %4080 = vmatpush1.msra.mxu0 0.0
  %4081 = vmatprep.subr.mxu0 0.0
  %4082 = vmatpush1.msra.mxu0 0.0
  %4083 = vmatprep.subr.mxu0 0.0
  %4084 = vmatpush1.msra.mxu0 0.0
  %4085 = vmatprep.subr.mxu0 0.0
  %4086 = vmatpush1.msra.mxu0 0.0
  %4087 = vmatprep.subr.mxu0 0.0
  %4088 = vmatpush1.msra.mxu0 0.0
  %4089 = vmatprep.subr.mxu0 0.0
  %4090 = vmatpush1.msra.mxu0 0.0
  %4091 = vmatprep.subr.mxu0 0.0
  %4092 = vmatpush1.msra.mxu0 0.0
  %4093 = vmatprep.subr.mxu0 0.0
  %4094 = vmatpush1.msra.mxu0 0.0
  %4095 = vmatprep.subr.mxu0 0.0
  %4096 = vmatpush1.msra.mxu0 0.0
  %4097 = vmatprep.subr.mxu0 0.0
  %4098 = vmatpush1.msra.mxu0 0.0
  %4099 = vmatprep.subr.mxu0 0.0
  %4100 = vmatpush1.msra.mxu0 0.0
  %4101 = vmatprep.subr.mxu0 0.0
  %4102 = vmatpush1.msra.mxu0 0.0
  %4103 = vmatprep.subr.mxu0 0.0
  %4104 = vmatpush1.msra.mxu0 0.0
  %4105 = vmatprep.subr.mxu0 0.0
  %4106 = vmatpush1.msra.mxu0 0.0
  %4107 = vmatprep.subr.mxu0 0.0
  %4108 = vmatpush1.msra.mxu0 0.0
  %4109 = vmatprep.subr.mxu0 0.0
  %4110 = vmatpush1.msra.mxu0 0.0
  %4111 = vmatprep.subr.mxu0 0.0
  %4112 = vmatpush1.msra.mxu0 0.0
  %4113 = vmatprep.subr.mxu0 0.0
  %4114 = vmatpush1.msra.mxu0 0.0
  %4115 = vmatprep.subr.mxu0 0.0
  %4116 = vmatpush1.msra.mxu0 0.0
  %4117 = vmatprep.subr.mxu0 0.0
  %4118 = vmatpush1.msra.mxu0 0.0
  %4119 = vmatprep.subr.mxu0 0.0
  %4120 = vmatpush1.msra.mxu0 0.0
  %4121 = vmatprep.subr.mxu0 0.0
  %4122 = vmatpush1.msra.mxu0 0.0
  %4123 = vmatprep.mubr.f32.mxu0 0.0
  %v4124 = vand.u32 %v3061, 4294901760
  %4125 = vmatmul.mubr.f32.gmra.mrb[0].mxu0 %v4124
  %v4126 = vpop.f32.mrb[0].mxu0
  %v4127 = vadd.f32 %v4025, %v4126
  %v4128 = vpop.f32.mrb[0].mxu0
  %v4129 = vadd.f32 %v4027, %v4128
  %4130 = vdwg.mxu0
  %v4131 = vand.u32 %v3042, 4294901760
  %4132 = vmatprep.subr.mxu0 %v4131
  %v4133 = vand.u32 %v3041, 4294901760
  %4134 = vmatpush1.msra.mxu0 %v4133
  %v4135 = vand.u32 %v3046, 4294901760
  %4136 = vmatprep.subr.mxu0 %v4135
  %v4137 = vand.u32 %v3045, 4294901760
  %4138 = vmatpush1.msra.mxu0 %v4137
  %v4139 = vand.u32 %v3050, 4294901760
  %4140 = vmatprep.subr.mxu0 %v4139
  %v4141 = vand.u32 %v3049, 4294901760
  %4142 = vmatpush1.msra.mxu0 %v4141
  %v4143 = vand.u32 %v3054, 4294901760
  %4144 = vmatprep.subr.mxu0 %v4143
  %v4145 = vand.u32 %v3053, 4294901760
  %4146 = vmatpush1.msra.mxu0 %v4145
  %v4147 = vand.u32 %v3073, 4294901760
  %4148 = vmatprep.subr.mxu0 %v4147
  %v4149 = vand.u32 %v3070, 4294901760
  %4150 = vmatpush1.msra.mxu0 %v4149
  %4151 = vmatprep.subr.mxu0 0.0
  %4152 = vmatpush1.msra.mxu0 0.0
  %4153 = vmatprep.subr.mxu0 0.0
  %4154 = vmatpush1.msra.mxu0 0.0
  %4155 = vmatprep.subr.mxu0 0.0
  %4156 = vmatpush1.msra.mxu0 0.0
  %4157 = vmatprep.subr.mxu0 0.0
  %4158 = vmatpush1.msra.mxu0 0.0
  %4159 = vmatprep.subr.mxu0 0.0
  %4160 = vmatpush1.msra.mxu0 0.0
  %4161 = vmatprep.subr.mxu0 0.0
  %4162 = vmatpush1.msra.mxu0 0.0
  %4163 = vmatprep.subr.mxu0 0.0
  %4164 = vmatpush1.msra.mxu0 0.0
  %4165 = vmatprep.subr.mxu0 0.0
  %4166 = vmatpush1.msra.mxu0 0.0
  %4167 = vmatprep.subr.mxu0 0.0
  %4168 = vmatpush1.msra.mxu0 0.0
  %4169 = vmatprep.subr.mxu0 0.0
  %4170 = vmatpush1.msra.mxu0 0.0
  %4171 = vmatprep.subr.mxu0 0.0
  %4172 = vmatpush1.msra.mxu0 0.0
  %4173 = vmatprep.subr.mxu0 0.0
  %4174 = vmatpush1.msra.mxu0 0.0
  %4175 = vmatprep.subr.mxu0 0.0
  %4176 = vmatpush1.msra.mxu0 0.0
  %4177 = vmatprep.subr.mxu0 0.0
  %4178 = vmatpush1.msra.mxu0 0.0
  %4179 = vmatprep.subr.mxu0 0.0
  %4180 = vmatpush1.msra.mxu0 0.0
  %4181 = vmatprep.subr.mxu0 0.0
  %4182 = vmatpush1.msra.mxu0 0.0
  %4183 = vmatprep.subr.mxu0 0.0
  %4184 = vmatpush1.msra.mxu0 0.0
  %4185 = vmatprep.subr.mxu0 0.0
  %4186 = vmatpush1.msra.mxu0 0.0
  %4187 = vmatprep.subr.mxu0 0.0
  %4188 = vmatpush1.msra.mxu0 0.0
  %4189 = vmatprep.subr.mxu0 0.0
  %4190 = vmatpush1.msra.mxu0 0.0
  %4191 = vmatprep.subr.mxu0 0.0
  %4192 = vmatpush1.msra.mxu0 0.0
  %4193 = vmatprep.subr.mxu0 0.0
  %4194 = vmatpush1.msra.mxu0 0.0
  %4195 = vmatprep.subr.mxu0 0.0
  %4196 = vmatpush1.msra.mxu0 0.0
  %4197 = vmatprep.subr.mxu0 0.0
  %4198 = vmatpush1.msra.mxu0 0.0
  %4199 = vmatprep.subr.mxu0 0.0
  %4200 = vmatpush1.msra.mxu0 0.0
  %4201 = vmatprep.subr.mxu0 0.0
  %4202 = vmatpush1.msra.mxu0 0.0
  %4203 = vmatprep.subr.mxu0 0.0
  %4204 = vmatpush1.msra.mxu0 0.0
  %4205 = vmatprep.mubr.f32.mxu0 0.0
  %v4206 = vand.u32 %v3061, 4294901760
  %4207 = vmatmul.mubr.f32.gmra.mrb[0].mxu0 %v4206
  %v4208 = vpop.f32.mrb[0].mxu0
  %v4209 = vadd.f32 %v4127, %v4208
  %v4210 = vpop.f32.mrb[0].mxu0
  %v4211 = vadd.f32 %v4129, %v4210
  %4212 = vdwg.mxu0
  %v4213 = vxor.u32 %v3640, 2147483648
  %v4214 = vxor.u32 %v3642, 2147483648
  %v4215 = vxor.u32 %v4209, 2147483648
  %v4216 = vxor.u32 %v4211, 2147483648
  %v4217 = vmul.f32 %v4213, 1.442695
  %v4218 = vpow.pop %v4217
  %v4219 = vmul.f32 %v4214, 1.442695
  %v4220 = vpow.pop %v4219
  %v4221 = vmul.f32 %v4215, 1.442695
  %v4222 = vpow.pop %v4221
  %v4223 = vmul.f32 %v4216, 1.442695
  %v4224 = vpow.pop %v4223
  %v4225 = vadd.f32 %v4218, 1.0
  %v4226 = vadd.f32 %v4220, 1.0
  %v4227 = vadd.f32 %v4222, 1.0
  %v4228 = vadd.f32 %v4224, 1.0
  %v4229 = vrcp.pop %v4225
  %v4230 = vmul.f32 1.0, %v4229
  %v4231 = vrcp.pop %v4226
  %v4232 = vmul.f32 1.0, %v4231
  %v4233 = vrcp.pop %v4227
  %v4234 = vmul.f32 1.0, %v4233
  %v4235 = vrcp.pop %v4228
  %v4236 = vmul.f32 1.0, %v4235
  %v4237 = vmul.f32 %v3640, %v4230
  %v4238 = vmul.f32 %v3642, %v4232
  %v4239 = vmul.f32 %v4209, %v4234
  %v4240 = vmul.f32 %v4211, %v4236
  %s4241 = scalar_lea.vmem %s1, 12
  %v4242 = vld [vmem:[%s4241] sm:$0xf]
  %s4243 = scalar_lea.vmem %s2, 12
  %v4244 = vld [vmem:[%s4243] sm:$0xf]
  %4245 = vrot.lane.b32.xlu0 %v4237, 1
  %v4246 = vpop.permute.xlu0 %4245
  %4247 = vrot.lane.b32.xlu0 %v4238, 1
  %v4248 = vpop.permute.xlu0 %4247
  %4249 = vrot.lane.b32.xlu0 %v4239, 1
  %v4250 = vpop.permute.xlu0 %4249
  %4251 = vrot.lane.b32.xlu0 %v4240, 1
  %v4252 = vpop.permute.xlu0 %4251
  %v4253 = vsel %vm61, %v4250, %v4252
  %v4254 = vsel %vm61, %v4248, %v4250
  %v4255 = vsel %vm61, %v4246, %v4248
  %v4256 = vsel %vm61, %v4252, %v4246
  %v4257 = vsel %vm70, %v4256, 0.0
  %v4258 = vsel %vm71, %v4255, 0.0
  %v4259 = vsel %vm72, %v4254, 0.0
  %v4260 = vsel %vm73, %v4253, 0.0
  %4261 = vrot.lane.b32.xlu0 %v4237, 127
  %v4262 = vpop.permute.xlu0 %4261
  %4263 = vrot.lane.b32.xlu0 %v4238, 127
  %v4264 = vpop.permute.xlu0 %4263
  %4265 = vrot.lane.b32.xlu0 %v4239, 127
  %v4266 = vpop.permute.xlu0 %4265
  %4267 = vrot.lane.b32.xlu0 %v4240, 127
  %v4268 = vpop.permute.xlu0 %4267
  %v4269 = vsel %vm86, %v4266, %v4268
  %v4270 = vsel %vm86, %v4264, %v4266
  %v4271 = vsel %vm86, %v4262, %v4264
  %v4272 = vsel %vm86, %v4268, %v4262
  %v4273 = vsel %vm95, %v4271, 0.0
  %v4274 = vsel %vm96, %v4270, 0.0
  %v4275 = vsel %vm97, %v4269, 0.0
  %v4276 = vsel %vm98, %v4272, 0.0
  %4277 = vrot.lane.b32.xlu0 %v4257, 16
  %v4278 = vpop.permute.xlu0 %4277
  %4279 = vrot.lane.b32.xlu0 %v4258, 16
  %v4280 = vpop.permute.xlu0 %4279
  %4281 = vrot.lane.b32.xlu0 %v4259, 16
  %v4282 = vpop.permute.xlu0 %4281
  %4283 = vrot.lane.b32.xlu0 %v4260, 16
  %v4284 = vpop.permute.xlu0 %4283
  %v4285 = vsel %vm111, %v4282, %v4284
  %v4286 = vsel %vm111, %v4280, %v4282
  %v4287 = vsel %vm111, %v4278, %v4280
  %v4288 = vsel %vm111, %v4284, %v4278
  %v4289 = vsel %vm120, %v4288, 0.0
  %v4290 = vsel %vm121, %v4287, 0.0
  %v4291 = vsel %vm122, %v4286, 0.0
  %v4292 = vsel %vm123, %v4285, 0.0
  %4293 = vrot.lane.b32.xlu0 %v4237, 16
  %v4294 = vpop.permute.xlu0 %4293
  %4295 = vrot.lane.b32.xlu0 %v4238, 16
  %v4296 = vpop.permute.xlu0 %4295
  %4297 = vrot.lane.b32.xlu0 %v4239, 16
  %v4298 = vpop.permute.xlu0 %4297
  %4299 = vrot.lane.b32.xlu0 %v4240, 16
  %v4300 = vpop.permute.xlu0 %4299
  %v4301 = vsel %vm111, %v4298, %v4300
  %v4302 = vsel %vm111, %v4296, %v4298
  %v4303 = vsel %vm111, %v4294, %v4296
  %v4304 = vsel %vm111, %v4300, %v4294
  %v4305 = vsel %vm120, %v4304, 0.0
  %v4306 = vsel %vm121, %v4303, 0.0
  %v4307 = vsel %vm122, %v4302, 0.0
  %v4308 = vsel %vm123, %v4301, 0.0
  %4309 = vrot.lane.b32.xlu0 %v4273, 16
  %v4310 = vpop.permute.xlu0 %4309
  %4311 = vrot.lane.b32.xlu0 %v4274, 16
  %v4312 = vpop.permute.xlu0 %4311
  %4313 = vrot.lane.b32.xlu0 %v4275, 16
  %v4314 = vpop.permute.xlu0 %4313
  %4315 = vrot.lane.b32.xlu0 %v4276, 16
  %v4316 = vpop.permute.xlu0 %4315
  %v4317 = vsel %vm111, %v4314, %v4316
  %v4318 = vsel %vm111, %v4312, %v4314
  %v4319 = vsel %vm111, %v4310, %v4312
  %v4320 = vsel %vm111, %v4316, %v4310
  %v4321 = vsel %vm120, %v4320, 0.0
  %v4322 = vsel %vm121, %v4319, 0.0
  %v4323 = vsel %vm122, %v4318, 0.0
  %v4324 = vsel %vm123, %v4317, 0.0
  %4325 = vrot.lane.b32.xlu0 %v4257, 112
  %v4326 = vpop.permute.xlu0 %4325
  %4327 = vrot.lane.b32.xlu0 %v4258, 112
  %v4328 = vpop.permute.xlu0 %4327
  %4329 = vrot.lane.b32.xlu0 %v4259, 112
  %v4330 = vpop.permute.xlu0 %4329
  %4331 = vrot.lane.b32.xlu0 %v4260, 112
  %v4332 = vpop.permute.xlu0 %4331
  %v4333 = vsel %vm168, %v4330, %v4332
  %v4334 = vsel %vm168, %v4328, %v4330
  %v4335 = vsel %vm168, %v4326, %v4328
  %v4336 = vsel %vm168, %v4332, %v4326
  %v4337 = vsel %vm177, %v4335, 0.0
  %v4338 = vsel %vm178, %v4334, 0.0
  %v4339 = vsel %vm179, %v4333, 0.0
  %v4340 = vsel %vm180, %v4336, 0.0
  %4341 = vrot.lane.b32.xlu0 %v4237, 112
  %v4342 = vpop.permute.xlu0 %4341
  %4343 = vrot.lane.b32.xlu0 %v4238, 112
  %v4344 = vpop.permute.xlu0 %4343
  %4345 = vrot.lane.b32.xlu0 %v4239, 112
  %v4346 = vpop.permute.xlu0 %4345
  %4347 = vrot.lane.b32.xlu0 %v4240, 112
  %v4348 = vpop.permute.xlu0 %4347
  %v4349 = vsel %vm168, %v4346, %v4348
  %v4350 = vsel %vm168, %v4344, %v4346
  %v4351 = vsel %vm168, %v4342, %v4344
  %v4352 = vsel %vm168, %v4348, %v4342
  %v4353 = vsel %vm177, %v4351, 0.0
  %v4354 = vsel %vm178, %v4350, 0.0
  %v4355 = vsel %vm179, %v4349, 0.0
  %v4356 = vsel %vm180, %v4352, 0.0
  %4357 = vrot.lane.b32.xlu0 %v4273, 112
  %v4358 = vpop.permute.xlu0 %4357
  %4359 = vrot.lane.b32.xlu0 %v4274, 112
  %v4360 = vpop.permute.xlu0 %4359
  %4361 = vrot.lane.b32.xlu0 %v4275, 112
  %v4362 = vpop.permute.xlu0 %4361
  %4363 = vrot.lane.b32.xlu0 %v4276, 112
  %v4364 = vpop.permute.xlu0 %4363
  %v4365 = vsel %vm168, %v4362, %v4364
  %v4366 = vsel %vm168, %v4360, %v4362
  %v4367 = vsel %vm168, %v4358, %v4360
  %v4368 = vsel %vm168, %v4364, %v4358
  %v4369 = vsel %vm177, %v4367, 0.0
  %v4370 = vsel %vm178, %v4366, 0.0
  %v4371 = vsel %vm179, %v4365, 0.0
  %v4372 = vsel %vm180, %v4368, 0.0
  %v4377 = vrot.slane %v4305, 4
  %v4378 = vrot.slane %v4306, 4
  %v4379 = vrot.slane %v4307, 4
  %v4380 = vrot.slane %v4308, 4
  %v4389 = vrot.slane %v4257, 4
  %v4390 = vrot.slane %v4258, 4
  %v4391 = vrot.slane %v4259, 4
  %v4392 = vrot.slane %v4260, 4
  %v4401 = vrot.slane %v4273, 4
  %v4402 = vrot.slane %v4274, 4
  %v4403 = vrot.slane %v4275, 4
  %v4404 = vrot.slane %v4276, 4
  %v4413 = vrot.slane %v4353, 4
  %v4414 = vrot.slane %v4354, 4
  %v4415 = vrot.slane %v4355, 4
  %v4416 = vrot.slane %v4356, 4
  %v4421 = vsel %vm265, %v4289, %v4377
  %v4422 = vsel %vm265, %v4290, %v4378
  %v4423 = vsel %vm265, %v4291, %v4379
  %v4424 = vsel %vm265, %v4292, %v4380
  %v4425 = vsel %vm265, %v4321, %v4389
  %v4426 = vsel %vm265, %v4322, %v4390
  %v4427 = vsel %vm265, %v4323, %v4391
  %v4428 = vsel %vm265, %v4324, %v4392
  %v4429 = vsel %vm265, %v4237, %v4401
  %v4430 = vsel %vm265, %v4238, %v4402
  %v4431 = vsel %vm265, %v4239, %v4403
  %v4432 = vsel %vm265, %v4240, %v4404
  %v4433 = vsel %vm265, %v4337, %v4413
  %v4434 = vsel %vm265, %v4338, %v4414
  %v4435 = vsel %vm265, %v4339, %v4415
  %v4436 = vsel %vm265, %v4340, %v4416
  %4438 = vset.pattern.permute.xlu0 0
  %4439 = vperm.xlu0 %4438, %v4244
  %v4440 = vpop.permute.xlu0 %4439
  %v4443 = vsel %vm287, %v4242, 0
  %v4446 = vsel %vm265, %v4369, 0
  %v4449 = vsel %vm265, %v4370, 0
  %v4452 = vsel %vm265, %v4371, 0
  %v4455 = vsel %vm265, %v4372, 0
  %v4457 = vand.u32 %v4422, 4294901760
  %4458 = vmatprep.subr.mxu0 %v4457
  %v4459 = vand.u32 %v4421, 4294901760
  %4460 = vmatpush1.msra.mxu0 %v4459
  %v4461 = vand.u32 %v4426, 4294901760
  %4462 = vmatprep.subr.mxu0 %v4461
  %v4463 = vand.u32 %v4425, 4294901760
  %4464 = vmatpush1.msra.mxu0 %v4463
  %v4465 = vand.u32 %v4430, 4294901760
  %4466 = vmatprep.subr.mxu0 %v4465
  %v4467 = vand.u32 %v4429, 4294901760
  %4468 = vmatpush1.msra.mxu0 %v4467
  %v4469 = vand.u32 %v4434, 4294901760
  %4470 = vmatprep.subr.mxu0 %v4469
  %v4471 = vand.u32 %v4433, 4294901760
  %4472 = vmatpush1.msra.mxu0 %v4471
  %v4473 = vand.u32 %v4449, 4294901760
  %4474 = vmatprep.subr.mxu0 %v4473
  %v4475 = vand.u32 %v4446, 4294901760
  %4476 = vmatpush1.msra.mxu0 %v4475
  %4477 = vmatprep.subr.mxu0 0.0
  %4478 = vmatpush1.msra.mxu0 0.0
  %4479 = vmatprep.subr.mxu0 0.0
  %4480 = vmatpush1.msra.mxu0 0.0
  %4481 = vmatprep.subr.mxu0 0.0
  %4482 = vmatpush1.msra.mxu0 0.0
  %4483 = vmatprep.subr.mxu0 0.0
  %4484 = vmatpush1.msra.mxu0 0.0
  %4485 = vmatprep.subr.mxu0 0.0
  %4486 = vmatpush1.msra.mxu0 0.0
  %4487 = vmatprep.subr.mxu0 0.0
  %4488 = vmatpush1.msra.mxu0 0.0
  %4489 = vmatprep.subr.mxu0 0.0
  %4490 = vmatpush1.msra.mxu0 0.0
  %4491 = vmatprep.subr.mxu0 0.0
  %4492 = vmatpush1.msra.mxu0 0.0
  %4493 = vmatprep.subr.mxu0 0.0
  %4494 = vmatpush1.msra.mxu0 0.0
  %4495 = vmatprep.subr.mxu0 0.0
  %4496 = vmatpush1.msra.mxu0 0.0
  %4497 = vmatprep.subr.mxu0 0.0
  %4498 = vmatpush1.msra.mxu0 0.0
  %4499 = vmatprep.subr.mxu0 0.0
  %4500 = vmatpush1.msra.mxu0 0.0
  %4501 = vmatprep.subr.mxu0 0.0
  %4502 = vmatpush1.msra.mxu0 0.0
  %4503 = vmatprep.subr.mxu0 0.0
  %4504 = vmatpush1.msra.mxu0 0.0
  %4505 = vmatprep.subr.mxu0 0.0
  %4506 = vmatpush1.msra.mxu0 0.0
  %4507 = vmatprep.subr.mxu0 0.0
  %4508 = vmatpush1.msra.mxu0 0.0
  %4509 = vmatprep.subr.mxu0 0.0
  %4510 = vmatpush1.msra.mxu0 0.0
  %4511 = vmatprep.subr.mxu0 0.0
  %4512 = vmatpush1.msra.mxu0 0.0
  %4513 = vmatprep.subr.mxu0 0.0
  %4514 = vmatpush1.msra.mxu0 0.0
  %4515 = vmatprep.subr.mxu0 0.0
  %4516 = vmatpush1.msra.mxu0 0.0
  %4517 = vmatprep.subr.mxu0 0.0
  %4518 = vmatpush1.msra.mxu0 0.0
  %4519 = vmatprep.subr.mxu0 0.0
  %4520 = vmatpush1.msra.mxu0 0.0
  %4521 = vmatprep.subr.mxu0 0.0
  %4522 = vmatpush1.msra.mxu0 0.0
  %4523 = vmatprep.subr.mxu0 0.0
  %4524 = vmatpush1.msra.mxu0 0.0
  %4525 = vmatprep.subr.mxu0 0.0
  %4526 = vmatpush1.msra.mxu0 0.0
  %4527 = vmatprep.subr.mxu0 0.0
  %4528 = vmatpush1.msra.mxu0 0.0
  %4529 = vmatprep.subr.mxu0 0.0
  %4530 = vmatpush1.msra.mxu0 0.0
  %4531 = vmatprep.mubr.f32.mxu0 0.0
  %v4532 = vand.u32 %v4443, 4294901760
  %v4533 = vsub.f32 %v4443, %v4532
  %v4534 = vand.u32 %v4533, 4294901760
  %v4535 = vsub.f32 %v4533, %v4534
  %v4536 = vand.u32 %v4535, 4294901760
  %4537 = vmatmul.mubr.f32.gmra.mrb[0].mxu0 %v4536
  %v4538 = vpop.f32.mrb[0].mxu0
  %v4539 = vadd.f32 %v4440, %v4538
  %v4540 = vpop.f32.mrb[0].mxu0
  %v4541 = vadd.f32 %v4440, %v4540
  %4542 = vdwg.mxu0
  %v4543 = vand.u32 %v4422, 4294901760
  %v4544 = vsub.f32 %v4422, %v4543
  %v4545 = vand.u32 %v4544, 4294901760
  %v4546 = vsub.f32 %v4544, %v4545
  %v4547 = vand.u32 %v4546, 4294901760
  %4548 = vmatprep.subr.mxu0 %v4547
  %v4549 = vand.u32 %v4421, 4294901760
  %v4550 = vsub.f32 %v4421, %v4549
  %v4551 = vand.u32 %v4550, 4294901760
  %v4552 = vsub.f32 %v4550, %v4551
  %v4553 = vand.u32 %v4552, 4294901760
  %4554 = vmatpush1.msra.mxu0 %v4553
  %v4555 = vand.u32 %v4426, 4294901760
  %v4556 = vsub.f32 %v4426, %v4555
  %v4557 = vand.u32 %v4556, 4294901760
  %v4558 = vsub.f32 %v4556, %v4557
  %v4559 = vand.u32 %v4558, 4294901760
  %4560 = vmatprep.subr.mxu0 %v4559
  %v4561 = vand.u32 %v4425, 4294901760
  %v4562 = vsub.f32 %v4425, %v4561
  %v4563 = vand.u32 %v4562, 4294901760
  %v4564 = vsub.f32 %v4562, %v4563
  %v4565 = vand.u32 %v4564, 4294901760
  %4566 = vmatpush1.msra.mxu0 %v4565
  %v4567 = vand.u32 %v4430, 4294901760
  %v4568 = vsub.f32 %v4430, %v4567
  %v4569 = vand.u32 %v4568, 4294901760
  %v4570 = vsub.f32 %v4568, %v4569
  %v4571 = vand.u32 %v4570, 4294901760
  %4572 = vmatprep.subr.mxu0 %v4571
  %v4573 = vand.u32 %v4429, 4294901760
  %v4574 = vsub.f32 %v4429, %v4573
  %v4575 = vand.u32 %v4574, 4294901760
  %v4576 = vsub.f32 %v4574, %v4575
  %v4577 = vand.u32 %v4576, 4294901760
  %4578 = vmatpush1.msra.mxu0 %v4577
  %v4579 = vand.u32 %v4434, 4294901760
  %v4580 = vsub.f32 %v4434, %v4579
  %v4581 = vand.u32 %v4580, 4294901760
  %v4582 = vsub.f32 %v4580, %v4581
  %v4583 = vand.u32 %v4582, 4294901760
  %4584 = vmatprep.subr.mxu0 %v4583
  %v4585 = vand.u32 %v4433, 4294901760
  %v4586 = vsub.f32 %v4433, %v4585
  %v4587 = vand.u32 %v4586, 4294901760
  %v4588 = vsub.f32 %v4586, %v4587
  %v4589 = vand.u32 %v4588, 4294901760
  %4590 = vmatpush1.msra.mxu0 %v4589
  %v4591 = vand.u32 %v4449, 4294901760
  %v4592 = vsub.f32 %v4449, %v4591
  %v4593 = vand.u32 %v4592, 4294901760
  %v4594 = vsub.f32 %v4592, %v4593
  %v4595 = vand.u32 %v4594, 4294901760
  %4596 = vmatprep.subr.mxu0 %v4595
  %v4597 = vand.u32 %v4446, 4294901760
  %v4598 = vsub.f32 %v4446, %v4597
  %v4599 = vand.u32 %v4598, 4294901760
  %v4600 = vsub.f32 %v4598, %v4599
  %v4601 = vand.u32 %v4600, 4294901760
  %4602 = vmatpush1.msra.mxu0 %v4601
  %4603 = vmatprep.subr.mxu0 0.0
  %4604 = vmatpush1.msra.mxu0 0.0
  %4605 = vmatprep.subr.mxu0 0.0
  %4606 = vmatpush1.msra.mxu0 0.0
  %4607 = vmatprep.subr.mxu0 0.0
  %4608 = vmatpush1.msra.mxu0 0.0
  %4609 = vmatprep.subr.mxu0 0.0
  %4610 = vmatpush1.msra.mxu0 0.0
  %4611 = vmatprep.subr.mxu0 0.0
  %4612 = vmatpush1.msra.mxu0 0.0
  %4613 = vmatprep.subr.mxu0 0.0
  %4614 = vmatpush1.msra.mxu0 0.0
  %4615 = vmatprep.subr.mxu0 0.0
  %4616 = vmatpush1.msra.mxu0 0.0
  %4617 = vmatprep.subr.mxu0 0.0
  %4618 = vmatpush1.msra.mxu0 0.0
  %4619 = vmatprep.subr.mxu0 0.0
  %4620 = vmatpush1.msra.mxu0 0.0
  %4621 = vmatprep.subr.mxu0 0.0
  %4622 = vmatpush1.msra.mxu0 0.0
  %4623 = vmatprep.subr.mxu0 0.0
  %4624 = vmatpush1.msra.mxu0 0.0
  %4625 = vmatprep.subr.mxu0 0.0
  %4626 = vmatpush1.msra.mxu0 0.0
  %4627 = vmatprep.subr.mxu0 0.0
  %4628 = vmatpush1.msra.mxu0 0.0
  %4629 = vmatprep.subr.mxu0 0.0
  %4630 = vmatpush1.msra.mxu0 0.0
  %4631 = vmatprep.subr.mxu0 0.0
  %4632 = vmatpush1.msra.mxu0 0.0
  %4633 = vmatprep.subr.mxu0 0.0
  %4634 = vmatpush1.msra.mxu0 0.0
  %4635 = vmatprep.subr.mxu0 0.0
  %4636 = vmatpush1.msra.mxu0 0.0
  %4637 = vmatprep.subr.mxu0 0.0
  %4638 = vmatpush1.msra.mxu0 0.0
  %4639 = vmatprep.subr.mxu0 0.0
  %4640 = vmatpush1.msra.mxu0 0.0
  %4641 = vmatprep.subr.mxu0 0.0
  %4642 = vmatpush1.msra.mxu0 0.0
  %4643 = vmatprep.subr.mxu0 0.0
  %4644 = vmatpush1.msra.mxu0 0.0
  %4645 = vmatprep.subr.mxu0 0.0
  %4646 = vmatpush1.msra.mxu0 0.0
  %4647 = vmatprep.subr.mxu0 0.0
  %4648 = vmatpush1.msra.mxu0 0.0
  %4649 = vmatprep.subr.mxu0 0.0
  %4650 = vmatpush1.msra.mxu0 0.0
  %4651 = vmatprep.subr.mxu0 0.0
  %4652 = vmatpush1.msra.mxu0 0.0
  %4653 = vmatprep.subr.mxu0 0.0
  %4654 = vmatpush1.msra.mxu0 0.0
  %4655 = vmatprep.subr.mxu0 0.0
  %4656 = vmatpush1.msra.mxu0 0.0
  %4657 = vmatprep.mubr.f32.mxu0 0.0
  %v4658 = vand.u32 %v4443, 4294901760
  %4659 = vmatmul.mubr.f32.gmra.mrb[0].mxu0 %v4658
  %v4660 = vpop.f32.mrb[0].mxu0
  %v4661 = vadd.f32 %v4539, %v4660
  %v4662 = vpop.f32.mrb[0].mxu0
  %v4663 = vadd.f32 %v4541, %v4662
  %4664 = vdwg.mxu0
  %v4665 = vand.u32 %v4422, 4294901760
  %v4666 = vsub.f32 %v4422, %v4665
  %4667 = vmatprep.subr.mxu0 %v4666
  %v4668 = vand.u32 %v4421, 4294901760
  %v4669 = vsub.f32 %v4421, %v4668
  %4670 = vmatpush1.msra.mxu0 %v4669
  %v4671 = vand.u32 %v4426, 4294901760
  %v4672 = vsub.f32 %v4426, %v4671
  %4673 = vmatprep.subr.mxu0 %v4672
  %v4674 = vand.u32 %v4425, 4294901760
  %v4675 = vsub.f32 %v4425, %v4674
  %4676 = vmatpush1.msra.mxu0 %v4675
  %v4677 = vand.u32 %v4430, 4294901760
  %v4678 = vsub.f32 %v4430, %v4677
  %4679 = vmatprep.subr.mxu0 %v4678
  %v4680 = vand.u32 %v4429, 4294901760
  %v4681 = vsub.f32 %v4429, %v4680
  %4682 = vmatpush1.msra.mxu0 %v4681
  %v4683 = vand.u32 %v4434, 4294901760
  %v4684 = vsub.f32 %v4434, %v4683
  %4685 = vmatprep.subr.mxu0 %v4684
  %v4686 = vand.u32 %v4433, 4294901760
  %v4687 = vsub.f32 %v4433, %v4686
  %4688 = vmatpush1.msra.mxu0 %v4687
  %v4689 = vand.u32 %v4449, 4294901760
  %v4690 = vsub.f32 %v4449, %v4689
  %4691 = vmatprep.subr.mxu0 %v4690
  %v4692 = vand.u32 %v4446, 4294901760
  %v4693 = vsub.f32 %v4446, %v4692
  %4694 = vmatpush1.msra.mxu0 %v4693
  %4695 = vmatprep.subr.mxu0 0.0
  %4696 = vmatpush1.msra.mxu0 0.0
  %4697 = vmatprep.subr.mxu0 0.0
  %4698 = vmatpush1.msra.mxu0 0.0
  %4699 = vmatprep.subr.mxu0 0.0
  %4700 = vmatpush1.msra.mxu0 0.0
  %4701 = vmatprep.subr.mxu0 0.0
  %4702 = vmatpush1.msra.mxu0 0.0
  %4703 = vmatprep.subr.mxu0 0.0
  %4704 = vmatpush1.msra.mxu0 0.0
  %4705 = vmatprep.subr.mxu0 0.0
  %4706 = vmatpush1.msra.mxu0 0.0
  %4707 = vmatprep.subr.mxu0 0.0
  %4708 = vmatpush1.msra.mxu0 0.0
  %4709 = vmatprep.subr.mxu0 0.0
  %4710 = vmatpush1.msra.mxu0 0.0
  %4711 = vmatprep.subr.mxu0 0.0
  %4712 = vmatpush1.msra.mxu0 0.0
  %4713 = vmatprep.subr.mxu0 0.0
  %4714 = vmatpush1.msra.mxu0 0.0
  %4715 = vmatprep.subr.mxu0 0.0
  %4716 = vmatpush1.msra.mxu0 0.0
  %4717 = vmatprep.subr.mxu0 0.0
  %4718 = vmatpush1.msra.mxu0 0.0
  %4719 = vmatprep.subr.mxu0 0.0
  %4720 = vmatpush1.msra.mxu0 0.0
  %4721 = vmatprep.subr.mxu0 0.0
  %4722 = vmatpush1.msra.mxu0 0.0
  %4723 = vmatprep.subr.mxu0 0.0
  %4724 = vmatpush1.msra.mxu0 0.0
  %4725 = vmatprep.subr.mxu0 0.0
  %4726 = vmatpush1.msra.mxu0 0.0
  %4727 = vmatprep.subr.mxu0 0.0
  %4728 = vmatpush1.msra.mxu0 0.0
  %4729 = vmatprep.subr.mxu0 0.0
  %4730 = vmatpush1.msra.mxu0 0.0
  %4731 = vmatprep.subr.mxu0 0.0
  %4732 = vmatpush1.msra.mxu0 0.0
  %4733 = vmatprep.subr.mxu0 0.0
  %4734 = vmatpush1.msra.mxu0 0.0
  %4735 = vmatprep.subr.mxu0 0.0
  %4736 = vmatpush1.msra.mxu0 0.0
  %4737 = vmatprep.subr.mxu0 0.0
  %4738 = vmatpush1.msra.mxu0 0.0
  %4739 = vmatprep.subr.mxu0 0.0
  %4740 = vmatpush1.msra.mxu0 0.0
  %4741 = vmatprep.subr.mxu0 0.0
  %4742 = vmatpush1.msra.mxu0 0.0
  %4743 = vmatprep.subr.mxu0 0.0
  %4744 = vmatpush1.msra.mxu0 0.0
  %4745 = vmatprep.subr.mxu0 0.0
  %4746 = vmatpush1.msra.mxu0 0.0
  %4747 = vmatprep.subr.mxu0 0.0
  %4748 = vmatpush1.msra.mxu0 0.0
  %4749 = vmatprep.mubr.f32.mxu0 0.0
  %v4750 = vand.u32 %v4443, 4294901760
  %v4751 = vsub.f32 %v4443, %v4750
  %4752 = vmatmul.mubr.f32.gmra.mrb[0].mxu0 %v4751
  %v4753 = vpop.f32.mrb[0].mxu0
  %v4754 = vadd.f32 %v4661, %v4753
  %v4755 = vpop.f32.mrb[0].mxu0
  %v4756 = vadd.f32 %v4663, %v4755
  %4757 = vdwg.mxu0
  %v4758 = vand.u32 %v4422, 4294901760
  %4759 = vmatprep.subr.mxu0 %v4758
  %v4760 = vand.u32 %v4421, 4294901760
  %4761 = vmatpush1.msra.mxu0 %v4760
  %v4762 = vand.u32 %v4426, 4294901760
  %4763 = vmatprep.subr.mxu0 %v4762
  %v4764 = vand.u32 %v4425, 4294901760
  %4765 = vmatpush1.msra.mxu0 %v4764
  %v4766 = vand.u32 %v4430, 4294901760
  %4767 = vmatprep.subr.mxu0 %v4766
  %v4768 = vand.u32 %v4429, 4294901760
  %4769 = vmatpush1.msra.mxu0 %v4768
  %v4770 = vand.u32 %v4434, 4294901760
  %4771 = vmatprep.subr.mxu0 %v4770
  %v4772 = vand.u32 %v4433, 4294901760
  %4773 = vmatpush1.msra.mxu0 %v4772
  %v4774 = vand.u32 %v4449, 4294901760
  %4775 = vmatprep.subr.mxu0 %v4774
  %v4776 = vand.u32 %v4446, 4294901760
  %4777 = vmatpush1.msra.mxu0 %v4776
  %4778 = vmatprep.subr.mxu0 0.0
  %4779 = vmatpush1.msra.mxu0 0.0
  %4780 = vmatprep.subr.mxu0 0.0
  %4781 = vmatpush1.msra.mxu0 0.0
  %4782 = vmatprep.subr.mxu0 0.0
  %4783 = vmatpush1.msra.mxu0 0.0
  %4784 = vmatprep.subr.mxu0 0.0
  %4785 = vmatpush1.msra.mxu0 0.0
  %4786 = vmatprep.subr.mxu0 0.0
  %4787 = vmatpush1.msra.mxu0 0.0
  %4788 = vmatprep.subr.mxu0 0.0
  %4789 = vmatpush1.msra.mxu0 0.0
  %4790 = vmatprep.subr.mxu0 0.0
  %4791 = vmatpush1.msra.mxu0 0.0
  %4792 = vmatprep.subr.mxu0 0.0
  %4793 = vmatpush1.msra.mxu0 0.0
  %4794 = vmatprep.subr.mxu0 0.0
  %4795 = vmatpush1.msra.mxu0 0.0
  %4796 = vmatprep.subr.mxu0 0.0
  %4797 = vmatpush1.msra.mxu0 0.0
  %4798 = vmatprep.subr.mxu0 0.0
  %4799 = vmatpush1.msra.mxu0 0.0
  %4800 = vmatprep.subr.mxu0 0.0
  %4801 = vmatpush1.msra.mxu0 0.0
  %4802 = vmatprep.subr.mxu0 0.0
  %4803 = vmatpush1.msra.mxu0 0.0
  %4804 = vmatprep.subr.mxu0 0.0
  %4805 = vmatpush1.msra.mxu0 0.0
  %4806 = vmatprep.subr.mxu0 0.0
  %4807 = vmatpush1.msra.mxu0 0.0
  %4808 = vmatprep.subr.mxu0 0.0
  %4809 = vmatpush1.msra.mxu0 0.0
  %4810 = vmatprep.subr.mxu0 0.0
  %4811 = vmatpush1.msra.mxu0 0.0
  %4812 = vmatprep.subr.mxu0 0.0
  %4813 = vmatpush1.msra.mxu0 0.0
  %4814 = vmatprep.subr.mxu0 0.0
  %4815 = vmatpush1.msra.mxu0 0.0
  %4816 = vmatprep.subr.mxu0 0.0
  %4817 = vmatpush1.msra.mxu0 0.0
  %4818 = vmatprep.subr.mxu0 0.0
  %4819 = vmatpush1.msra.mxu0 0.0
  %4820 = vmatprep.subr.mxu0 0.0
  %4821 = vmatpush1.msra.mxu0 0.0
  %4822 = vmatprep.subr.mxu0 0.0
  %4823 = vmatpush1.msra.mxu0 0.0
  %4824 = vmatprep.subr.mxu0 0.0
  %4825 = vmatpush1.msra.mxu0 0.0
  %4826 = vmatprep.subr.mxu0 0.0
  %4827 = vmatpush1.msra.mxu0 0.0
  %4828 = vmatprep.subr.mxu0 0.0
  %4829 = vmatpush1.msra.mxu0 0.0
  %4830 = vmatprep.subr.mxu0 0.0
  %4831 = vmatpush1.msra.mxu0 0.0
  %4832 = vmatprep.mubr.f32.mxu0 0.0
  %v4833 = vand.u32 %v4443, 4294901760
  %v4834 = vsub.f32 %v4443, %v4833
  %v4835 = vand.u32 %v4834, 4294901760
  %4836 = vmatmul.mubr.f32.gmra.mrb[0].mxu0 %v4835
  %v4837 = vpop.f32.mrb[0].mxu0
  %v4838 = vadd.f32 %v4754, %v4837
  %v4839 = vpop.f32.mrb[0].mxu0
  %v4840 = vadd.f32 %v4756, %v4839
  %4841 = vdwg.mxu0
  %v4842 = vand.u32 %v4422, 4294901760
  %v4843 = vsub.f32 %v4422, %v4842
  %v4844 = vand.u32 %v4843, 4294901760
  %4845 = vmatprep.subr.mxu0 %v4844
  %v4846 = vand.u32 %v4421, 4294901760
  %v4847 = vsub.f32 %v4421, %v4846
  %v4848 = vand.u32 %v4847, 4294901760
  %4849 = vmatpush1.msra.mxu0 %v4848
  %v4850 = vand.u32 %v4426, 4294901760
  %v4851 = vsub.f32 %v4426, %v4850
  %v4852 = vand.u32 %v4851, 4294901760
  %4853 = vmatprep.subr.mxu0 %v4852
  %v4854 = vand.u32 %v4425, 4294901760
  %v4855 = vsub.f32 %v4425, %v4854
  %v4856 = vand.u32 %v4855, 4294901760
  %4857 = vmatpush1.msra.mxu0 %v4856
  %v4858 = vand.u32 %v4430, 4294901760
  %v4859 = vsub.f32 %v4430, %v4858
  %v4860 = vand.u32 %v4859, 4294901760
  %4861 = vmatprep.subr.mxu0 %v4860
  %v4862 = vand.u32 %v4429, 4294901760
  %v4863 = vsub.f32 %v4429, %v4862
  %v4864 = vand.u32 %v4863, 4294901760
  %4865 = vmatpush1.msra.mxu0 %v4864
  %v4866 = vand.u32 %v4434, 4294901760
  %v4867 = vsub.f32 %v4434, %v4866
  %v4868 = vand.u32 %v4867, 4294901760
  %4869 = vmatprep.subr.mxu0 %v4868
  %v4870 = vand.u32 %v4433, 4294901760
  %v4871 = vsub.f32 %v4433, %v4870
  %v4872 = vand.u32 %v4871, 4294901760
  %4873 = vmatpush1.msra.mxu0 %v4872
  %v4874 = vand.u32 %v4449, 4294901760
  %v4875 = vsub.f32 %v4449, %v4874
  %v4876 = vand.u32 %v4875, 4294901760
  %4877 = vmatprep.subr.mxu0 %v4876
  %v4878 = vand.u32 %v4446, 4294901760
  %v4879 = vsub.f32 %v4446, %v4878
  %v4880 = vand.u32 %v4879, 4294901760
  %4881 = vmatpush1.msra.mxu0 %v4880
  %4882 = vmatprep.subr.mxu0 0.0
  %4883 = vmatpush1.msra.mxu0 0.0
  %4884 = vmatprep.subr.mxu0 0.0
  %4885 = vmatpush1.msra.mxu0 0.0
  %4886 = vmatprep.subr.mxu0 0.0
  %4887 = vmatpush1.msra.mxu0 0.0
  %4888 = vmatprep.subr.mxu0 0.0
  %4889 = vmatpush1.msra.mxu0 0.0
  %4890 = vmatprep.subr.mxu0 0.0
  %4891 = vmatpush1.msra.mxu0 0.0
  %4892 = vmatprep.subr.mxu0 0.0
  %4893 = vmatpush1.msra.mxu0 0.0
  %4894 = vmatprep.subr.mxu0 0.0
  %4895 = vmatpush1.msra.mxu0 0.0
  %4896 = vmatprep.subr.mxu0 0.0
  %4897 = vmatpush1.msra.mxu0 0.0
  %4898 = vmatprep.subr.mxu0 0.0
  %4899 = vmatpush1.msra.mxu0 0.0
  %4900 = vmatprep.subr.mxu0 0.0
  %4901 = vmatpush1.msra.mxu0 0.0
  %4902 = vmatprep.subr.mxu0 0.0
  %4903 = vmatpush1.msra.mxu0 0.0
  %4904 = vmatprep.subr.mxu0 0.0
  %4905 = vmatpush1.msra.mxu0 0.0
  %4906 = vmatprep.subr.mxu0 0.0
  %4907 = vmatpush1.msra.mxu0 0.0
  %4908 = vmatprep.subr.mxu0 0.0
  %4909 = vmatpush1.msra.mxu0 0.0
  %4910 = vmatprep.subr.mxu0 0.0
  %4911 = vmatpush1.msra.mxu0 0.0
  %4912 = vmatprep.subr.mxu0 0.0
  %4913 = vmatpush1.msra.mxu0 0.0
  %4914 = vmatprep.subr.mxu0 0.0
  %4915 = vmatpush1.msra.mxu0 0.0
  %4916 = vmatprep.subr.mxu0 0.0
  %4917 = vmatpush1.msra.mxu0 0.0
  %4918 = vmatprep.subr.mxu0 0.0
  %4919 = vmatpush1.msra.mxu0 0.0
  %4920 = vmatprep.subr.mxu0 0.0
  %4921 = vmatpush1.msra.mxu0 0.0
  %4922 = vmatprep.subr.mxu0 0.0
  %4923 = vmatpush1.msra.mxu0 0.0
  %4924 = vmatprep.subr.mxu0 0.0
  %4925 = vmatpush1.msra.mxu0 0.0
  %4926 = vmatprep.subr.mxu0 0.0
  %4927 = vmatpush1.msra.mxu0 0.0
  %4928 = vmatprep.subr.mxu0 0.0
  %4929 = vmatpush1.msra.mxu0 0.0
  %4930 = vmatprep.subr.mxu0 0.0
  %4931 = vmatpush1.msra.mxu0 0.0
  %4932 = vmatprep.subr.mxu0 0.0
  %4933 = vmatpush1.msra.mxu0 0.0
  %4934 = vmatprep.subr.mxu0 0.0
  %4935 = vmatpush1.msra.mxu0 0.0
  %4936 = vmatprep.mubr.f32.mxu0 0.0
  %v4937 = vand.u32 %v4443, 4294901760
  %4938 = vmatmul.mubr.f32.gmra.mrb[0].mxu0 %v4937
  %v4939 = vpop.f32.mrb[0].mxu0
  %v4940 = vadd.f32 %v4838, %v4939
  %v4941 = vpop.f32.mrb[0].mxu0
  %v4942 = vadd.f32 %v4840, %v4941
  %4943 = vdwg.mxu0
  %v4944 = vand.u32 %v4422, 4294901760
  %4945 = vmatprep.subr.mxu0 %v4944
  %v4946 = vand.u32 %v4421, 4294901760
  %4947 = vmatpush1.msra.mxu0 %v4946
  %v4948 = vand.u32 %v4426, 4294901760
  %4949 = vmatprep.subr.mxu0 %v4948
  %v4950 = vand.u32 %v4425, 4294901760
  %4951 = vmatpush1.msra.mxu0 %v4950
  %v4952 = vand.u32 %v4430, 4294901760
  %4953 = vmatprep.subr.mxu0 %v4952
  %v4954 = vand.u32 %v4429, 4294901760
  %4955 = vmatpush1.msra.mxu0 %v4954
  %v4956 = vand.u32 %v4434, 4294901760
  %4957 = vmatprep.subr.mxu0 %v4956
  %v4958 = vand.u32 %v4433, 4294901760
  %4959 = vmatpush1.msra.mxu0 %v4958
  %v4960 = vand.u32 %v4449, 4294901760
  %4961 = vmatprep.subr.mxu0 %v4960
  %v4962 = vand.u32 %v4446, 4294901760
  %4963 = vmatpush1.msra.mxu0 %v4962
  %4964 = vmatprep.subr.mxu0 0.0
  %4965 = vmatpush1.msra.mxu0 0.0
  %4966 = vmatprep.subr.mxu0 0.0
  %4967 = vmatpush1.msra.mxu0 0.0
  %4968 = vmatprep.subr.mxu0 0.0
  %4969 = vmatpush1.msra.mxu0 0.0
  %4970 = vmatprep.subr.mxu0 0.0
  %4971 = vmatpush1.msra.mxu0 0.0
  %4972 = vmatprep.subr.mxu0 0.0
  %4973 = vmatpush1.msra.mxu0 0.0
  %4974 = vmatprep.subr.mxu0 0.0
  %4975 = vmatpush1.msra.mxu0 0.0
  %4976 = vmatprep.subr.mxu0 0.0
  %4977 = vmatpush1.msra.mxu0 0.0
  %4978 = vmatprep.subr.mxu0 0.0
  %4979 = vmatpush1.msra.mxu0 0.0
  %4980 = vmatprep.subr.mxu0 0.0
  %4981 = vmatpush1.msra.mxu0 0.0
  %4982 = vmatprep.subr.mxu0 0.0
  %4983 = vmatpush1.msra.mxu0 0.0
  %4984 = vmatprep.subr.mxu0 0.0
  %4985 = vmatpush1.msra.mxu0 0.0
  %4986 = vmatprep.subr.mxu0 0.0
  %4987 = vmatpush1.msra.mxu0 0.0
  %4988 = vmatprep.subr.mxu0 0.0
  %4989 = vmatpush1.msra.mxu0 0.0
  %4990 = vmatprep.subr.mxu0 0.0
  %4991 = vmatpush1.msra.mxu0 0.0
  %4992 = vmatprep.subr.mxu0 0.0
  %4993 = vmatpush1.msra.mxu0 0.0
  %4994 = vmatprep.subr.mxu0 0.0
  %4995 = vmatpush1.msra.mxu0 0.0
  %4996 = vmatprep.subr.mxu0 0.0
  %4997 = vmatpush1.msra.mxu0 0.0
  %4998 = vmatprep.subr.mxu0 0.0
  %4999 = vmatpush1.msra.mxu0 0.0
  %5000 = vmatprep.subr.mxu0 0.0
  %5001 = vmatpush1.msra.mxu0 0.0
  %5002 = vmatprep.subr.mxu0 0.0
  %5003 = vmatpush1.msra.mxu0 0.0
  %5004 = vmatprep.subr.mxu0 0.0
  %5005 = vmatpush1.msra.mxu0 0.0
  %5006 = vmatprep.subr.mxu0 0.0
  %5007 = vmatpush1.msra.mxu0 0.0
  %5008 = vmatprep.subr.mxu0 0.0
  %5009 = vmatpush1.msra.mxu0 0.0
  %5010 = vmatprep.subr.mxu0 0.0
  %5011 = vmatpush1.msra.mxu0 0.0
  %5012 = vmatprep.subr.mxu0 0.0
  %5013 = vmatpush1.msra.mxu0 0.0
  %5014 = vmatprep.subr.mxu0 0.0
  %5015 = vmatpush1.msra.mxu0 0.0
  %5016 = vmatprep.subr.mxu0 0.0
  %5017 = vmatpush1.msra.mxu0 0.0
  %5018 = vmatprep.mubr.f32.mxu0 0.0
  %v5019 = vand.u32 %v4443, 4294901760
  %5020 = vmatmul.mubr.f32.gmra.mrb[0].mxu0 %v5019
  %v5021 = vpop.f32.mrb[0].mxu0
  %v5022 = vadd.f32 %v4940, %v5021
  %v5023 = vpop.f32.mrb[0].mxu0
  %v5024 = vadd.f32 %v4942, %v5023
  %5025 = vdwg.mxu0
  %v5026 = vand.u32 %v4424, 4294901760
  %5027 = vmatprep.subr.mxu0 %v5026
  %v5028 = vand.u32 %v4423, 4294901760
  %5029 = vmatpush1.msra.mxu0 %v5028
  %v5030 = vand.u32 %v4428, 4294901760
  %5031 = vmatprep.subr.mxu0 %v5030
  %v5032 = vand.u32 %v4427, 4294901760
  %5033 = vmatpush1.msra.mxu0 %v5032
  %v5034 = vand.u32 %v4432, 4294901760
  %5035 = vmatprep.subr.mxu0 %v5034
  %v5036 = vand.u32 %v4431, 4294901760
  %5037 = vmatpush1.msra.mxu0 %v5036
  %v5038 = vand.u32 %v4436, 4294901760
  %5039 = vmatprep.subr.mxu0 %v5038
  %v5040 = vand.u32 %v4435, 4294901760
  %5041 = vmatpush1.msra.mxu0 %v5040
  %v5042 = vand.u32 %v4455, 4294901760
  %5043 = vmatprep.subr.mxu0 %v5042
  %v5044 = vand.u32 %v4452, 4294901760
  %5045 = vmatpush1.msra.mxu0 %v5044
  %5046 = vmatprep.subr.mxu0 0.0
  %5047 = vmatpush1.msra.mxu0 0.0
  %5048 = vmatprep.subr.mxu0 0.0
  %5049 = vmatpush1.msra.mxu0 0.0
  %5050 = vmatprep.subr.mxu0 0.0
  %5051 = vmatpush1.msra.mxu0 0.0
  %5052 = vmatprep.subr.mxu0 0.0
  %5053 = vmatpush1.msra.mxu0 0.0
  %5054 = vmatprep.subr.mxu0 0.0
  %5055 = vmatpush1.msra.mxu0 0.0
  %5056 = vmatprep.subr.mxu0 0.0
  %5057 = vmatpush1.msra.mxu0 0.0
  %5058 = vmatprep.subr.mxu0 0.0
  %5059 = vmatpush1.msra.mxu0 0.0
  %5060 = vmatprep.subr.mxu0 0.0
  %5061 = vmatpush1.msra.mxu0 0.0
  %5062 = vmatprep.subr.mxu0 0.0
  %5063 = vmatpush1.msra.mxu0 0.0
  %5064 = vmatprep.subr.mxu0 0.0
  %5065 = vmatpush1.msra.mxu0 0.0
  %5066 = vmatprep.subr.mxu0 0.0
  %5067 = vmatpush1.msra.mxu0 0.0
  %5068 = vmatprep.subr.mxu0 0.0
  %5069 = vmatpush1.msra.mxu0 0.0
  %5070 = vmatprep.subr.mxu0 0.0
  %5071 = vmatpush1.msra.mxu0 0.0
  %5072 = vmatprep.subr.mxu0 0.0
  %5073 = vmatpush1.msra.mxu0 0.0
  %5074 = vmatprep.subr.mxu0 0.0
  %5075 = vmatpush1.msra.mxu0 0.0
  %5076 = vmatprep.subr.mxu0 0.0
  %5077 = vmatpush1.msra.mxu0 0.0
  %5078 = vmatprep.subr.mxu0 0.0
  %5079 = vmatpush1.msra.mxu0 0.0
  %5080 = vmatprep.subr.mxu0 0.0
  %5081 = vmatpush1.msra.mxu0 0.0
  %5082 = vmatprep.subr.mxu0 0.0
  %5083 = vmatpush1.msra.mxu0 0.0
  %5084 = vmatprep.subr.mxu0 0.0
  %5085 = vmatpush1.msra.mxu0 0.0
  %5086 = vmatprep.subr.mxu0 0.0
  %5087 = vmatpush1.msra.mxu0 0.0
  %5088 = vmatprep.subr.mxu0 0.0
  %5089 = vmatpush1.msra.mxu0 0.0
  %5090 = vmatprep.subr.mxu0 0.0
  %5091 = vmatpush1.msra.mxu0 0.0
  %5092 = vmatprep.subr.mxu0 0.0
  %5093 = vmatpush1.msra.mxu0 0.0
  %5094 = vmatprep.subr.mxu0 0.0
  %5095 = vmatpush1.msra.mxu0 0.0
  %5096 = vmatprep.subr.mxu0 0.0
  %5097 = vmatpush1.msra.mxu0 0.0
  %5098 = vmatprep.subr.mxu0 0.0
  %5099 = vmatpush1.msra.mxu0 0.0
  %5100 = vmatprep.mubr.f32.mxu0 0.0
  %v5101 = vand.u32 %v4443, 4294901760
  %v5102 = vsub.f32 %v4443, %v5101
  %v5103 = vand.u32 %v5102, 4294901760
  %v5104 = vsub.f32 %v5102, %v5103
  %v5105 = vand.u32 %v5104, 4294901760
  %5106 = vmatmul.mubr.f32.gmra.mrb[0].mxu0 %v5105
  %v5107 = vpop.f32.mrb[0].mxu0
  %v5108 = vadd.f32 %v4440, %v5107
  %v5109 = vpop.f32.mrb[0].mxu0
  %v5110 = vadd.f32 %v4440, %v5109
  %5111 = vdwg.mxu0
  %v5112 = vand.u32 %v4424, 4294901760
  %v5113 = vsub.f32 %v4424, %v5112
  %v5114 = vand.u32 %v5113, 4294901760
  %v5115 = vsub.f32 %v5113, %v5114
  %v5116 = vand.u32 %v5115, 4294901760
  %5117 = vmatprep.subr.mxu0 %v5116
  %v5118 = vand.u32 %v4423, 4294901760
  %v5119 = vsub.f32 %v4423, %v5118
  %v5120 = vand.u32 %v5119, 4294901760
  %v5121 = vsub.f32 %v5119, %v5120
  %v5122 = vand.u32 %v5121, 4294901760
  %5123 = vmatpush1.msra.mxu0 %v5122
  %v5124 = vand.u32 %v4428, 4294901760
  %v5125 = vsub.f32 %v4428, %v5124
  %v5126 = vand.u32 %v5125, 4294901760
  %v5127 = vsub.f32 %v5125, %v5126
  %v5128 = vand.u32 %v5127, 4294901760
  %5129 = vmatprep.subr.mxu0 %v5128
  %v5130 = vand.u32 %v4427, 4294901760
  %v5131 = vsub.f32 %v4427, %v5130
  %v5132 = vand.u32 %v5131, 4294901760
  %v5133 = vsub.f32 %v5131, %v5132
  %v5134 = vand.u32 %v5133, 4294901760
  %5135 = vmatpush1.msra.mxu0 %v5134
  %v5136 = vand.u32 %v4432, 4294901760
  %v5137 = vsub.f32 %v4432, %v5136
  %v5138 = vand.u32 %v5137, 4294901760
  %v5139 = vsub.f32 %v5137, %v5138
  %v5140 = vand.u32 %v5139, 4294901760
  %5141 = vmatprep.subr.mxu0 %v5140
  %v5142 = vand.u32 %v4431, 4294901760
  %v5143 = vsub.f32 %v4431, %v5142
  %v5144 = vand.u32 %v5143, 4294901760
  %v5145 = vsub.f32 %v5143, %v5144
  %v5146 = vand.u32 %v5145, 4294901760
  %5147 = vmatpush1.msra.mxu0 %v5146
  %v5148 = vand.u32 %v4436, 4294901760
  %v5149 = vsub.f32 %v4436, %v5148
  %v5150 = vand.u32 %v5149, 4294901760
  %v5151 = vsub.f32 %v5149, %v5150
  %v5152 = vand.u32 %v5151, 4294901760
  %5153 = vmatprep.subr.mxu0 %v5152
  %v5154 = vand.u32 %v4435, 4294901760
  %v5155 = vsub.f32 %v4435, %v5154
  %v5156 = vand.u32 %v5155, 4294901760
  %v5157 = vsub.f32 %v5155, %v5156
  %v5158 = vand.u32 %v5157, 4294901760
  %5159 = vmatpush1.msra.mxu0 %v5158
  %v5160 = vand.u32 %v4455, 4294901760
  %v5161 = vsub.f32 %v4455, %v5160
  %v5162 = vand.u32 %v5161, 4294901760
  %v5163 = vsub.f32 %v5161, %v5162
  %v5164 = vand.u32 %v5163, 4294901760
  %5165 = vmatprep.subr.mxu0 %v5164
  %v5166 = vand.u32 %v4452, 4294901760
  %v5167 = vsub.f32 %v4452, %v5166
  %v5168 = vand.u32 %v5167, 4294901760
  %v5169 = vsub.f32 %v5167, %v5168
  %v5170 = vand.u32 %v5169, 4294901760
  %5171 = vmatpush1.msra.mxu0 %v5170
  %5172 = vmatprep.subr.mxu0 0.0
  %5173 = vmatpush1.msra.mxu0 0.0
  %5174 = vmatprep.subr.mxu0 0.0
  %5175 = vmatpush1.msra.mxu0 0.0
  %5176 = vmatprep.subr.mxu0 0.0
  %5177 = vmatpush1.msra.mxu0 0.0
  %5178 = vmatprep.subr.mxu0 0.0
  %5179 = vmatpush1.msra.mxu0 0.0
  %5180 = vmatprep.subr.mxu0 0.0
  %5181 = vmatpush1.msra.mxu0 0.0
  %5182 = vmatprep.subr.mxu0 0.0
  %5183 = vmatpush1.msra.mxu0 0.0
  %5184 = vmatprep.subr.mxu0 0.0
  %5185 = vmatpush1.msra.mxu0 0.0
  %5186 = vmatprep.subr.mxu0 0.0
  %5187 = vmatpush1.msra.mxu0 0.0
  %5188 = vmatprep.subr.mxu0 0.0
  %5189 = vmatpush1.msra.mxu0 0.0
  %5190 = vmatprep.subr.mxu0 0.0
  %5191 = vmatpush1.msra.mxu0 0.0
  %5192 = vmatprep.subr.mxu0 0.0
  %5193 = vmatpush1.msra.mxu0 0.0
  %5194 = vmatprep.subr.mxu0 0.0
  %5195 = vmatpush1.msra.mxu0 0.0
  %5196 = vmatprep.subr.mxu0 0.0
  %5197 = vmatpush1.msra.mxu0 0.0
  %5198 = vmatprep.subr.mxu0 0.0
  %5199 = vmatpush1.msra.mxu0 0.0
  %5200 = vmatprep.subr.mxu0 0.0
  %5201 = vmatpush1.msra.mxu0 0.0
  %5202 = vmatprep.subr.mxu0 0.0
  %5203 = vmatpush1.msra.mxu0 0.0
  %5204 = vmatprep.subr.mxu0 0.0
  %5205 = vmatpush1.msra.mxu0 0.0
  %5206 = vmatprep.subr.mxu0 0.0
  %5207 = vmatpush1.msra.mxu0 0.0
  %5208 = vmatprep.subr.mxu0 0.0
  %5209 = vmatpush1.msra.mxu0 0.0
  %5210 = vmatprep.subr.mxu0 0.0
  %5211 = vmatpush1.msra.mxu0 0.0
  %5212 = vmatprep.subr.mxu0 0.0
  %5213 = vmatpush1.msra.mxu0 0.0
  %5214 = vmatprep.subr.mxu0 0.0
  %5215 = vmatpush1.msra.mxu0 0.0
  %5216 = vmatprep.subr.mxu0 0.0
  %5217 = vmatpush1.msra.mxu0 0.0
  %5218 = vmatprep.subr.mxu0 0.0
  %5219 = vmatpush1.msra.mxu0 0.0
  %5220 = vmatprep.subr.mxu0 0.0
  %5221 = vmatpush1.msra.mxu0 0.0
  %5222 = vmatprep.subr.mxu0 0.0
  %5223 = vmatpush1.msra.mxu0 0.0
  %5224 = vmatprep.subr.mxu0 0.0
  %5225 = vmatpush1.msra.mxu0 0.0
  %5226 = vmatprep.mubr.f32.mxu0 0.0
  %v5227 = vand.u32 %v4443, 4294901760
  %5228 = vmatmul.mubr.f32.gmra.mrb[0].mxu0 %v5227
  %v5229 = vpop.f32.mrb[0].mxu0
  %v5230 = vadd.f32 %v5108, %v5229
  %v5231 = vpop.f32.mrb[0].mxu0
  %v5232 = vadd.f32 %v5110, %v5231
  %5233 = vdwg.mxu0
  %v5234 = vand.u32 %v4424, 4294901760
  %v5235 = vsub.f32 %v4424, %v5234
  %5236 = vmatprep.subr.mxu0 %v5235
  %v5237 = vand.u32 %v4423, 4294901760
  %v5238 = vsub.f32 %v4423, %v5237
  %5239 = vmatpush1.msra.mxu0 %v5238
  %v5240 = vand.u32 %v4428, 4294901760
  %v5241 = vsub.f32 %v4428, %v5240
  %5242 = vmatprep.subr.mxu0 %v5241
  %v5243 = vand.u32 %v4427, 4294901760
  %v5244 = vsub.f32 %v4427, %v5243
  %5245 = vmatpush1.msra.mxu0 %v5244
  %v5246 = vand.u32 %v4432, 4294901760
  %v5247 = vsub.f32 %v4432, %v5246
  %5248 = vmatprep.subr.mxu0 %v5247
  %v5249 = vand.u32 %v4431, 4294901760
  %v5250 = vsub.f32 %v4431, %v5249
  %5251 = vmatpush1.msra.mxu0 %v5250
  %v5252 = vand.u32 %v4436, 4294901760
  %v5253 = vsub.f32 %v4436, %v5252
  %5254 = vmatprep.subr.mxu0 %v5253
  %v5255 = vand.u32 %v4435, 4294901760
  %v5256 = vsub.f32 %v4435, %v5255
  %5257 = vmatpush1.msra.mxu0 %v5256
  %v5258 = vand.u32 %v4455, 4294901760
  %v5259 = vsub.f32 %v4455, %v5258
  %5260 = vmatprep.subr.mxu0 %v5259
  %v5261 = vand.u32 %v4452, 4294901760
  %v5262 = vsub.f32 %v4452, %v5261
  %5263 = vmatpush1.msra.mxu0 %v5262
  %5264 = vmatprep.subr.mxu0 0.0
  %5265 = vmatpush1.msra.mxu0 0.0
  %5266 = vmatprep.subr.mxu0 0.0
  %5267 = vmatpush1.msra.mxu0 0.0
  %5268 = vmatprep.subr.mxu0 0.0
  %5269 = vmatpush1.msra.mxu0 0.0
  %5270 = vmatprep.subr.mxu0 0.0
  %5271 = vmatpush1.msra.mxu0 0.0
  %5272 = vmatprep.subr.mxu0 0.0
  %5273 = vmatpush1.msra.mxu0 0.0
  %5274 = vmatprep.subr.mxu0 0.0
  %5275 = vmatpush1.msra.mxu0 0.0
  %5276 = vmatprep.subr.mxu0 0.0
  %5277 = vmatpush1.msra.mxu0 0.0
  %5278 = vmatprep.subr.mxu0 0.0
  %5279 = vmatpush1.msra.mxu0 0.0
  %5280 = vmatprep.subr.mxu0 0.0
  %5281 = vmatpush1.msra.mxu0 0.0
  %5282 = vmatprep.subr.mxu0 0.0
  %5283 = vmatpush1.msra.mxu0 0.0
  %5284 = vmatprep.subr.mxu0 0.0
  %5285 = vmatpush1.msra.mxu0 0.0
  %5286 = vmatprep.subr.mxu0 0.0
  %5287 = vmatpush1.msra.mxu0 0.0
  %5288 = vmatprep.subr.mxu0 0.0
  %5289 = vmatpush1.msra.mxu0 0.0
  %5290 = vmatprep.subr.mxu0 0.0
  %5291 = vmatpush1.msra.mxu0 0.0
  %5292 = vmatprep.subr.mxu0 0.0
  %5293 = vmatpush1.msra.mxu0 0.0
  %5294 = vmatprep.subr.mxu0 0.0
  %5295 = vmatpush1.msra.mxu0 0.0
  %5296 = vmatprep.subr.mxu0 0.0
  %5297 = vmatpush1.msra.mxu0 0.0
  %5298 = vmatprep.subr.mxu0 0.0
  %5299 = vmatpush1.msra.mxu0 0.0
  %5300 = vmatprep.subr.mxu0 0.0
  %5301 = vmatpush1.msra.mxu0 0.0
  %5302 = vmatprep.subr.mxu0 0.0
  %5303 = vmatpush1.msra.mxu0 0.0
  %5304 = vmatprep.subr.mxu0 0.0
  %5305 = vmatpush1.msra.mxu0 0.0
  %5306 = vmatprep.subr.mxu0 0.0
  %5307 = vmatpush1.msra.mxu0 0.0
  %5308 = vmatprep.subr.mxu0 0.0
  %5309 = vmatpush1.msra.mxu0 0.0
  %5310 = vmatprep.subr.mxu0 0.0
  %5311 = vmatpush1.msra.mxu0 0.0
  %5312 = vmatprep.subr.mxu0 0.0
  %5313 = vmatpush1.msra.mxu0 0.0
  %5314 = vmatprep.subr.mxu0 0.0
  %5315 = vmatpush1.msra.mxu0 0.0
  %5316 = vmatprep.subr.mxu0 0.0
  %5317 = vmatpush1.msra.mxu0 0.0
  %5318 = vmatprep.mubr.f32.mxu0 0.0
  %v5319 = vand.u32 %v4443, 4294901760
  %v5320 = vsub.f32 %v4443, %v5319
  %5321 = vmatmul.mubr.f32.gmra.mrb[0].mxu0 %v5320
  %v5322 = vpop.f32.mrb[0].mxu0
  %v5323 = vadd.f32 %v5230, %v5322
  %v5324 = vpop.f32.mrb[0].mxu0
  %v5325 = vadd.f32 %v5232, %v5324
  %5326 = vdwg.mxu0
  %v5327 = vand.u32 %v4424, 4294901760
  %5328 = vmatprep.subr.mxu0 %v5327
  %v5329 = vand.u32 %v4423, 4294901760
  %5330 = vmatpush1.msra.mxu0 %v5329
  %v5331 = vand.u32 %v4428, 4294901760
  %5332 = vmatprep.subr.mxu0 %v5331
  %v5333 = vand.u32 %v4427, 4294901760
  %5334 = vmatpush1.msra.mxu0 %v5333
  %v5335 = vand.u32 %v4432, 4294901760
  %5336 = vmatprep.subr.mxu0 %v5335
  %v5337 = vand.u32 %v4431, 4294901760
  %5338 = vmatpush1.msra.mxu0 %v5337
  %v5339 = vand.u32 %v4436, 4294901760
  %5340 = vmatprep.subr.mxu0 %v5339
  %v5341 = vand.u32 %v4435, 4294901760
  %5342 = vmatpush1.msra.mxu0 %v5341
  %v5343 = vand.u32 %v4455, 4294901760
  %5344 = vmatprep.subr.mxu0 %v5343
  %v5345 = vand.u32 %v4452, 4294901760
  %5346 = vmatpush1.msra.mxu0 %v5345
  %5347 = vmatprep.subr.mxu0 0.0
  %5348 = vmatpush1.msra.mxu0 0.0
  %5349 = vmatprep.subr.mxu0 0.0
  %5350 = vmatpush1.msra.mxu0 0.0
  %5351 = vmatprep.subr.mxu0 0.0
  %5352 = vmatpush1.msra.mxu0 0.0
  %5353 = vmatprep.subr.mxu0 0.0
  %5354 = vmatpush1.msra.mxu0 0.0
  %5355 = vmatprep.subr.mxu0 0.0
  %5356 = vmatpush1.msra.mxu0 0.0
  %5357 = vmatprep.subr.mxu0 0.0
  %5358 = vmatpush1.msra.mxu0 0.0
  %5359 = vmatprep.subr.mxu0 0.0
  %5360 = vmatpush1.msra.mxu0 0.0
  %5361 = vmatprep.subr.mxu0 0.0
  %5362 = vmatpush1.msra.mxu0 0.0
  %5363 = vmatprep.subr.mxu0 0.0
  %5364 = vmatpush1.msra.mxu0 0.0
  %5365 = vmatprep.subr.mxu0 0.0
  %5366 = vmatpush1.msra.mxu0 0.0
  %5367 = vmatprep.subr.mxu0 0.0
  %5368 = vmatpush1.msra.mxu0 0.0
  %5369 = vmatprep.subr.mxu0 0.0
  %5370 = vmatpush1.msra.mxu0 0.0
  %5371 = vmatprep.subr.mxu0 0.0
  %5372 = vmatpush1.msra.mxu0 0.0
  %5373 = vmatprep.subr.mxu0 0.0
  %5374 = vmatpush1.msra.mxu0 0.0
  %5375 = vmatprep.subr.mxu0 0.0
  %5376 = vmatpush1.msra.mxu0 0.0
  %5377 = vmatprep.subr.mxu0 0.0
  %5378 = vmatpush1.msra.mxu0 0.0
  %5379 = vmatprep.subr.mxu0 0.0
  %5380 = vmatpush1.msra.mxu0 0.0
  %5381 = vmatprep.subr.mxu0 0.0
  %5382 = vmatpush1.msra.mxu0 0.0
  %5383 = vmatprep.subr.mxu0 0.0
  %5384 = vmatpush1.msra.mxu0 0.0
  %5385 = vmatprep.subr.mxu0 0.0
  %5386 = vmatpush1.msra.mxu0 0.0
  %5387 = vmatprep.subr.mxu0 0.0
  %5388 = vmatpush1.msra.mxu0 0.0
  %5389 = vmatprep.subr.mxu0 0.0
  %5390 = vmatpush1.msra.mxu0 0.0
  %5391 = vmatprep.subr.mxu0 0.0
  %5392 = vmatpush1.msra.mxu0 0.0
  %5393 = vmatprep.subr.mxu0 0.0
  %5394 = vmatpush1.msra.mxu0 0.0
  %5395 = vmatprep.subr.mxu0 0.0
  %5396 = vmatpush1.msra.mxu0 0.0
  %5397 = vmatprep.subr.mxu0 0.0
  %5398 = vmatpush1.msra.mxu0 0.0
  %5399 = vmatprep.subr.mxu0 0.0
  %5400 = vmatpush1.msra.mxu0 0.0
  %5401 = vmatprep.mubr.f32.mxu0 0.0
  %v5402 = vand.u32 %v4443, 4294901760
  %v5403 = vsub.f32 %v4443, %v5402
  %v5404 = vand.u32 %v5403, 4294901760
  %5405 = vmatmul.mubr.f32.gmra.mrb[0].mxu0 %v5404
  %v5406 = vpop.f32.mrb[0].mxu0
  %v5407 = vadd.f32 %v5323, %v5406
  %v5408 = vpop.f32.mrb[0].mxu0
  %v5409 = vadd.f32 %v5325, %v5408
  %5410 = vdwg.mxu0
  %v5411 = vand.u32 %v4424, 4294901760
  %v5412 = vsub.f32 %v4424, %v5411
  %v5413 = vand.u32 %v5412, 4294901760
  %5414 = vmatprep.subr.mxu0 %v5413
  %v5415 = vand.u32 %v4423, 4294901760
  %v5416 = vsub.f32 %v4423, %v5415
  %v5417 = vand.u32 %v5416, 4294901760
  %5418 = vmatpush1.msra.mxu0 %v5417
  %v5419 = vand.u32 %v4428, 4294901760
  %v5420 = vsub.f32 %v4428, %v5419
  %v5421 = vand.u32 %v5420, 4294901760
  %5422 = vmatprep.subr.mxu0 %v5421
  %v5423 = vand.u32 %v4427, 4294901760
  %v5424 = vsub.f32 %v4427, %v5423
  %v5425 = vand.u32 %v5424, 4294901760
  %5426 = vmatpush1.msra.mxu0 %v5425
  %v5427 = vand.u32 %v4432, 4294901760
  %v5428 = vsub.f32 %v4432, %v5427
  %v5429 = vand.u32 %v5428, 4294901760
  %5430 = vmatprep.subr.mxu0 %v5429
  %v5431 = vand.u32 %v4431, 4294901760
  %v5432 = vsub.f32 %v4431, %v5431
  %v5433 = vand.u32 %v5432, 4294901760
  %5434 = vmatpush1.msra.mxu0 %v5433
  %v5435 = vand.u32 %v4436, 4294901760
  %v5436 = vsub.f32 %v4436, %v5435
  %v5437 = vand.u32 %v5436, 4294901760
  %5438 = vmatprep.subr.mxu0 %v5437
  %v5439 = vand.u32 %v4435, 4294901760
  %v5440 = vsub.f32 %v4435, %v5439
  %v5441 = vand.u32 %v5440, 4294901760
  %5442 = vmatpush1.msra.mxu0 %v5441
  %v5443 = vand.u32 %v4455, 4294901760
  %v5444 = vsub.f32 %v4455, %v5443
  %v5445 = vand.u32 %v5444, 4294901760
  %5446 = vmatprep.subr.mxu0 %v5445
  %v5447 = vand.u32 %v4452, 4294901760
  %v5448 = vsub.f32 %v4452, %v5447
  %v5449 = vand.u32 %v5448, 4294901760
  %5450 = vmatpush1.msra.mxu0 %v5449
  %5451 = vmatprep.subr.mxu0 0.0
  %5452 = vmatpush1.msra.mxu0 0.0
  %5453 = vmatprep.subr.mxu0 0.0
  %5454 = vmatpush1.msra.mxu0 0.0
  %5455 = vmatprep.subr.mxu0 0.0
  %5456 = vmatpush1.msra.mxu0 0.0
  %5457 = vmatprep.subr.mxu0 0.0
  %5458 = vmatpush1.msra.mxu0 0.0
  %5459 = vmatprep.subr.mxu0 0.0
  %5460 = vmatpush1.msra.mxu0 0.0
  %5461 = vmatprep.subr.mxu0 0.0
  %5462 = vmatpush1.msra.mxu0 0.0
  %5463 = vmatprep.subr.mxu0 0.0
  %5464 = vmatpush1.msra.mxu0 0.0
  %5465 = vmatprep.subr.mxu0 0.0
  %5466 = vmatpush1.msra.mxu0 0.0
  %5467 = vmatprep.subr.mxu0 0.0
  %5468 = vmatpush1.msra.mxu0 0.0
  %5469 = vmatprep.subr.mxu0 0.0
  %5470 = vmatpush1.msra.mxu0 0.0
  %5471 = vmatprep.subr.mxu0 0.0
  %5472 = vmatpush1.msra.mxu0 0.0
  %5473 = vmatprep.subr.mxu0 0.0
  %5474 = vmatpush1.msra.mxu0 0.0
  %5475 = vmatprep.subr.mxu0 0.0
  %5476 = vmatpush1.msra.mxu0 0.0
  %5477 = vmatprep.subr.mxu0 0.0
  %5478 = vmatpush1.msra.mxu0 0.0
  %5479 = vmatprep.subr.mxu0 0.0
  %5480 = vmatpush1.msra.mxu0 0.0
  %5481 = vmatprep.subr.mxu0 0.0
  %5482 = vmatpush1.msra.mxu0 0.0
  %5483 = vmatprep.subr.mxu0 0.0
  %5484 = vmatpush1.msra.mxu0 0.0
  %5485 = vmatprep.subr.mxu0 0.0
  %5486 = vmatpush1.msra.mxu0 0.0
  %5487 = vmatprep.subr.mxu0 0.0
  %5488 = vmatpush1.msra.mxu0 0.0
  %5489 = vmatprep.subr.mxu0 0.0
  %5490 = vmatpush1.msra.mxu0 0.0
  %5491 = vmatprep.subr.mxu0 0.0
  %5492 = vmatpush1.msra.mxu0 0.0
  %5493 = vmatprep.subr.mxu0 0.0
  %5494 = vmatpush1.msra.mxu0 0.0
  %5495 = vmatprep.subr.mxu0 0.0
  %5496 = vmatpush1.msra.mxu0 0.0
  %5497 = vmatprep.subr.mxu0 0.0
  %5498 = vmatpush1.msra.mxu0 0.0
  %5499 = vmatprep.subr.mxu0 0.0
  %5500 = vmatpush1.msra.mxu0 0.0
  %5501 = vmatprep.subr.mxu0 0.0
  %5502 = vmatpush1.msra.mxu0 0.0
  %5503 = vmatprep.subr.mxu0 0.0
  %5504 = vmatpush1.msra.mxu0 0.0
  %5505 = vmatprep.mubr.f32.mxu0 0.0
  %v5506 = vand.u32 %v4443, 4294901760
  %5507 = vmatmul.mubr.f32.gmra.mrb[0].mxu0 %v5506
  %v5508 = vpop.f32.mrb[0].mxu0
  %v5509 = vadd.f32 %v5407, %v5508
  %v5510 = vpop.f32.mrb[0].mxu0
  %v5511 = vadd.f32 %v5409, %v5510
  %5512 = vdwg.mxu0
  %v5513 = vand.u32 %v4424, 4294901760
  %5514 = vmatprep.subr.mxu0 %v5513
  %v5515 = vand.u32 %v4423, 4294901760
  %5516 = vmatpush1.msra.mxu0 %v5515
  %v5517 = vand.u32 %v4428, 4294901760
  %5518 = vmatprep.subr.mxu0 %v5517
  %v5519 = vand.u32 %v4427, 4294901760
  %5520 = vmatpush1.msra.mxu0 %v5519
  %v5521 = vand.u32 %v4432, 4294901760
  %5522 = vmatprep.subr.mxu0 %v5521
  %v5523 = vand.u32 %v4431, 4294901760
  %5524 = vmatpush1.msra.mxu0 %v5523
  %v5525 = vand.u32 %v4436, 4294901760
  %5526 = vmatprep.subr.mxu0 %v5525
  %v5527 = vand.u32 %v4435, 4294901760
  %5528 = vmatpush1.msra.mxu0 %v5527
  %v5529 = vand.u32 %v4455, 4294901760
  %5530 = vmatprep.subr.mxu0 %v5529
  %v5531 = vand.u32 %v4452, 4294901760
  %5532 = vmatpush1.msra.mxu0 %v5531
  %5533 = vmatprep.subr.mxu0 0.0
  %5534 = vmatpush1.msra.mxu0 0.0
  %5535 = vmatprep.subr.mxu0 0.0
  %5536 = vmatpush1.msra.mxu0 0.0
  %5537 = vmatprep.subr.mxu0 0.0
  %5538 = vmatpush1.msra.mxu0 0.0
  %5539 = vmatprep.subr.mxu0 0.0
  %5540 = vmatpush1.msra.mxu0 0.0
  %5541 = vmatprep.subr.mxu0 0.0
  %5542 = vmatpush1.msra.mxu0 0.0
  %5543 = vmatprep.subr.mxu0 0.0
  %5544 = vmatpush1.msra.mxu0 0.0
  %5545 = vmatprep.subr.mxu0 0.0
  %5546 = vmatpush1.msra.mxu0 0.0
  %5547 = vmatprep.subr.mxu0 0.0
  %5548 = vmatpush1.msra.mxu0 0.0
  %5549 = vmatprep.subr.mxu0 0.0
  %5550 = vmatpush1.msra.mxu0 0.0
  %5551 = vmatprep.subr.mxu0 0.0
  %5552 = vmatpush1.msra.mxu0 0.0
  %5553 = vmatprep.subr.mxu0 0.0
  %5554 = vmatpush1.msra.mxu0 0.0
  %5555 = vmatprep.subr.mxu0 0.0
  %5556 = vmatpush1.msra.mxu0 0.0
  %5557 = vmatprep.subr.mxu0 0.0
  %5558 = vmatpush1.msra.mxu0 0.0
  %5559 = vmatprep.subr.mxu0 0.0
  %5560 = vmatpush1.msra.mxu0 0.0
  %5561 = vmatprep.subr.mxu0 0.0
  %5562 = vmatpush1.msra.mxu0 0.0
  %5563 = vmatprep.subr.mxu0 0.0
  %5564 = vmatpush1.msra.mxu0 0.0
  %5565 = vmatprep.subr.mxu0 0.0
  %5566 = vmatpush1.msra.mxu0 0.0
  %5567 = vmatprep.subr.mxu0 0.0
  %5568 = vmatpush1.msra.mxu0 0.0
  %5569 = vmatprep.subr.mxu0 0.0
  %5570 = vmatpush1.msra.mxu0 0.0
  %5571 = vmatprep.subr.mxu0 0.0
  %5572 = vmatpush1.msra.mxu0 0.0
  %5573 = vmatprep.subr.mxu0 0.0
  %5574 = vmatpush1.msra.mxu0 0.0
  %5575 = vmatprep.subr.mxu0 0.0
  %5576 = vmatpush1.msra.mxu0 0.0
  %5577 = vmatprep.subr.mxu0 0.0
  %5578 = vmatpush1.msra.mxu0 0.0
  %5579 = vmatprep.subr.mxu0 0.0
  %5580 = vmatpush1.msra.mxu0 0.0
  %5581 = vmatprep.subr.mxu0 0.0
  %5582 = vmatpush1.msra.mxu0 0.0
  %5583 = vmatprep.subr.mxu0 0.0
  %5584 = vmatpush1.msra.mxu0 0.0
  %5585 = vmatprep.subr.mxu0 0.0
  %5586 = vmatpush1.msra.mxu0 0.0
  %5587 = vmatprep.mubr.f32.mxu0 0.0
  %v5588 = vand.u32 %v4443, 4294901760
  %5589 = vmatmul.mubr.f32.gmra.mrb[0].mxu0 %v5588
  %v5590 = vpop.f32.mrb[0].mxu0
  %v5591 = vadd.f32 %v5509, %v5590
  %v5592 = vpop.f32.mrb[0].mxu0
  %v5593 = vadd.f32 %v5511, %v5592
  %5594 = vdwg.mxu0
  %v5595 = vadd.f32 %v5022, %v2855
  %v5596 = vadd.f32 %v5024, %v2856
  %v5597 = vadd.f32 %v5591, %v2857
  %v5598 = vadd.f32 %v5593, %v2858
  %v5603 = vcombine.low %v5595, %v5596
  %v5604 = vcombine.low %v5597, %v5598
  %5607 = vst [vmem:[%s3] sm:$0xff] %v5603
  %5608 = vst [vmem:[%s3 + $0x8] sm:$0xff] %v5604
  // Predicated region
  $region14: #{residual_block_forward.1} parent=0 // pred_check
    _
  $region15: #{residual_block_forward.1} parent=0 // pred_check_branch
    %5610 = sbr.rel (0) target = $region17
  $region16: #{residual_block_forward.1} parent=0 // pred_region
    _
  $region17: #{residual_block_forward.1} parent=0 // pred_fallthru
    _
  // Predicated region
  $region18: #{residual_block_forward.1} parent=0 // pred_check
    _
  $region19: #{residual_block_forward.1} parent=0 // pred_check_branch
    %5612 = sbr.rel (0) target = $region21
  $region20: #{residual_block_forward.1} parent=0 // pred_region
    _
  $region21: #{residual_block_forward.1} parent=0 // pred_fallthru
    _

</llo_original>
